<compile_context>
chip_gen: v5e
topology: v5e:2x2
jax: 0.10.0
libtpu: 0.0.40
codegen_flags: <defaults>
</compile_context>

<pallas_src>
import math
import functools

import jax
import jax.numpy as jnp
import numpy as np
from jax import lax
from jax.experimental import pallas as pl
from jax.experimental.pallas import tpu as pltpu


# ----------------------------- Pallas kernel ------------------------------ #

def _layer_norm(x, a2, b2, eps=1e-6):
    # x: (R, D), a2/b2: (1, D).  torch.std is unbiased -> divide by (D-1).
    d = x.shape[-1]
    mean = jnp.mean(x, axis=-1, keepdims=True)
    var = jnp.sum((x - mean) ** 2, axis=-1, keepdims=True) / (d - 1)
    std = jnp.sqrt(var)
    return a2 * (x - mean) / (std + eps) + b2


def encoder_layer_kernel(
    x_ref, mask_ref,
    wq_ref, bq_ref, wk_ref, bk_ref, wv_ref, bv_ref, wo_ref, bo_ref,
    w1_ref, b1_ref, w2_ref, b2_ref,
    ln1a_ref, ln1b_ref, ln2a_ref, ln2b_ref,
    out_ref,
    k_scratch, v_scratch,
    *, num_heads, tq, dff_chunk, mxu_dtype, approx_recip,
):
    S, D = x_ref.shape                     # full sequence for this batch elem
    H = num_heads
    dk = D // H
    scale = 1.0 / math.sqrt(dk)
    qi = pl.program_id(1)

    # Additive mask bias, computed once per step and added once to the batched
    # (H, TQ, S) score tensor.  (mask==1 -> 0, mask==0 -> -1e9); exp()
    # underflows identically to the reference masked_fill(-1e9) formulation.
    # NOTE: assumes a binary {0,1} mask (reference uses `mask == 0`).
    bias = (mask_ref[...].astype(jnp.float32) - 1.0) * 1e9          # (1, S)

    # ---- K/V for the whole sequence: once per batch element, head-major ----
    @pl.when(qi == 0)
    def _():
        lnm = _layer_norm(x_ref[...], ln1a_ref[...], ln1b_ref[...]).astype(mxu_dtype)
        k = jnp.dot(lnm, wk_ref[...], preferred_element_type=jnp.float32) + bk_ref[...]
        v = jnp.dot(lnm, wv_ref[...], preferred_element_type=jnp.float32) + bv_ref[...]
        # head-major (H, S, dk) so per-tile attention is one batched dot; cast
        # to the MXU dtype before the relayout to halve the data moved.
        k_scratch[...] = k.astype(k_scratch.dtype).reshape(S, H, dk).transpose(1, 0, 2)
        v_scratch[...] = v.astype(v_scratch.dtype).reshape(S, H, dk).transpose(1, 0, 2)

    # ---- current query tile -------------------------------------------------
    row0 = pl.multiple_of(qi * tq, tq)
    x_tile = x_ref[pl.ds(row0, tq), :]                               # (TQ, D) f32
    ln_q = _layer_norm(x_tile, ln1a_ref[...], ln1b_ref[...])
    q = jnp.dot(ln_q.astype(mxu_dtype), wq_ref[...],
                preferred_element_type=jnp.float32) + bq_ref[...]
    # fold 1/sqrt(dk) into Q once, then go head-major (H, TQ, dk)
    q = (q * scale).astype(mxu_dtype).reshape(tq, H, dk).transpose(1, 0, 2)

    # ---- batched attention over all heads (single MXU dot per stage) -------
    scores = lax.dot_general(q, k_scratch[...], (((2,), (2,)), ((0,), (0,))),
                             preferred_element_type=jnp.float32)     # (H, TQ, S)
    scores = scores + bias                                           # one broadcast add
    m = jnp.max(scores, axis=-1, keepdims=True)
    e = jnp.exp(scores - m)
    denom = jnp.sum(e, axis=-1, keepdims=True)
    # approx=True (EUP) on the reduced-precision path; exact otherwise so the
    # f32 run matches the reference to 1e-4.
    p = e * pl.reciprocal(denom, approx=approx_recip)
    # TODO(synk): attention-dropout is identity in eval mode.
    ctx = lax.dot_general(p.astype(mxu_dtype), v_scratch[...],
                          (((2,), (1,)), ((0,), (0,))),
                          preferred_element_type=jnp.float32)        # (H, TQ, dk)
    # repack once to lane-dense (TQ, D) and project with a single K=D matmul
    ctx = ctx.astype(mxu_dtype).transpose(1, 0, 2).reshape(tq, D)
    attn = jnp.dot(ctx, wo_ref[...], preferred_element_type=jnp.float32) + bo_ref[...]
    x1 = x_tile + attn                     # residual (dropout == identity), f32

    # ---------------- sublayer 1: position-wise feed-forward ---------------
    ln_x1 = _layer_norm(x1, ln2a_ref[...], ln2b_ref[...]).astype(mxu_dtype)
    d_ff = w1_ref.shape[-1]
    acc = x1 + b2_ref[...]                 # residual + final FFN bias, f32
    for c in range(d_ff // dff_chunk):     # chunk d_ff: bounded (TQ, chunk) live
        lo = c * dff_chunk
        hmid = jnp.dot(ln_x1, w1_ref[:, lo:lo + dff_chunk],
                       preferred_element_type=jnp.float32) + b1_ref[:, lo:lo + dff_chunk]
        hmid = jnp.maximum(hmid, 0.0).astype(mxu_dtype)
        acc = acc + jnp.dot(hmid, w2_ref[lo:lo + dff_chunk, :],
                            preferred_element_type=jnp.float32)

    out_ref[...] = acc.astype(out_ref.dtype)


# ------------------------------ JAX wrapper ------------------------------- #

def encoder_layer(x, mask, params, num_heads, *, mxu_dtype=jnp.bfloat16, tq=None,
                  dff_chunk=512, single_buffer_weights=True):
    """x: (B, S, D) f32, mask: (B, 1, S) f32 (1=keep, 0=mask)."""
    B, S, D = x.shape
    d_ff = params["w1"].shape[-1]
    assert D % num_heads == 0
    dk = D // num_heads
    if tq is None:
        tq = min(S, 256)                   # query tile (rows per grid step); sweep per gen
    assert S % tq == 0
    n_q = S // tq
    if d_ff % dff_chunk != 0:
        dff_chunk = d_ff

    f32 = jnp.float32
    # Weight matrices in the MXU feed dtype (halves their DMA/VMEM in bf16);
    # biases and LayerNorm params stay f32 (elementwise path stays f32).
    weights = [
        params["wq"].astype(mxu_dtype), params["bq"].astype(f32),
        params["wk"].astype(mxu_dtype), params["bk"].astype(f32),
        params["wv"].astype(mxu_dtype), params["bv"].astype(f32),
        params["wo"].astype(mxu_dtype), params["bo"].astype(f32),
        params["w1"].astype(mxu_dtype), params["b1"].astype(f32),
        params["w2"].astype(mxu_dtype), params["b2"].astype(f32),
        params["ln1_a"].astype(f32), params["ln1_b"].astype(f32),
        params["ln2_a"].astype(f32), params["ln2_b"].astype(f32),
    ]

    approx_recip = (mxu_dtype != jnp.float32)
    kernel = functools.partial(
        encoder_layer_kernel, num_heads=num_heads, tq=tq, dff_chunk=dff_chunk,
        mxu_dtype=mxu_dtype, approx_recip=approx_recip)

    # Advisory cost estimate so XLA can schedule around the custom call.
    flops = int(B * (8 * S * D * D + 4 * S * S * D + 4 * S * D * d_ff))
    transcendentals = int(B * num_heads * S * S)
    weight_bytes = sum(int(w.size) * int(w.dtype.itemsize) for w in weights)
    bytes_accessed = int(2 * B * S * D * 4 + B * S * 4 + weight_bytes)
    cost = pl.CostEstimate(flops=flops, transcendentals=transcendentals,
                           bytes_accessed=bytes_accessed)

    # Explicit VMEM budget sized from the real footprint (default scoped limit
    # is 16/32 MiB and would choke the resident-K/V design at realistic S, D).
    mxu_bytes = jnp.dtype(mxu_dtype).itemsize
    rup = lambda n, m: -(-n // m) * m
    kv_scratch_bytes = 2 * num_heads * rup(S, 8) * rup(dk, 128) * mxu_bytes
    est = (
        2 * rup(S, 8) * rup(D, 128) * 4                       # x block (double-buffered)
        + 2 * 8 * rup(S, 128) * 4                             # mask block
        + 2 * rup(tq, 8) * rup(D, 128) * 4                    # out block
        + 2 * weight_bytes                                    # worst case: double-buffered
        + kv_scratch_bytes
        + 4 * num_heads * rup(tq, 8) * rup(S, 128) * 4        # scores / exp / p temporaries
        + 4 * rup(tq, 8) * rup(max(dff_chunk, D), 128) * 4    # ffn / q / ctx temporaries
    )
    vmem_limit = int(min(max(2 * est, 32 * 1024 * 1024), 110 * 1024 * 1024))

    def build(single_buffer):
        if single_buffer:
            # constant-index blocks: single buffer (index map never changes)
            weight_specs = [pl.BlockSpec(w.shape, lambda b, q: (0, 0),
                                         pipeline_mode=pl.Buffered(1))
                            for w in weights]
        else:
            weight_specs = [pl.BlockSpec(w.shape, lambda b, q: (0, 0))
                            for w in weights]
        return pl.pallas_call(
            kernel,
            out_shape=jax.ShapeDtypeStruct((B, S, D), x.dtype),
            grid_spec=pltpu.PrefetchScalarGridSpec(
                num_scalar_prefetch=0,
                grid=(B, n_q),                                   # batch x query-tiles
                in_specs=[
                    # full sequence for this batch element (needed for K/V); the
                    # block index is constant in q so it is DMA'd once per b.
                    pl.BlockSpec((pl.Squeezed(), S, D), lambda b, q: (b, 0, 0)),
                    pl.BlockSpec((pl.Squeezed(), 1, S), lambda b, q: (b, 0, 0)),
                ] + weight_specs,
                out_specs=pl.BlockSpec((pl.Squeezed(), tq, D), lambda b, q: (b, q, 0)),
                scratch_shapes=[
                    pltpu.VMEM((num_heads, S, dk), mxu_dtype),   # K, head-major, resident
                    pltpu.VMEM((num_heads, S, dk), mxu_dtype),   # V, head-major, resident
                ],
            ),
            compiler_params=pltpu.CompilerParams(
                dimension_semantics=("parallel", "arbitrary"),
                vmem_limit_bytes=vmem_limit,
            ),
            cost_estimate=cost,
        )

    if single_buffer_weights:
        try:
            return build(True)(x, mask, *weights)
        except Exception:
            # TODO(synk): pipeline_mode=pl.Buffered(1) rejected on this jax
            # build; fall back to default double-buffered weight blocks.
            pass
    return build(False)(x, mask, *weights)


# ------------------------- pure-JAX reference ----------------------------- #

def encoder_layer_ref(x, mask, params, num_heads):
    def ln(z, a, b, eps=1e-6):
        d = z.shape[-1]
        m = jnp.mean(z, -1, keepdims=True)
        s = jnp.sqrt(jnp.sum((z - m) ** 2, -1, keepdims=True) / (d - 1))
        return a * (z - m) / (s + eps) + b

    B, S, D = x.shape
    dk = D // num_heads
    lx = ln(x, params["ln1_a"], params["ln1_b"])
    q = lx @ params["wq"] + params["bq"]
    k = lx @ params["wk"] + params["bk"]
    v = lx @ params["wv"] + params["bv"]
    q = q.reshape(B, S, num_heads, dk).transpose(0, 2, 1, 3)
    k = k.reshape(B, S, num_heads, dk).transpose(0, 2, 1, 3)
    v = v.reshape(B, S, num_heads, dk).transpose(0, 2, 1, 3)
    scores = jnp.einsum("bhqd,bhkd->bhqk", q, k) / math.sqrt(dk)
    scores = jnp.where(mask[:, None, :, :] > 0, scores, -1e9)
    p = jax.nn.softmax(scores, -1)
    a = jnp.einsum("bhqk,bhkd->bhqd", p, v).transpose(0, 2, 1, 3).reshape(B, S, D)
    x1 = x + a @ params["wo"] + params["bo"]
    lx1 = ln(x1, params["ln2_a"], params["ln2_b"])
    ffn = jnp.maximum(lx1 @ params["w1"] + params["b1"], 0.0) @ params["w2"] + params["b2"]
    return x1 + ffn


# --------------------------------- main ------------------------------------ #

if __name__ == "__main__":
    B, S, D, H, D_FF = 2, 16, 32, 4, 64

    key = jax.random.PRNGKey(0)
    keys = jax.random.split(key, 12)

    def w(k, shape, scale=0.1):
        return (scale * jax.random.normal(k, shape)).astype(jnp.float32)

    # Weights are stored directly in (in_features, out_features) layout
    # (i.e. already transposed relative to torch's nn.Linear.weight).
    params = {
        "wq": w(keys[0], (D, D)),   "bq": w(keys[1], (1, D)),
        "wk": w(keys[2], (D, D)),   "bk": w(keys[3], (1, D)),
        "wv": w(keys[4], (D, D)),   "bv": w(keys[5], (1, D)),
        "wo": w(keys[6], (D, D)),   "bo": w(keys[7], (1, D)),
        "w1": w(keys[8], (D, D_FF)), "b1": w(keys[9], (1, D_FF)),
        "w2": w(keys[10], (D_FF, D)), "b2": w(keys[11], (1, D)),
        "ln1_a": jnp.ones((1, D), jnp.float32),
        "ln1_b": jnp.zeros((1, D), jnp.float32),
        "ln2_a": jnp.ones((1, D), jnp.float32),
        "ln2_b": jnp.zeros((1, D), jnp.float32),
    }

    kx, _ = jax.random.split(jax.random.PRNGKey(0))
    x = jax.random.normal(kx, (B, S, D), jnp.float32)
    mask = jnp.ones((B, 1, S), jnp.float32)
    mask = mask.at[1, 0, -3:].set(0.0)   # mask the last three keys of batch 1

    ref = encoder_layer_ref(x, mask, params, num_heads=H)

    # Exact-precision path (f32 MXU operands), tq < S so the K/V scratch is
    # exercised across multiple query tiles — tight correctness check.
    out_f32 = encoder_layer(x, mask, params, num_heads=H,
                            mxu_dtype=jnp.float32, tq=8)
    out_f32 = jax.block_until_ready(out_f32)
    np.testing.assert_allclose(np.asarray(out_f32), np.asarray(ref),
                               atol=1e-4, rtol=1e-4)

    # Performance path: bf16 MXU operands, f32 accumulation / LN / softmax.
    out_bf16 = encoder_layer(x, mask, params, num_heads=H,
                             mxu_dtype=jnp.bfloat16, tq=8)
    out_bf16 = jax.block_until_ready(out_bf16)
    np.testing.assert_allclose(np.asarray(out_bf16), np.asarray(ref),
                               atol=5e-2, rtol=5e-2)

    print("KERNEL_OK")
</pallas_src>

<mosaic_0001>
module attributes {stable_mosaic.version = 11 : i64} {
  func.func @encoder_layer_kernel(%arg0: i32, %arg1: i32, %arg2: memref<1x16x32xf32, #tpu.memory_space<vmem>>, %arg3: memref<1x1x16xf32, #tpu.memory_space<vmem>>, %arg4: memref<32x32xf32, #tpu.memory_space<vmem>>, %arg5: memref<1x32xf32, #tpu.memory_space<vmem>>, %arg6: memref<32x32xf32, #tpu.memory_space<vmem>>, %arg7: memref<1x32xf32, #tpu.memory_space<vmem>>, %arg8: memref<32x32xf32, #tpu.memory_space<vmem>>, %arg9: memref<1x32xf32, #tpu.memory_space<vmem>>, %arg10: memref<32x32xf32, #tpu.memory_space<vmem>>, %arg11: memref<1x32xf32, #tpu.memory_space<vmem>>, %arg12: memref<32x64xf32, #tpu.memory_space<vmem>>, %arg13: memref<1x64xf32, #tpu.memory_space<vmem>>, %arg14: memref<64x32xf32, #tpu.memory_space<vmem>>, %arg15: memref<1x32xf32, #tpu.memory_space<vmem>>, %arg16: memref<1x32xf32, #tpu.memory_space<vmem>>, %arg17: memref<1x32xf32, #tpu.memory_space<vmem>>, %arg18: memref<1x32xf32, #tpu.memory_space<vmem>>, %arg19: memref<1x32xf32, #tpu.memory_space<vmem>>, %arg20: memref<1x8x32xf32, #tpu.memory_space<vmem>>, %arg21: memref<4x16x8xf32, #tpu.memory_space<vmem>>, %arg22: memref<4x16x8xf32, #tpu.memory_space<vmem>>) attributes {dimension_semantics = [#tpu.dimension_semantics<parallel>, #tpu.dimension_semantics<arbitrary>], iteration_bounds = array<i64: 2, 2>, scalar_prefetch = 0 : i64, scratch_operands = 2 : i64, tpu.core_type = #tpu.core_type<tc>, window_params = [{transform_indices = @transform_0, window_bounds = array<i64: 1, 16, 32>}, {transform_indices = @transform_1, window_bounds = array<i64: 1, 1, 16>}, {pipeline_mode = #tpu.pipeline_mode<synchronous>, transform_indices = @transform_2, window_bounds = array<i64: 32, 32>}, {pipeline_mode = #tpu.pipeline_mode<synchronous>, transform_indices = @transform_3, window_bounds = array<i64: 1, 32>}, {pipeline_mode = #tpu.pipeline_mode<synchronous>, transform_indices = @transform_4, window_bounds = array<i64: 32, 32>}, {pipeline_mode = #tpu.pipeline_mode<synchronous>, transform_indices = @transform_5, window_bounds = array<i64: 1, 32>}, {pipeline_mode = #tpu.pipeline_mode<synchronous>, transform_indices = @transform_6, window_bounds = array<i64: 32, 32>}, {pipeline_mode = #tpu.pipeline_mode<synchronous>, transform_indices = @transform_7, window_bounds = array<i64: 1, 32>}, {pipeline_mode = #tpu.pipeline_mode<synchronous>, transform_indices = @transform_8, window_bounds = array<i64: 32, 32>}, {pipeline_mode = #tpu.pipeline_mode<synchronous>, transform_indices = @transform_9, window_bounds = array<i64: 1, 32>}, {pipeline_mode = #tpu.pipeline_mode<synchronous>, transform_indices = @transform_10, window_bounds = array<i64: 32, 64>}, {pipeline_mode = #tpu.pipeline_mode<synchronous>, transform_indices = @transform_11, window_bounds = array<i64: 1, 64>}, {pipeline_mode = #tpu.pipeline_mode<synchronous>, transform_indices = @transform_12, window_bounds = array<i64: 64, 32>}, {pipeline_mode = #tpu.pipeline_mode<synchronous>, transform_indices = @transform_13, window_bounds = array<i64: 1, 32>}, {pipeline_mode = #tpu.pipeline_mode<synchronous>, transform_indices = @transform_14, window_bounds = array<i64: 1, 32>}, {pipeline_mode = #tpu.pipeline_mode<synchronous>, transform_indices = @transform_15, window_bounds = array<i64: 1, 32>}, {pipeline_mode = #tpu.pipeline_mode<synchronous>, transform_indices = @transform_16, window_bounds = array<i64: 1, 32>}, {pipeline_mode = #tpu.pipeline_mode<synchronous>, transform_indices = @transform_17, window_bounds = array<i64: 1, 32>}, {transform_indices = @transform_18, window_bounds = array<i64: 1, 8, 32>}]} {
    %c0 = arith.constant 0 : index
    %c0_0 = arith.constant 0 : index
    %c0_1 = arith.constant 0 : index
    %0 = vector.load %arg3[%c0, %c0_0, %c0_1] : memref<1x1x16xf32, #tpu.memory_space<vmem>>, vector<1x1x16xf32>
    %1 = vector.shape_cast %0 : vector<1x1x16xf32> to vector<1x16xf32>
    %cst = arith.constant 1.000000e+00 : f32
    %2 = vector.broadcast %cst : f32 to vector<1x16xf32>
    %3 = arith.subf %1, %2 : vector<1x16xf32>
    %cst_2 = arith.constant 1.000000e+09 : f32
    %4 = vector.broadcast %cst_2 : f32 to vector<1x16xf32>
    %5 = arith.mulf %3, %4 : vector<1x16xf32>
    %c0_i32 = arith.constant 0 : i32
    %6 = arith.cmpi eq, %arg1, %c0_i32 : i32
    %7 = arith.extui %6 : i1 to i32
    %c0_i32_3 = arith.constant 0 : i32
    %8 = arith.cmpi ne, %7, %c0_i32_3 : i32
    scf.if %8 {
      %c0_59 = arith.constant 0 : index
      %c0_60 = arith.constant 0 : index
      %c0_61 = arith.constant 0 : index
      %112 = vector.load %arg2[%c0_59, %c0_60, %c0_61] : memref<1x16x32xf32, #tpu.memory_space<vmem>>, vector<1x16x32xf32>
      %113 = vector.shape_cast %112 : vector<1x16x32xf32> to vector<16x32xf32>
      %c0_62 = arith.constant 0 : index
      %c0_63 = arith.constant 0 : index
      %114 = vector.load %arg16[%c0_62, %c0_63] : memref<1x32xf32, #tpu.memory_space<vmem>>, vector<1x32xf32>
      %c0_64 = arith.constant 0 : index
      %c0_65 = arith.constant 0 : index
      %115 = vector.load %arg17[%c0_64, %c0_65] : memref<1x32xf32, #tpu.memory_space<vmem>>, vector<1x32xf32>
      %cst_66 = arith.constant dense<0.000000e+00> : vector<16xf32>
      %116 = vector.multi_reduction <add>, %113, %cst_66 [1] : vector<16x32xf32> to vector<16xf32>
      %117 = vector.shape_cast %116 : vector<16xf32> to vector<16x1xf32>
      %cst_67 = arith.constant 3.200000e+01 : f32
      %118 = vector.broadcast %cst_67 : f32 to vector<16x1xf32>
      %119 = arith.divf %117, %118 : vector<16x1xf32>
      %120 = vector.broadcast %119 : vector<16x1xf32> to vector<16x32xf32>
      %121 = arith.subf %113, %120 : vector<16x32xf32>
      %122 = arith.mulf %121, %121 : vector<16x32xf32>
      %cst_68 = arith.constant dense<0.000000e+00> : vector<16xf32>
      %123 = vector.multi_reduction <add>, %122, %cst_68 [1] : vector<16x32xf32> to vector<16xf32>
      %124 = vector.shape_cast %123 : vector<16xf32> to vector<16x1xf32>
      %cst_69 = arith.constant 3.100000e+01 : f32
      %125 = vector.broadcast %cst_69 : f32 to vector<16x1xf32>
      %126 = arith.divf %124, %125 : vector<16x1xf32>
      %127 = math.sqrt %126 : vector<16x1xf32>
      %128 = vector.broadcast %119 : vector<16x1xf32> to vector<16x32xf32>
      %129 = arith.subf %113, %128 : vector<16x32xf32>
      %130 = vector.broadcast %114 : vector<1x32xf32> to vector<16x32xf32>
      %131 = arith.mulf %130, %129 : vector<16x32xf32>
      %cst_70 = arith.constant 9.99999997E-7 : f32
      %132 = vector.broadcast %cst_70 : f32 to vector<16x1xf32>
      %133 = arith.addf %127, %132 : vector<16x1xf32>
      %134 = vector.broadcast %133 : vector<16x1xf32> to vector<16x32xf32>
      %135 = arith.divf %131, %134 : vector<16x32xf32>
      %136 = vector.broadcast %115 : vector<1x32xf32> to vector<16x32xf32>
      %137 = arith.addf %135, %136 : vector<16x32xf32>
      %c0_71 = arith.constant 0 : index
      %c0_72 = arith.constant 0 : index
      %138 = vector.load %arg6[%c0_71, %c0_72] : memref<32x32xf32, #tpu.memory_space<vmem>>, vector<32x32xf32>
      %cst_73 = arith.constant dense<0.000000e+00> : vector<16x32xf32>
      %139 = tpu.matmul %137, %138, %cst_73 {dimension_numbers = #tpu.dot_dimension_numbers<[1], [0], [0], [1], [0, 0, 1, 1], [], []>} : vector<16x32xf32>, vector<32x32xf32>, vector<16x32xf32> -> vector<16x32xf32>
      %c0_74 = arith.constant 0 : index
      %c0_75 = arith.constant 0 : index
      %140 = vector.load %arg7[%c0_74, %c0_75] : memref<1x32xf32, #tpu.memory_space<vmem>>, vector<1x32xf32>
      %141 = vector.broadcast %140 : vector<1x32xf32> to vector<16x32xf32>
      %142 = arith.addf %139, %141 : vector<16x32xf32>
      %c0_76 = arith.constant 0 : index
      %c0_77 = arith.constant 0 : index
      %143 = vector.load %arg8[%c0_76, %c0_77] : memref<32x32xf32, #tpu.memory_space<vmem>>, vector<32x32xf32>
      %cst_78 = arith.constant dense<0.000000e+00> : vector<16x32xf32>
      %144 = tpu.matmul %137, %143, %cst_78 {dimension_numbers = #tpu.dot_dimension_numbers<[1], [0], [0], [1], [0, 0, 1, 1], [], []>} : vector<16x32xf32>, vector<32x32xf32>, vector<16x32xf32> -> vector<16x32xf32>
      %c0_79 = arith.constant 0 : index
      %c0_80 = arith.constant 0 : index
      %145 = vector.load %arg9[%c0_79, %c0_80] : memref<1x32xf32, #tpu.memory_space<vmem>>, vector<1x32xf32>
      %146 = vector.broadcast %145 : vector<1x32xf32> to vector<16x32xf32>
      %147 = arith.addf %144, %146 : vector<16x32xf32>
      %148 = vector.shape_cast %142 : vector<16x32xf32> to vector<16x4x8xf32>
      %149 = tpu.transpose %148, [1, 0, 2] : vector<16x4x8xf32> -> vector<4x16x8xf32>
      %c0_81 = arith.constant 0 : index
      %c0_82 = arith.constant 0 : index
      %c0_83 = arith.constant 0 : index
      %150 = vector.load %arg21[%c0_81, %c0_82, %c0_83] : memref<4x16x8xf32, #tpu.memory_space<vmem>>, vector<4x16x8xf32>
      tpu.vector_store %arg21[%c0_81, %c0_82, %c0_83], %149 {strides = array<i32>} : memref<4x16x8xf32, #tpu.memory_space<vmem>>, vector<4x16x8xf32>,
      %151 = vector.shape_cast %147 : vector<16x32xf32> to vector<16x4x8xf32>
      %152 = tpu.transpose %151, [1, 0, 2] : vector<16x4x8xf32> -> vector<4x16x8xf32>
      %c0_84 = arith.constant 0 : index
      %c0_85 = arith.constant 0 : index
      %c0_86 = arith.constant 0 : index
      %153 = vector.load %arg22[%c0_84, %c0_85, %c0_86] : memref<4x16x8xf32, #tpu.memory_space<vmem>>, vector<4x16x8xf32>
      tpu.vector_store %arg22[%c0_84, %c0_85, %c0_86], %152 {strides = array<i32>} : memref<4x16x8xf32, #tpu.memory_space<vmem>>, vector<4x16x8xf32>,
    } else {
    }
    %c8_i32 = arith.constant 8 : i32
    %9 = arith.muli %arg1, %c8_i32 : i32
    %10 = tpu.assume_multiple %9, 8 : i32
    %c0_4 = arith.constant 0 : index
    %11 = arith.index_cast %10 : i32 to index
    %c0_5 = arith.constant 0 : index
    %12 = vector.load %arg2[%c0_4, %11, %c0_5] : memref<1x16x32xf32, #tpu.memory_space<vmem>>, vector<1x8x32xf32>
    %13 = vector.shape_cast %12 : vector<1x8x32xf32> to vector<8x32xf32>
    %c0_6 = arith.constant 0 : index
    %c0_7 = arith.constant 0 : index
    %14 = vector.load %arg16[%c0_6, %c0_7] : memref<1x32xf32, #tpu.memory_space<vmem>>, vector<1x32xf32>
    %c0_8 = arith.constant 0 : index
    %c0_9 = arith.constant 0 : index
    %15 = vector.load %arg17[%c0_8, %c0_9] : memref<1x32xf32, #tpu.memory_space<vmem>>, vector<1x32xf32>
    %cst_10 = arith.constant dense<0.000000e+00> : vector<8xf32>
    %16 = vector.multi_reduction <add>, %13, %cst_10 [1] : vector<8x32xf32> to vector<8xf32>
    %17 = vector.shape_cast %16 : vector<8xf32> to vector<8x1xf32>
    %cst_11 = arith.constant 3.200000e+01 : f32
    %18 = vector.broadcast %cst_11 : f32 to vector<8x1xf32>
    %19 = arith.divf %17, %18 : vector<8x1xf32>
    %20 = vector.broadcast %19 : vector<8x1xf32> to vector<8x32xf32>
    %21 = arith.subf %13, %20 : vector<8x32xf32>
    %22 = arith.mulf %21, %21 : vector<8x32xf32>
    %cst_12 = arith.constant dense<0.000000e+00> : vector<8xf32>
    %23 = vector.multi_reduction <add>, %22, %cst_12 [1] : vector<8x32xf32> to vector<8xf32>
    %24 = vector.shape_cast %23 : vector<8xf32> to vector<8x1xf32>
    %cst_13 = arith.constant 3.100000e+01 : f32
    %25 = vector.broadcast %cst_13 : f32 to vector<8x1xf32>
    %26 = arith.divf %24, %25 : vector<8x1xf32>
    %27 = math.sqrt %26 : vector<8x1xf32>
    %28 = vector.broadcast %19 : vector<8x1xf32> to vector<8x32xf32>
    %29 = arith.subf %13, %28 : vector<8x32xf32>
    %30 = vector.broadcast %14 : vector<1x32xf32> to vector<8x32xf32>
    %31 = arith.mulf %30, %29 : vector<8x32xf32>
    %cst_14 = arith.constant 9.99999997E-7 : f32
    %32 = vector.broadcast %cst_14 : f32 to vector<8x1xf32>
    %33 = arith.addf %27, %32 : vector<8x1xf32>
    %34 = vector.broadcast %33 : vector<8x1xf32> to vector<8x32xf32>
    %35 = arith.divf %31, %34 : vector<8x32xf32>
    %36 = vector.broadcast %15 : vector<1x32xf32> to vector<8x32xf32>
    %37 = arith.addf %35, %36 : vector<8x32xf32>
    %c0_15 = arith.constant 0 : index
    %c0_16 = arith.constant 0 : index
    %38 = vector.load %arg4[%c0_15, %c0_16] : memref<32x32xf32, #tpu.memory_space<vmem>>, vector<32x32xf32>
    %cst_17 = arith.constant dense<0.000000e+00> : vector<8x32xf32>
    %39 = tpu.matmul %37, %38, %cst_17 {dimension_numbers = #tpu.dot_dimension_numbers<[1], [0], [0], [1], [0, 0, 1, 1], [], []>} : vector<8x32xf32>, vector<32x32xf32>, vector<8x32xf32> -> vector<8x32xf32>
    %c0_18 = arith.constant 0 : index
    %c0_19 = arith.constant 0 : index
    %40 = vector.load %arg5[%c0_18, %c0_19] : memref<1x32xf32, #tpu.memory_space<vmem>>, vector<1x32xf32>
    %41 = vector.broadcast %40 : vector<1x32xf32> to vector<8x32xf32>
    %42 = arith.addf %39, %41 : vector<8x32xf32>
    %cst_20 = arith.constant 0.353553385 : f32
    %43 = vector.broadcast %cst_20 : f32 to vector<8x32xf32>
    %44 = arith.mulf %42, %43 : vector<8x32xf32>
    %45 = vector.shape_cast %44 : vector<8x32xf32> to vector<8x4x8xf32>
    %46 = tpu.transpose %45, [1, 0, 2] : vector<8x4x8xf32> -> vector<4x8x8xf32>
    %c0_21 = arith.constant 0 : index
    %c0_22 = arith.constant 0 : index
    %c0_23 = arith.constant 0 : index
    %47 = vector.load %arg21[%c0_21, %c0_22, %c0_23] : memref<4x16x8xf32, #tpu.memory_space<vmem>>, vector<4x16x8xf32>
    %cst_24 = arith.constant dense<0.000000e+00> : vector<4x8x16xf32>
    %48 = tpu.matmul %46, %47, %cst_24 {dimension_numbers = #tpu.dot_dimension_numbers<[2], [2], [1], [1], [0, 0, 0, 1, 1, 1], [0], [0]>} : vector<4x8x8xf32>, vector<4x16x8xf32>, vector<4x8x16xf32> -> vector<4x8x16xf32>
    %49 = vector.shape_cast %5 : vector<1x16xf32> to vector<1x1x16xf32>
    %50 = vector.broadcast %49 : vector<1x1x16xf32> to vector<4x8x16xf32>
    %51 = arith.addf %48, %50 : vector<4x8x16xf32>
    %cst_25 = arith.constant dense<0xFF800000> : vector<4x8xf32>
    %52 = vector.multi_reduction <maximumf>, %51, %cst_25 [2] : vector<4x8x16xf32> to vector<4x8xf32>
    %53 = vector.shape_cast %52 : vector<4x8xf32> to vector<4x8x1xf32>
    %54 = vector.broadcast %53 : vector<4x8x1xf32> to vector<4x8x16xf32>
    %55 = arith.subf %51, %54 : vector<4x8x16xf32>
    %56 = math.exp %55 : vector<4x8x16xf32>
    %cst_26 = arith.constant dense<0.000000e+00> : vector<4x8xf32>
    %57 = vector.multi_reduction <add>, %56, %cst_26 [2] : vector<4x8x16xf32> to vector<4x8xf32>
    %58 = vector.shape_cast %57 : vector<4x8xf32> to vector<4x8x1xf32>
    %59 = tpu.reciprocal %58 : vector<4x8x1xf32> -> vector<4x8x1xf32>
    %60 = vector.broadcast %59 : vector<4x8x1xf32> to vector<4x8x16xf32>
    %61 = arith.mulf %56, %60 : vector<4x8x16xf32>
    %c0_27 = arith.constant 0 : index
    %c0_28 = arith.constant 0 : index
    %c0_29 = arith.constant 0 : index
    %62 = vector.load %arg22[%c0_27, %c0_28, %c0_29] : memref<4x16x8xf32, #tpu.memory_space<vmem>>, vector<4x16x8xf32>
    %cst_30 = arith.constant dense<0.000000e+00> : vector<4x8x8xf32>
    %63 = tpu.matmul %61, %62, %cst_30 {dimension_numbers = #tpu.dot_dimension_numbers<[2], [1], [1], [2], [0, 0, 0, 1, 1, 2], [0], [0]>} : vector<4x8x16xf32>, vector<4x16x8xf32>, vector<4x8x8xf32> -> vector<4x8x8xf32>
    %64 = tpu.transpose %63, [1, 0, 2] : vector<4x8x8xf32> -> vector<8x4x8xf32>
    %65 = vector.shape_cast %64 : vector<8x4x8xf32> to vector<8x32xf32>
    %c0_31 = arith.constant 0 : index
    %c0_32 = arith.constant 0 : index
    %66 = vector.load %arg10[%c0_31, %c0_32] : memref<32x32xf32, #tpu.memory_space<vmem>>, vector<32x32xf32>
    %cst_33 = arith.constant dense<0.000000e+00> : vector<8x32xf32>
    %67 = tpu.matmul %65, %66, %cst_33 {dimension_numbers = #tpu.dot_dimension_numbers<[1], [0], [0], [1], [0, 0, 1, 1], [], []>} : vector<8x32xf32>, vector<32x32xf32>, vector<8x32xf32> -> vector<8x32xf32>
    %c0_34 = arith.constant 0 : index
    %c0_35 = arith.constant 0 : index
    %68 = vector.load %arg11[%c0_34, %c0_35] : memref<1x32xf32, #tpu.memory_space<vmem>>, vector<1x32xf32>
    %69 = vector.broadcast %68 : vector<1x32xf32> to vector<8x32xf32>
    %70 = arith.addf %67, %69 : vector<8x32xf32>
    %71 = arith.addf %13, %70 : vector<8x32xf32>
    %c0_36 = arith.constant 0 : index
    %c0_37 = arith.constant 0 : index
    %72 = vector.load %arg18[%c0_36, %c0_37] : memref<1x32xf32, #tpu.memory_space<vmem>>, vector<1x32xf32>
    %c0_38 = arith.constant 0 : index
    %c0_39 = arith.constant 0 : index
    %73 = vector.load %arg19[%c0_38, %c0_39] : memref<1x32xf32, #tpu.memory_space<vmem>>, vector<1x32xf32>
    %cst_40 = arith.constant dense<0.000000e+00> : vector<8xf32>
    %74 = vector.multi_reduction <add>, %71, %cst_40 [1] : vector<8x32xf32> to vector<8xf32>
    %75 = vector.shape_cast %74 : vector<8xf32> to vector<8x1xf32>
    %cst_41 = arith.constant 3.200000e+01 : f32
    %76 = vector.broadcast %cst_41 : f32 to vector<8x1xf32>
    %77 = arith.divf %75, %76 : vector<8x1xf32>
    %78 = vector.broadcast %77 : vector<8x1xf32> to vector<8x32xf32>
    %79 = arith.subf %71, %78 : vector<8x32xf32>
    %80 = arith.mulf %79, %79 : vector<8x32xf32>
    %cst_42 = arith.constant dense<0.000000e+00> : vector<8xf32>
    %81 = vector.multi_reduction <add>, %80, %cst_42 [1] : vector<8x32xf32> to vector<8xf32>
    %82 = vector.shape_cast %81 : vector<8xf32> to vector<8x1xf32>
    %cst_43 = arith.constant 3.100000e+01 : f32
    %83 = vector.broadcast %cst_43 : f32 to vector<8x1xf32>
    %84 = arith.divf %82, %83 : vector<8x1xf32>
    %85 = math.sqrt %84 : vector<8x1xf32>
    %86 = vector.broadcast %77 : vector<8x1xf32> to vector<8x32xf32>
    %87 = arith.subf %71, %86 : vector<8x32xf32>
    %88 = vector.broadcast %72 : vector<1x32xf32> to vector<8x32xf32>
    %89 = arith.mulf %88, %87 : vector<8x32xf32>
    %cst_44 = arith.constant 9.99999997E-7 : f32
    %90 = vector.broadcast %cst_44 : f32 to vector<8x1xf32>
    %91 = arith.addf %85, %90 : vector<8x1xf32>
    %92 = vector.broadcast %91 : vector<8x1xf32> to vector<8x32xf32>
    %93 = arith.divf %89, %92 : vector<8x32xf32>
    %94 = vector.broadcast %73 : vector<1x32xf32> to vector<8x32xf32>
    %95 = arith.addf %93, %94 : vector<8x32xf32>
    %c0_45 = arith.constant 0 : index
    %c0_46 = arith.constant 0 : index
    %96 = vector.load %arg15[%c0_45, %c0_46] : memref<1x32xf32, #tpu.memory_space<vmem>>, vector<1x32xf32>
    %97 = vector.broadcast %96 : vector<1x32xf32> to vector<8x32xf32>
    %98 = arith.addf %71, %97 : vector<8x32xf32>
    %c0_47 = arith.constant 0 : index
    %c0_48 = arith.constant 0 : index
    %99 = vector.load %arg12[%c0_47, %c0_48] : memref<32x64xf32, #tpu.memory_space<vmem>>, vector<32x64xf32>
    %cst_49 = arith.constant dense<0.000000e+00> : vector<8x64xf32>
    %100 = tpu.matmul %95, %99, %cst_49 {dimension_numbers = #tpu.dot_dimension_numbers<[1], [0], [0], [1], [0, 0, 1, 1], [], []>} : vector<8x32xf32>, vector<32x64xf32>, vector<8x64xf32> -> vector<8x64xf32>
    %c0_50 = arith.constant 0 : index
    %c0_51 = arith.constant 0 : index
    %101 = vector.load %arg13[%c0_50, %c0_51] : memref<1x64xf32, #tpu.memory_space<vmem>>, vector<1x64xf32>
    %102 = vector.broadcast %101 : vector<1x64xf32> to vector<8x64xf32>
    %103 = arith.addf %100, %102 : vector<8x64xf32>
    %cst_52 = arith.constant 0.000000e+00 : f32
    %104 = vector.broadcast %cst_52 : f32 to vector<8x64xf32>
    %105 = arith.maximumf %103, %104 : vector<8x64xf32>
    %c0_53 = arith.constant 0 : index
    %c0_54 = arith.constant 0 : index
    %106 = vector.load %arg14[%c0_53, %c0_54] : memref<64x32xf32, #tpu.memory_space<vmem>>, vector<64x32xf32>
    %cst_55 = arith.constant dense<0.000000e+00> : vector<8x32xf32>
    %107 = tpu.matmul %105, %106, %cst_55 {dimension_numbers = #tpu.dot_dimension_numbers<[1], [0], [0], [1], [0, 0, 1, 1], [], []>} : vector<8x64xf32>, vector<64x32xf32>, vector<8x32xf32> -> vector<8x32xf32>
    %108 = arith.addf %98, %107 : vector<8x32xf32>
    %c0_56 = arith.constant 0 : index
    %c0_57 = arith.constant 0 : index
    %c0_58 = arith.constant 0 : index
    %109 = vector.load %arg20[%c0_56, %c0_57, %c0_58] : memref<1x8x32xf32, #tpu.memory_space<vmem>>, vector<1x8x32xf32>
    %110 = vector.shape_cast %109 : vector<1x8x32xf32> to vector<8x32xf32>
    %111 = vector.shape_cast %108 : vector<8x32xf32> to vector<1x8x32xf32>
    tpu.vector_store %arg20[%c0_56, %c0_57, %c0_58], %111 {strides = array<i32>} : memref<1x8x32xf32, #tpu.memory_space<vmem>>, vector<1x8x32xf32>,
    return
  }
  func.func @transform_0(%arg0: i32, %arg1: i32) -> (i32, i32, i32) {
    %c0_i32 = arith.constant 0 : i32
    %c0_i32_0 = arith.constant 0 : i32
    %c0_i32_1 = arith.constant 0 : i32
    return %arg0, %c0_i32, %c0_i32_0 : i32, i32, i32
  }
  func.func @transform_1(%arg0: i32, %arg1: i32) -> (i32, i32, i32) {
    %c0_i32 = arith.constant 0 : i32
    %c0_i32_0 = arith.constant 0 : i32
    %c0_i32_1 = arith.constant 0 : i32
    return %arg0, %c0_i32, %c0_i32_0 : i32, i32, i32
  }
  func.func @transform_2(%arg0: i32, %arg1: i32) -> (i32, i32) {
    %c0_i32 = arith.constant 0 : i32
    %c0_i32_0 = arith.constant 0 : i32
    %c0_i32_1 = arith.constant 0 : i32
    return %c0_i32, %c0_i32_0 : i32, i32
  }
  func.func @transform_3(%arg0: i32, %arg1: i32) -> (i32, i32) {
    %c0_i32 = arith.constant 0 : i32
    %c0_i32_0 = arith.constant 0 : i32
    %c0_i32_1 = arith.constant 0 : i32
    return %c0_i32, %c0_i32_0 : i32, i32
  }
  func.func @transform_4(%arg0: i32, %arg1: i32) -> (i32, i32) {
    %c0_i32 = arith.constant 0 : i32
    %c0_i32_0 = arith.constant 0 : i32
    %c0_i32_1 = arith.constant 0 : i32
    return %c0_i32, %c0_i32_0 : i32, i32
  }
  func.func @transform_5(%arg0: i32, %arg1: i32) -> (i32, i32) {
    %c0_i32 = arith.constant 0 : i32
    %c0_i32_0 = arith.constant 0 : i32
    %c0_i32_1 = arith.constant 0 : i32
    return %c0_i32, %c0_i32_0 : i32, i32
  }
  func.func @transform_6(%arg0: i32, %arg1: i32) -> (i32, i32) {
    %c0_i32 = arith.constant 0 : i32
    %c0_i32_0 = arith.constant 0 : i32
    %c0_i32_1 = arith.constant 0 : i32
    return %c0_i32, %c0_i32_0 : i32, i32
  }
  func.func @transform_7(%arg0: i32, %arg1: i32) -> (i32, i32) {
    %c0_i32 = arith.constant 0 : i32
    %c0_i32_0 = arith.constant 0 : i32
    %c0_i32_1 = arith.constant 0 : i32
    return %c0_i32, %c0_i32_0 : i32, i32
  }
  func.func @transform_8(%arg0: i32, %arg1: i32) -> (i32, i32) {
    %c0_i32 = arith.constant 0 : i32
    %c0_i32_0 = arith.constant 0 : i32
    %c0_i32_1 = arith.constant 0 : i32
    return %c0_i32, %c0_i32_0 : i32, i32
  }
  func.func @transform_9(%arg0: i32, %arg1: i32) -> (i32, i32) {
    %c0_i32 = arith.constant 0 : i32
    %c0_i32_0 = arith.constant 0 : i32
    %c0_i32_1 = arith.constant 0 : i32
    return %c0_i32, %c0_i32_0 : i32, i32
  }
  func.func @transform_10(%arg0: i32, %arg1: i32) -> (i32, i32) {
    %c0_i32 = arith.constant 0 : i32
    %c0_i32_0 = arith.constant 0 : i32
    %c0_i32_1 = arith.constant 0 : i32
    return %c0_i32, %c0_i32_0 : i32, i32
  }
  func.func @transform_11(%arg0: i32, %arg1: i32) -> (i32, i32) {
    %c0_i32 = arith.constant 0 : i32
    %c0_i32_0 = arith.constant 0 : i32
    %c0_i32_1 = arith.constant 0 : i32
    return %c0_i32, %c0_i32_0 : i32, i32
  }
  func.func @transform_12(%arg0: i32, %arg1: i32) -> (i32, i32) {
    %c0_i32 = arith.constant 0 : i32
    %c0_i32_0 = arith.constant 0 : i32
    %c0_i32_1 = arith.constant 0 : i32
    return %c0_i32, %c0_i32_0 : i32, i32
  }
  func.func @transform_13(%arg0: i32, %arg1: i32) -> (i32, i32) {
    %c0_i32 = arith.constant 0 : i32
    %c0_i32_0 = arith.constant 0 : i32
    %c0_i32_1 = arith.constant 0 : i32
    return %c0_i32, %c0_i32_0 : i32, i32
  }
  func.func @transform_14(%arg0: i32, %arg1: i32) -> (i32, i32) {
    %c0_i32 = arith.constant 0 : i32
    %c0_i32_0 = arith.constant 0 : i32
    %c0_i32_1 = arith.constant 0 : i32
    return %c0_i32, %c0_i32_0 : i32, i32
  }
  func.func @transform_15(%arg0: i32, %arg1: i32) -> (i32, i32) {
    %c0_i32 = arith.constant 0 : i32
    %c0_i32_0 = arith.constant 0 : i32
    %c0_i32_1 = arith.constant 0 : i32
    return %c0_i32, %c0_i32_0 : i32, i32
  }
  func.func @transform_16(%arg0: i32, %arg1: i32) -> (i32, i32) {
    %c0_i32 = arith.constant 0 : i32
    %c0_i32_0 = arith.constant 0 : i32
    %c0_i32_1 = arith.constant 0 : i32
    return %c0_i32, %c0_i32_0 : i32, i32
  }
  func.func @transform_17(%arg0: i32, %arg1: i32) -> (i32, i32) {
    %c0_i32 = arith.constant 0 : i32
    %c0_i32_0 = arith.constant 0 : i32
    %c0_i32_1 = arith.constant 0 : i32
    return %c0_i32, %c0_i32_0 : i32, i32
  }
  func.func @transform_18(%arg0: i32, %arg1: i32) -> (i32, i32, i32) {
    %c0_i32 = arith.constant 0 : i32
    %c0_i32_0 = arith.constant 0 : i32
    return %arg0, %arg1, %c0_i32 : i32, i32, i32
  }
}

module attributes {stable_mosaic.version = 11 : i64} {
  func.func @encoder_layer_kernel(%arg0: i32, %arg1: i32, %arg2: memref<1x16x32xf32, #tpu.memory_space<vmem>>, %arg3: memref<1x1x16xf32, #tpu.memory_space<vmem>>, %arg4: memref<32x32xf32, #tpu.memory_space<vmem>>, %arg5: memref<1x32xf32, #tpu.memory_space<vmem>>, %arg6: memref<32x32xf32, #tpu.memory_space<vmem>>, %arg7: memref<1x32xf32, #tpu.memory_space<vmem>>, %arg8: memref<32x32xf32, #tpu.memory_space<vmem>>, %arg9: memref<1x32xf32, #tpu.memory_space<vmem>>, %arg10: memref<32x32xf32, #tpu.memory_space<vmem>>, %arg11: memref<1x32xf32, #tpu.memory_space<vmem>>, %arg12: memref<32x64xf32, #tpu.memory_space<vmem>>, %arg13: memref<1x64xf32, #tpu.memory_space<vmem>>, %arg14: memref<64x32xf32, #tpu.memory_space<vmem>>, %arg15: memref<1x32xf32, #tpu.memory_space<vmem>>, %arg16: memref<1x32xf32, #tpu.memory_space<vmem>>, %arg17: memref<1x32xf32, #tpu.memory_space<vmem>>, %arg18: memref<1x32xf32, #tpu.memory_space<vmem>>, %arg19: memref<1x32xf32, #tpu.memory_space<vmem>>, %arg20: memref<1x8x32xf32, #tpu.memory_space<vmem>>, %arg21: memref<4x16x8xf32, #tpu.memory_space<vmem>>, %arg22: memref<4x16x8xf32, #tpu.memory_space<vmem>>) attributes {dimension_semantics = [#tpu.dimension_semantics<parallel>, #tpu.dimension_semantics<arbitrary>], iteration_bounds = array<i64: 2, 2>, scalar_prefetch = 0 : i64, scratch_operands = 2 : i64, tpu.core_type = #tpu.core_type<tc>, window_params = [{transform_indices = @transform_0, window_bounds = array<i64: 1, 16, 32>}, {transform_indices = @transform_1, window_bounds = array<i64: 1, 1, 16>}, {pipeline_mode = #tpu.pipeline_mode<synchronous>, transform_indices = @transform_2, window_bounds = array<i64: 32, 32>}, {pipeline_mode = #tpu.pipeline_mode<synchronous>, transform_indices = @transform_3, window_bounds = array<i64: 1, 32>}, {pipeline_mode = #tpu.pipeline_mode<synchronous>, transform_indices = @transform_4, window_bounds = array<i64: 32, 32>}, {pipeline_mode = #tpu.pipeline_mode<synchronous>, transform_indices = @transform_5, window_bounds = array<i64: 1, 32>}, {pipeline_mode = #tpu.pipeline_mode<synchronous>, transform_indices = @transform_6, window_bounds = array<i64: 32, 32>}, {pipeline_mode = #tpu.pipeline_mode<synchronous>, transform_indices = @transform_7, window_bounds = array<i64: 1, 32>}, {pipeline_mode = #tpu.pipeline_mode<synchronous>, transform_indices = @transform_8, window_bounds = array<i64: 32, 32>}, {pipeline_mode = #tpu.pipeline_mode<synchronous>, transform_indices = @transform_9, window_bounds = array<i64: 1, 32>}, {pipeline_mode = #tpu.pipeline_mode<synchronous>, transform_indices = @transform_10, window_bounds = array<i64: 32, 64>}, {pipeline_mode = #tpu.pipeline_mode<synchronous>, transform_indices = @transform_11, window_bounds = array<i64: 1, 64>}, {pipeline_mode = #tpu.pipeline_mode<synchronous>, transform_indices = @transform_12, window_bounds = array<i64: 64, 32>}, {pipeline_mode = #tpu.pipeline_mode<synchronous>, transform_indices = @transform_13, window_bounds = array<i64: 1, 32>}, {pipeline_mode = #tpu.pipeline_mode<synchronous>, transform_indices = @transform_14, window_bounds = array<i64: 1, 32>}, {pipeline_mode = #tpu.pipeline_mode<synchronous>, transform_indices = @transform_15, window_bounds = array<i64: 1, 32>}, {pipeline_mode = #tpu.pipeline_mode<synchronous>, transform_indices = @transform_16, window_bounds = array<i64: 1, 32>}, {pipeline_mode = #tpu.pipeline_mode<synchronous>, transform_indices = @transform_17, window_bounds = array<i64: 1, 32>}, {transform_indices = @transform_18, window_bounds = array<i64: 1, 8, 32>}]} {
    %c0 = arith.constant 0 : index
    %c0_0 = arith.constant 0 : index
    %c0_1 = arith.constant 0 : index
    %0 = vector.load %arg3[%c0, %c0_0, %c0_1] : memref<1x1x16xf32, #tpu.memory_space<vmem>>, vector<1x1x16xf32>
    %1 = vector.shape_cast %0 : vector<1x1x16xf32> to vector<1x16xf32>
    %cst = arith.constant 1.000000e+00 : f32
    %2 = vector.broadcast %cst : f32 to vector<1x16xf32>
    %3 = arith.subf %1, %2 : vector<1x16xf32>
    %cst_2 = arith.constant 1.000000e+09 : f32
    %4 = vector.broadcast %cst_2 : f32 to vector<1x16xf32>
    %5 = arith.mulf %3, %4 : vector<1x16xf32>
    %c0_i32 = arith.constant 0 : i32
    %6 = arith.cmpi eq, %arg1, %c0_i32 : i32
    %7 = arith.extui %6 : i1 to i32
    %c0_i32_3 = arith.constant 0 : i32
    %8 = arith.cmpi ne, %7, %c0_i32_3 : i32
    scf.if %8 {
      %c0_59 = arith.constant 0 : index
      %c0_60 = arith.constant 0 : index
      %c0_61 = arith.constant 0 : index
      %112 = vector.load %arg2[%c0_59, %c0_60, %c0_61] : memref<1x16x32xf32, #tpu.memory_space<vmem>>, vector<1x16x32xf32>
      %113 = vector.shape_cast %112 : vector<1x16x32xf32> to vector<16x32xf32>
      %c0_62 = arith.constant 0 : index
      %c0_63 = arith.constant 0 : index
      %114 = vector.load %arg16[%c0_62, %c0_63] : memref<1x32xf32, #tpu.memory_space<vmem>>, vector<1x32xf32>
      %c0_64 = arith.constant 0 : index
      %c0_65 = arith.constant 0 : index
      %115 = vector.load %arg17[%c0_64, %c0_65] : memref<1x32xf32, #tpu.memory_space<vmem>>, vector<1x32xf32>
      %cst_66 = arith.constant dense<0.000000e+00> : vector<16xf32>
      %116 = vector.multi_reduction <add>, %113, %cst_66 [1] : vector<16x32xf32> to vector<16xf32>
      %117 = vector.shape_cast %116 : vector<16xf32> to vector<16x1xf32>
      %cst_67 = arith.constant 3.200000e+01 : f32
      %118 = vector.broadcast %cst_67 : f32 to vector<16x1xf32>
      %119 = arith.divf %117, %118 : vector<16x1xf32>
      %120 = vector.broadcast %119 : vector<16x1xf32> to vector<16x32xf32>
      %121 = arith.subf %113, %120 : vector<16x32xf32>
      %122 = arith.mulf %121, %121 : vector<16x32xf32>
      %cst_68 = arith.constant dense<0.000000e+00> : vector<16xf32>
      %123 = vector.multi_reduction <add>, %122, %cst_68 [1] : vector<16x32xf32> to vector<16xf32>
      %124 = vector.shape_cast %123 : vector<16xf32> to vector<16x1xf32>
      %cst_69 = arith.constant 3.100000e+01 : f32
      %125 = vector.broadcast %cst_69 : f32 to vector<16x1xf32>
      %126 = arith.divf %124, %125 : vector<16x1xf32>
      %127 = math.sqrt %126 : vector<16x1xf32>
      %128 = vector.broadcast %119 : vector<16x1xf32> to vector<16x32xf32>
      %129 = arith.subf %113, %128 : vector<16x32xf32>
      %130 = vector.broadcast %114 : vector<1x32xf32> to vector<16x32xf32>
      %131 = arith.mulf %130, %129 : vector<16x32xf32>
      %cst_70 = arith.constant 9.99999997E-7 : f32
      %132 = vector.broadcast %cst_70 : f32 to vector<16x1xf32>
      %133 = arith.addf %127, %132 : vector<16x1xf32>
      %134 = vector.broadcast %133 : vector<16x1xf32> to vector<16x32xf32>
      %135 = arith.divf %131, %134 : vector<16x32xf32>
      %136 = vector.broadcast %115 : vector<1x32xf32> to vector<16x32xf32>
      %137 = arith.addf %135, %136 : vector<16x32xf32>
      %c0_71 = arith.constant 0 : index
      %c0_72 = arith.constant 0 : index
      %138 = vector.load %arg6[%c0_71, %c0_72] : memref<32x32xf32, #tpu.memory_space<vmem>>, vector<32x32xf32>
      %cst_73 = arith.constant dense<0.000000e+00> : vector<16x32xf32>
      %139 = tpu.matmul %137, %138, %cst_73 {dimension_numbers = #tpu.dot_dimension_numbers<[1], [0], [0], [1], [0, 0, 1, 1], [], []>} : vector<16x32xf32>, vector<32x32xf32>, vector<16x32xf32> -> vector<16x32xf32>
      %c0_74 = arith.constant 0 : index
      %c0_75 = arith.constant 0 : index
      %140 = vector.load %arg7[%c0_74, %c0_75] : memref<1x32xf32, #tpu.memory_space<vmem>>, vector<1x32xf32>
      %141 = vector.broadcast %140 : vector<1x32xf32> to vector<16x32xf32>
      %142 = arith.addf %139, %141 : vector<16x32xf32>
      %c0_76 = arith.constant 0 : index
      %c0_77 = arith.constant 0 : index
      %143 = vector.load %arg8[%c0_76, %c0_77] : memref<32x32xf32, #tpu.memory_space<vmem>>, vector<32x32xf32>
      %cst_78 = arith.constant dense<0.000000e+00> : vector<16x32xf32>
      %144 = tpu.matmul %137, %143, %cst_78 {dimension_numbers = #tpu.dot_dimension_numbers<[1], [0], [0], [1], [0, 0, 1, 1], [], []>} : vector<16x32xf32>, vector<32x32xf32>, vector<16x32xf32> -> vector<16x32xf32>
      %c0_79 = arith.constant 0 : index
      %c0_80 = arith.constant 0 : index
      %145 = vector.load %arg9[%c0_79, %c0_80] : memref<1x32xf32, #tpu.memory_space<vmem>>, vector<1x32xf32>
      %146 = vector.broadcast %145 : vector<1x32xf32> to vector<16x32xf32>
      %147 = arith.addf %144, %146 : vector<16x32xf32>
      %148 = vector.shape_cast %142 : vector<16x32xf32> to vector<16x4x8xf32>
      %149 = tpu.transpose %148, [1, 0, 2] : vector<16x4x8xf32> -> vector<4x16x8xf32>
      %c0_81 = arith.constant 0 : index
      %c0_82 = arith.constant 0 : index
      %c0_83 = arith.constant 0 : index
      %150 = vector.load %arg21[%c0_81, %c0_82, %c0_83] : memref<4x16x8xf32, #tpu.memory_space<vmem>>, vector<4x16x8xf32>
      tpu.vector_store %arg21[%c0_81, %c0_82, %c0_83], %149 {strides = array<i32>} : memref<4x16x8xf32, #tpu.memory_space<vmem>>, vector<4x16x8xf32>,
      %151 = vector.shape_cast %147 : vector<16x32xf32> to vector<16x4x8xf32>
      %152 = tpu.transpose %151, [1, 0, 2] : vector<16x4x8xf32> -> vector<4x16x8xf32>
      %c0_84 = arith.constant 0 : index
      %c0_85 = arith.constant 0 : index
      %c0_86 = arith.constant 0 : index
      %153 = vector.load %arg22[%c0_84, %c0_85, %c0_86] : memref<4x16x8xf32, #tpu.memory_space<vmem>>, vector<4x16x8xf32>
      tpu.vector_store %arg22[%c0_84, %c0_85, %c0_86], %152 {strides = array<i32>} : memref<4x16x8xf32, #tpu.memory_space<vmem>>, vector<4x16x8xf32>,
    } else {
    }
    %c8_i32 = arith.constant 8 : i32
    %9 = arith.muli %arg1, %c8_i32 : i32
    %10 = tpu.assume_multiple %9, 8 : i32
    %c0_4 = arith.constant 0 : index
    %11 = arith.index_cast %10 : i32 to index
    %c0_5 = arith.constant 0 : index
    %12 = vector.load %arg2[%c0_4, %11, %c0_5] : memref<1x16x32xf32, #tpu.memory_space<vmem>>, vector<1x8x32xf32>
    %13 = vector.shape_cast %12 : vector<1x8x32xf32> to vector<8x32xf32>
    %c0_6 = arith.constant 0 : index
    %c0_7 = arith.constant 0 : index
    %14 = vector.load %arg16[%c0_6, %c0_7] : memref<1x32xf32, #tpu.memory_space<vmem>>, vector<1x32xf32>
    %c0_8 = arith.constant 0 : index
    %c0_9 = arith.constant 0 : index
    %15 = vector.load %arg17[%c0_8, %c0_9] : memref<1x32xf32, #tpu.memory_space<vmem>>, vector<1x32xf32>
    %cst_10 = arith.constant dense<0.000000e+00> : vector<8xf32>
    %16 = vector.multi_reduction <add>, %13, %cst_10 [1] : vector<8x32xf32> to vector<8xf32>
    %17 = vector.shape_cast %16 : vector<8xf32> to vector<8x1xf32>
    %cst_11 = arith.constant 3.200000e+01 : f32
    %18 = vector.broadcast %cst_11 : f32 to vector<8x1xf32>
    %19 = arith.divf %17, %18 : vector<8x1xf32>
    %20 = vector.broadcast %19 : vector<8x1xf32> to vector<8x32xf32>
    %21 = arith.subf %13, %20 : vector<8x32xf32>
    %22 = arith.mulf %21, %21 : vector<8x32xf32>
    %cst_12 = arith.constant dense<0.000000e+00> : vector<8xf32>
    %23 = vector.multi_reduction <add>, %22, %cst_12 [1] : vector<8x32xf32> to vector<8xf32>
    %24 = vector.shape_cast %23 : vector<8xf32> to vector<8x1xf32>
    %cst_13 = arith.constant 3.100000e+01 : f32
    %25 = vector.broadcast %cst_13 : f32 to vector<8x1xf32>
    %26 = arith.divf %24, %25 : vector<8x1xf32>
    %27 = math.sqrt %26 : vector<8x1xf32>
    %28 = vector.broadcast %19 : vector<8x1xf32> to vector<8x32xf32>
    %29 = arith.subf %13, %28 : vector<8x32xf32>
    %30 = vector.broadcast %14 : vector<1x32xf32> to vector<8x32xf32>
    %31 = arith.mulf %30, %29 : vector<8x32xf32>
    %cst_14 = arith.constant 9.99999997E-7 : f32
    %32 = vector.broadcast %cst_14 : f32 to vector<8x1xf32>
    %33 = arith.addf %27, %32 : vector<8x1xf32>
    %34 = vector.broadcast %33 : vector<8x1xf32> to vector<8x32xf32>
    %35 = arith.divf %31, %34 : vector<8x32xf32>
    %36 = vector.broadcast %15 : vector<1x32xf32> to vector<8x32xf32>
    %37 = arith.addf %35, %36 : vector<8x32xf32>
    %c0_15 = arith.constant 0 : index
    %c0_16 = arith.constant 0 : index
    %38 = vector.load %arg4[%c0_15, %c0_16] : memref<32x32xf32, #tpu.memory_space<vmem>>, vector<32x32xf32>
    %cst_17 = arith.constant dense<0.000000e+00> : vector<8x32xf32>
    %39 = tpu.matmul %37, %38, %cst_17 {dimension_numbers = #tpu.dot_dimension_numbers<[1], [0], [0], [1], [0, 0, 1, 1], [], []>} : vector<8x32xf32>, vector<32x32xf32>, vector<8x32xf32> -> vector<8x32xf32>
    %c0_18 = arith.constant 0 : index
    %c0_19 = arith.constant 0 : index
    %40 = vector.load %arg5[%c0_18, %c0_19] : memref<1x32xf32, #tpu.memory_space<vmem>>, vector<1x32xf32>
    %41 = vector.broadcast %40 : vector<1x32xf32> to vector<8x32xf32>
    %42 = arith.addf %39, %41 : vector<8x32xf32>
    %cst_20 = arith.constant 0.353553385 : f32
    %43 = vector.broadcast %cst_20 : f32 to vector<8x32xf32>
    %44 = arith.mulf %42, %43 : vector<8x32xf32>
    %45 = vector.shape_cast %44 : vector<8x32xf32> to vector<8x4x8xf32>
    %46 = tpu.transpose %45, [1, 0, 2] : vector<8x4x8xf32> -> vector<4x8x8xf32>
    %c0_21 = arith.constant 0 : index
    %c0_22 = arith.constant 0 : index
    %c0_23 = arith.constant 0 : index
    %47 = vector.load %arg21[%c0_21, %c0_22, %c0_23] : memref<4x16x8xf32, #tpu.memory_space<vmem>>, vector<4x16x8xf32>
    %cst_24 = arith.constant dense<0.000000e+00> : vector<4x8x16xf32>
    %48 = tpu.matmul %46, %47, %cst_24 {dimension_numbers = #tpu.dot_dimension_numbers<[2], [2], [1], [1], [0, 0, 0, 1, 1, 1], [0], [0]>} : vector<4x8x8xf32>, vector<4x16x8xf32>, vector<4x8x16xf32> -> vector<4x8x16xf32>
    %49 = vector.shape_cast %5 : vector<1x16xf32> to vector<1x1x16xf32>
    %50 = vector.broadcast %49 : vector<1x1x16xf32> to vector<4x8x16xf32>
    %51 = arith.addf %48, %50 : vector<4x8x16xf32>
    %cst_25 = arith.constant dense<0xFF800000> : vector<4x8xf32>
    %52 = vector.multi_reduction <maximumf>, %51, %cst_25 [2] : vector<4x8x16xf32> to vector<4x8xf32>
    %53 = vector.shape_cast %52 : vector<4x8xf32> to vector<4x8x1xf32>
    %54 = vector.broadcast %53 : vector<4x8x1xf32> to vector<4x8x16xf32>
    %55 = arith.subf %51, %54 : vector<4x8x16xf32>
    %56 = math.exp %55 : vector<4x8x16xf32>
    %cst_26 = arith.constant dense<0.000000e+00> : vector<4x8xf32>
    %57 = vector.multi_reduction <add>, %56, %cst_26 [2] : vector<4x8x16xf32> to vector<4x8xf32>
    %58 = vector.shape_cast %57 : vector<4x8xf32> to vector<4x8x1xf32>
    %59 = tpu.reciprocal %58 : vector<4x8x1xf32> -> vector<4x8x1xf32>
    %60 = vector.broadcast %59 : vector<4x8x1xf32> to vector<4x8x16xf32>
    %61 = arith.mulf %56, %60 : vector<4x8x16xf32>
    %c0_27 = arith.constant 0 : index
    %c0_28 = arith.constant 0 : index
    %c0_29 = arith.constant 0 : index
    %62 = vector.load %arg22[%c0_27, %c0_28, %c0_29] : memref<4x16x8xf32, #tpu.memory_space<vmem>>, vector<4x16x8xf32>
    %cst_30 = arith.constant dense<0.000000e+00> : vector<4x8x8xf32>
    %63 = tpu.matmul %61, %62, %cst_30 {dimension_numbers = #tpu.dot_dimension_numbers<[2], [1], [1], [2], [0, 0, 0, 1, 1, 2], [0], [0]>} : vector<4x8x16xf32>, vector<4x16x8xf32>, vector<4x8x8xf32> -> vector<4x8x8xf32>
    %64 = tpu.transpose %63, [1, 0, 2] : vector<4x8x8xf32> -> vector<8x4x8xf32>
    %65 = vector.shape_cast %64 : vector<8x4x8xf32> to vector<8x32xf32>
    %c0_31 = arith.constant 0 : index
    %c0_32 = arith.constant 0 : index
    %66 = vector.load %arg10[%c0_31, %c0_32] : memref<32x32xf32, #tpu.memory_space<vmem>>, vector<32x32xf32>
    %cst_33 = arith.constant dense<0.000000e+00> : vector<8x32xf32>
    %67 = tpu.matmul %65, %66, %cst_33 {dimension_numbers = #tpu.dot_dimension_numbers<[1], [0], [0], [1], [0, 0, 1, 1], [], []>} : vector<8x32xf32>, vector<32x32xf32>, vector<8x32xf32> -> vector<8x32xf32>
    %c0_34 = arith.constant 0 : index
    %c0_35 = arith.constant 0 : index
    %68 = vector.load %arg11[%c0_34, %c0_35] : memref<1x32xf32, #tpu.memory_space<vmem>>, vector<1x32xf32>
    %69 = vector.broadcast %68 : vector<1x32xf32> to vector<8x32xf32>
    %70 = arith.addf %67, %69 : vector<8x32xf32>
    %71 = arith.addf %13, %70 : vector<8x32xf32>
    %c0_36 = arith.constant 0 : index
    %c0_37 = arith.constant 0 : index
    %72 = vector.load %arg18[%c0_36, %c0_37] : memref<1x32xf32, #tpu.memory_space<vmem>>, vector<1x32xf32>
    %c0_38 = arith.constant 0 : index
    %c0_39 = arith.constant 0 : index
    %73 = vector.load %arg19[%c0_38, %c0_39] : memref<1x32xf32, #tpu.memory_space<vmem>>, vector<1x32xf32>
    %cst_40 = arith.constant dense<0.000000e+00> : vector<8xf32>
    %74 = vector.multi_reduction <add>, %71, %cst_40 [1] : vector<8x32xf32> to vector<8xf32>
    %75 = vector.shape_cast %74 : vector<8xf32> to vector<8x1xf32>
    %cst_41 = arith.constant 3.200000e+01 : f32
    %76 = vector.broadcast %cst_41 : f32 to vector<8x1xf32>
    %77 = arith.divf %75, %76 : vector<8x1xf32>
    %78 = vector.broadcast %77 : vector<8x1xf32> to vector<8x32xf32>
    %79 = arith.subf %71, %78 : vector<8x32xf32>
    %80 = arith.mulf %79, %79 : vector<8x32xf32>
    %cst_42 = arith.constant dense<0.000000e+00> : vector<8xf32>
    %81 = vector.multi_reduction <add>, %80, %cst_42 [1] : vector<8x32xf32> to vector<8xf32>
    %82 = vector.shape_cast %81 : vector<8xf32> to vector<8x1xf32>
    %cst_43 = arith.constant 3.100000e+01 : f32
    %83 = vector.broadcast %cst_43 : f32 to vector<8x1xf32>
    %84 = arith.divf %82, %83 : vector<8x1xf32>
    %85 = math.sqrt %84 : vector<8x1xf32>
    %86 = vector.broadcast %77 : vector<8x1xf32> to vector<8x32xf32>
    %87 = arith.subf %71, %86 : vector<8x32xf32>
    %88 = vector.broadcast %72 : vector<1x32xf32> to vector<8x32xf32>
    %89 = arith.mulf %88, %87 : vector<8x32xf32>
    %cst_44 = arith.constant 9.99999997E-7 : f32
    %90 = vector.broadcast %cst_44 : f32 to vector<8x1xf32>
    %91 = arith.addf %85, %90 : vector<8x1xf32>
    %92 = vector.broadcast %91 : vector<8x1xf32> to vector<8x32xf32>
    %93 = arith.divf %89, %92 : vector<8x32xf32>
    %94 = vector.broadcast %73 : vector<1x32xf32> to vector<8x32xf32>
    %95 = arith.addf %93, %94 : vector<8x32xf32>
    %c0_45 = arith.constant 0 : index
    %c0_46 = arith.constant 0 : index
    %96 = vector.load %arg15[%c0_45, %c0_46] : memref<1x32xf32, #tpu.memory_space<vmem>>, vector<1x32xf32>
    %97 = vector.broadcast %96 : vector<1x32xf32> to vector<8x32xf32>
    %98 = arith.addf %71, %97 : vector<8x32xf32>
    %c0_47 = arith.constant 0 : index
    %c0_48 = arith.constant 0 : index
    %99 = vector.load %arg12[%c0_47, %c0_48] : memref<32x64xf32, #tpu.memory_space<vmem>>, vector<32x64xf32>
    %cst_49 = arith.constant dense<0.000000e+00> : vector<8x64xf32>
    %100 = tpu.matmul %95, %99, %cst_49 {dimension_numbers = #tpu.dot_dimension_numbers<[1], [0], [0], [1], [0, 0, 1, 1], [], []>} : vector<8x32xf32>, vector<32x64xf32>, vector<8x64xf32> -> vector<8x64xf32>
    %c0_50 = arith.constant 0 : index
    %c0_51 = arith.constant 0 : index
    %101 = vector.load %arg13[%c0_50, %c0_51] : memref<1x64xf32, #tpu.memory_space<vmem>>, vector<1x64xf32>
    %102 = vector.broadcast %101 : vector<1x64xf32> to vector<8x64xf32>
    %103 = arith.addf %100, %102 : vector<8x64xf32>
    %cst_52 = arith.constant 0.000000e+00 : f32
    %104 = vector.broadcast %cst_52 : f32 to vector<8x64xf32>
    %105 = arith.maximumf %103, %104 : vector<8x64xf32>
    %c0_53 = arith.constant 0 : index
    %c0_54 = arith.constant 0 : index
    %106 = vector.load %arg14[%c0_53, %c0_54] : memref<64x32xf32, #tpu.memory_space<vmem>>, vector<64x32xf32>
    %cst_55 = arith.constant dense<0.000000e+00> : vector<8x32xf32>
    %107 = tpu.matmul %105, %106, %cst_55 {dimension_numbers = #tpu.dot_dimension_numbers<[1], [0], [0], [1], [0, 0, 1, 1], [], []>} : vector<8x64xf32>, vector<64x32xf32>, vector<8x32xf32> -> vector<8x32xf32>
    %108 = arith.addf %98, %107 : vector<8x32xf32>
    %c0_56 = arith.constant 0 : index
    %c0_57 = arith.constant 0 : index
    %c0_58 = arith.constant 0 : index
    %109 = vector.load %arg20[%c0_56, %c0_57, %c0_58] : memref<1x8x32xf32, #tpu.memory_space<vmem>>, vector<1x8x32xf32>
    %110 = vector.shape_cast %109 : vector<1x8x32xf32> to vector<8x32xf32>
    %111 = vector.shape_cast %108 : vector<8x32xf32> to vector<1x8x32xf32>
    tpu.vector_store %arg20[%c0_56, %c0_57, %c0_58], %111 {strides = array<i32>} : memref<1x8x32xf32, #tpu.memory_space<vmem>>, vector<1x8x32xf32>,
    return
  }
  func.func @transform_0(%arg0: i32, %arg1: i32) -> (i32, i32, i32) {
    %c0_i32 = arith.constant 0 : i32
    %c0_i32_0 = arith.constant 0 : i32
    %c0_i32_1 = arith.constant 0 : i32
    return %arg0, %c0_i32, %c0_i32_0 : i32, i32, i32
  }
  func.func @transform_1(%arg0: i32, %arg1: i32) -> (i32, i32, i32) {
    %c0_i32 = arith.constant 0 : i32
    %c0_i32_0 = arith.constant 0 : i32
    %c0_i32_1 = arith.constant 0 : i32
    return %arg0, %c0_i32, %c0_i32_0 : i32, i32, i32
  }
  func.func @transform_2(%arg0: i32, %arg1: i32) -> (i32, i32) {
    %c0_i32 = arith.constant 0 : i32
    %c0_i32_0 = arith.constant 0 : i32
    %c0_i32_1 = arith.constant 0 : i32
    return %c0_i32, %c0_i32_0 : i32, i32
  }
  func.func @transform_3(%arg0: i32, %arg1: i32) -> (i32, i32) {
    %c0_i32 = arith.constant 0 : i32
    %c0_i32_0 = arith.constant 0 : i32
    %c0_i32_1 = arith.constant 0 : i32
    return %c0_i32, %c0_i32_0 : i32, i32
  }
  func.func @transform_4(%arg0: i32, %arg1: i32) -> (i32, i32) {
    %c0_i32 = arith.constant 0 : i32
    %c0_i32_0 = arith.constant 0 : i32
    %c0_i32_1 = arith.constant 0 : i32
    return %c0_i32, %c0_i32_0 : i32, i32
  }
  func.func @transform_5(%arg0: i32, %arg1: i32) -> (i32, i32) {
    %c0_i32 = arith.constant 0 : i32
    %c0_i32_0 = arith.constant 0 : i32
    %c0_i32_1 = arith.constant 0 : i32
    return %c0_i32, %c0_i32_0 : i32, i32
  }
  func.func @transform_6(%arg0: i32, %arg1: i32) -> (i32, i32) {
    %c0_i32 = arith.constant 0 : i32
    %c0_i32_0 = arith.constant 0 : i32
    %c0_i32_1 = arith.constant 0 : i32
    return %c0_i32, %c0_i32_0 : i32, i32
  }
  func.func @transform_7(%arg0: i32, %arg1: i32) -> (i32, i32) {
    %c0_i32 = arith.constant 0 : i32
    %c0_i32_0 = arith.constant 0 : i32
    %c0_i32_1 = arith.constant 0 : i32
    return %c0_i32, %c0_i32_0 : i32, i32
  }
  func.func @transform_8(%arg0: i32, %arg1: i32) -> (i32, i32) {
    %c0_i32 = arith.constant 0 : i32
    %c0_i32_0 = arith.constant 0 : i32
    %c0_i32_1 = arith.constant 0 : i32
    return %c0_i32, %c0_i32_0 : i32, i32
  }
  func.func @transform_9(%arg0: i32, %arg1: i32) -> (i32, i32) {
    %c0_i32 = arith.constant 0 : i32
    %c0_i32_0 = arith.constant 0 : i32
    %c0_i32_1 = arith.constant 0 : i32
    return %c0_i32, %c0_i32_0 : i32, i32
  }
  func.func @transform_10(%arg0: i32, %arg1: i32) -> (i32, i32) {
    %c0_i32 = arith.constant 0 : i32
    %c0_i32_0 = arith.constant 0 : i32
    %c0_i32_1 = arith.constant 0 : i32
    return %c0_i32, %c0_i32_0 : i32, i32
  }
  func.func @transform_11(%arg0: i32, %arg1: i32) -> (i32, i32) {
    %c0_i32 = arith.constant 0 : i32
    %c0_i32_0 = arith.constant 0 : i32
    %c0_i32_1 = arith.constant 0 : i32
    return %c0_i32, %c0_i32_0 : i32, i32
  }
  func.func @transform_12(%arg0: i32, %arg1: i32) -> (i32, i32) {
    %c0_i32 = arith.constant 0 : i32
    %c0_i32_0 = arith.constant 0 : i32
    %c0_i32_1 = arith.constant 0 : i32
    return %c0_i32, %c0_i32_0 : i32, i32
  }
  func.func @transform_13(%arg0: i32, %arg1: i32) -> (i32, i32) {
    %c0_i32 = arith.constant 0 : i32
    %c0_i32_0 = arith.constant 0 : i32
    %c0_i32_1 = arith.constant 0 : i32
    return %c0_i32, %c0_i32_0 : i32, i32
  }
  func.func @transform_14(%arg0: i32, %arg1: i32) -> (i32, i32) {
    %c0_i32 = arith.constant 0 : i32
    %c0_i32_0 = arith.constant 0 : i32
    %c0_i32_1 = arith.constant 0 : i32
    return %c0_i32, %c0_i32_0 : i32, i32
  }
  func.func @transform_15(%arg0: i32, %arg1: i32) -> (i32, i32) {
    %c0_i32 = arith.constant 0 : i32
    %c0_i32_0 = arith.constant 0 : i32
    %c0_i32_1 = arith.constant 0 : i32
    return %c0_i32, %c0_i32_0 : i32, i32
  }
  func.func @transform_16(%arg0: i32, %arg1: i32) -> (i32, i32) {
    %c0_i32 = arith.constant 0 : i32
    %c0_i32_0 = arith.constant 0 : i32
    %c0_i32_1 = arith.constant 0 : i32
    return %c0_i32, %c0_i32_0 : i32, i32
  }
  func.func @transform_17(%arg0: i32, %arg1: i32) -> (i32, i32) {
    %c0_i32 = arith.constant 0 : i32
    %c0_i32_0 = arith.constant 0 : i32
    %c0_i32_1 = arith.constant 0 : i32
    return %c0_i32, %c0_i32_0 : i32, i32
  }
  func.func @transform_18(%arg0: i32, %arg1: i32) -> (i32, i32, i32) {
    %c0_i32 = arith.constant 0 : i32
    %c0_i32_0 = arith.constant 0 : i32
    return %arg0, %arg1, %c0_i32 : i32, i32, i32
  }
}

</mosaic_0001>

<llo_original>
// kernel: tpu_custom_call.1
$region0: #{tpu_custom_call.1}
  #allocation0 [shape = 'u32[]', space=smem, size = 0x4, offset = 0x4, fixed_abs, tag = 'smem constant byte address 0x4 - core index']
  #allocation1 [shape = 'u32[72,128]{1,0:T(1,128)}', space=vmem, size = 0x9000, scoped, tag = 'internal scratch']
  #allocation2 [shape = 'f32[4,16,8]{2,1,0:T(8,128)}', space=vmem, size = 0x8000, scoped, tag = 'scratch operand']
  #allocation3 [shape = 'f32[4,16,8]{2,1,0:T(8,128)}', space=vmem, size = 0x8000, scoped, tag = 'scratch operand']
  %s0 = inlined_call_operand.vmem [shape: f32[2,16,32], index: 0, kind: input, shape index: {}]
  %s1 = inlined_call_operand.hbm [shape: f32[2,1,16], index: 1, kind: input, shape index: {}]
  %s2 = inlined_call_operand.vmem [shape: f32[32,32], index: 2, kind: input, shape index: {}]
  %s3 = inlined_call_operand.vmem [shape: f32[1,32], index: 3, kind: input, shape index: {}]
  %s4 = inlined_call_operand.vmem [shape: f32[32,32], index: 4, kind: input, shape index: {}]
  %s5 = inlined_call_operand.vmem [shape: f32[1,32], index: 5, kind: input, shape index: {}]
  %s6 = inlined_call_operand.hbm [shape: f32[32,32], index: 6, kind: input, shape index: {}]
  %s7 = inlined_call_operand.vmem [shape: f32[1,32], index: 7, kind: input, shape index: {}]
  %s8 = inlined_call_operand.hbm [shape: f32[32,32], index: 8, kind: input, shape index: {}]
  %s9 = inlined_call_operand.vmem [shape: f32[1,32], index: 9, kind: input, shape index: {}]
  %s10 = inlined_call_operand.hbm [shape: f32[32,64], index: 10, kind: input, shape index: {}]
  %s11 = inlined_call_operand.vmem [shape: f32[1,64], index: 11, kind: input, shape index: {}]
  %s12 = inlined_call_operand.vmem [shape: f32[64,32], index: 12, kind: input, shape index: {}]
  %s13 = inlined_call_operand.vmem [shape: f32[1,32], index: 13, kind: input, shape index: {}]
  %s14 = inlined_call_operand.vmem [shape: f32[1,32], index: 14, kind: input, shape index: {}]
  %s15 = inlined_call_operand.vmem [shape: f32[1,32], index: 15, kind: input, shape index: {}]
  %s16 = inlined_call_operand.vmem [shape: f32[1,32], index: 16, kind: input, shape index: {}]
  %s17 = inlined_call_operand.vmem [shape: f32[1,32], index: 17, kind: input, shape index: {}]
  %s18 = inlined_call_operand.hbm [shape: f32[2,16,32], index: 18, kind: output, shape index: {}]
  %s19 = sld [smem:[#allocation0]]
  $region125: #{tpu_custom_call.1} parent=0
    _
  %s21 = ssub.s32 1, %s19
  %s22 = scalar_select 0, %s21, %s19
  $region1: #{tpu_custom_call.1} parent=0
    #allocation4 [shape = 'u8[1024]{0}', space=vmem, size = 0x400, scoped, tag = 'input window, operand 1']
    #allocation5 [shape = 's32[2]{0}', space=sflag, size = 0x8, scoped, tag = 'scoped memory for tpu_custom_call.1']
    #allocation6 [shape = 's32[2]{0}', space=sflag, size = 0x8, scoped, tag = 'scoped memory for tpu_custom_call.1']
    #allocation7 [shape = 'u8[16384]{0}', space=vmem, size = 0x4000, scoped, tag = 'input window, operand 6, single buffered']
    #allocation8 [shape = 's32[1]{0}', space=sflag, size = 0x4, scoped, tag = 'scoped memory for tpu_custom_call.1']
    #allocation9 [shape = 'u8[16384]{0}', space=vmem, size = 0x4000, scoped, tag = 'input window, operand 8, single buffered']
    #allocation10 [shape = 'u8[16384]{0}', space=vmem, size = 0x4000, scoped, tag = 'input window, operand 10, single buffered']
    #allocation11 [shape = 's32[1]{0}', space=sflag, size = 0x4, scoped, tag = 'scoped memory for tpu_custom_call.1']
    #allocation12 [shape = 'u8[8192]{0}', space=vmem, size = 0x2000, scoped, tag = 'output window, operand 0']
    %23 = vsyncpa [#allocation5], 0
    %s24 = scalar_lea.sflag [#allocation5], 1
    %25 = vsyncpa %s24, 0
    %26 = vsyncpa [#allocation8], 0
    %27 = vsyncpa [#allocation11], 0
    %28 = vsyncpa [#allocation6], 0
    %s29 = scalar_lea.sflag [#allocation6], 1
    %30 = vsyncpa %s29, 0
    loop: start=0, step=1, limit=6
    $region2: #{tpu_custom_call.1} parent=1 // loop_pre_header
      _
    $region3: #{tpu_custom_call.1} parent=1 // loop_header
      %s32 = sphi 0, %s36
      %p33 = scmp.ge.s32.totalorder %s32, 6
      %s39 = sphi 0, %s51
      %s40 = sphi 0, %s47
      %s41 = sphi 0, %s39
      %s42 = sphi 0, %s40
      %s43 = sphi 0, %s41
      %s44 = sphi 0, %s42
      %s54 = sphi 0, %s56
      %s57 = sphi 0, %s54
      %s58 = sphi 0, %s57
      %s74 = sphi 0, %s58
      %s80 = sphi 0, %s82
      %s83 = sphi 0, %s80
      %s84 = sphi 0, %s83
      %s100 = sphi 0, %s84
      %s104 = sphi 0, %s104
      %s106 = sphi 0, %s104
      %s107 = sphi 0, %s106
      %s121 = sphi 0, %s107
      %s125 = sphi 0, %s125
      %s127 = sphi 0, %s125
      %s128 = sphi 0, %s127
      %s142 = sphi 0, %s128
      %s146 = sphi 0, %s146
      %s148 = sphi 0, %s146
      %s149 = sphi 0, %s148
      %s163 = sphi 0, %s149
      %s167 = sphi 0, %s167
      %s169 = sphi 0, %s167
      %s170 = sphi 0, %s169
      %s184 = sphi 0, %s170
      %s188 = sphi 0, %s188
      %s190 = sphi 0, %s188
      %s191 = sphi 0, %s190
      %s205 = sphi 0, %s191
      %s209 = sphi 0, %s209
      %s211 = sphi 0, %s209
      %s212 = sphi 0, %s211
      %s226 = sphi 0, %s212
      %s230 = sphi 0, %s230
      %s232 = sphi 0, %s230
      %s233 = sphi 0, %s232
      %s247 = sphi 0, %s233
      %s251 = sphi 0, %s251
      %s253 = sphi 0, %s251
      %s254 = sphi 0, %s253
      %s268 = sphi 0, %s254
      %s272 = sphi 0, %s272
      %s274 = sphi 0, %s272
      %s275 = sphi 0, %s274
      %s289 = sphi 0, %s275
      %s293 = sphi 0, %s293
      %s295 = sphi 0, %s293
      %s296 = sphi 0, %s295
      %s310 = sphi 0, %s296
      %s314 = sphi 0, %s314
      %s316 = sphi 0, %s314
      %s317 = sphi 0, %s316
      %s331 = sphi 0, %s317
      %s335 = sphi 0, %s335
      %s337 = sphi 0, %s335
      %s338 = sphi 0, %s337
      %s352 = sphi 0, %s338
      %s356 = sphi 0, %s356
      %s358 = sphi 0, %s356
      %s359 = sphi 0, %s358
      %s373 = sphi 0, %s359
      %s377 = sphi 0, %s377
      %s379 = sphi 0, %s377
      %s380 = sphi 0, %s379
      %s394 = sphi 0, %s380
      %s398 = sphi 0, %s398
      %s400 = sphi 0, %s398
      %s401 = sphi 0, %s400
      %s415 = sphi 0, %s401
      %s419 = sphi 0, %s419
      %s421 = sphi 0, %s419
      %s422 = sphi 0, %s421
      %s436 = sphi 0, %s422
      %s444 = sphi 0, %s446
      %s447 = sphi 0, %s444
      %s448 = sphi 0, %s447
      %s464 = sphi 0, %s448
    $region4: #{tpu_custom_call.1} parent=1 // loop_header_branch
      %35 = sbr.rel (%p33) target = $region8
    $region5: #{tpu_custom_call.1} parent=1 // loop_body
      %s37 = ssub.s32 %s32, 1
      %s38 = ssub.s32 %s32, 2
      %s45 = sadd.s32 1, %s40
      %p46 = scmp.ge.s32.totalorder %s45, 2
      %s47 = scalar_select %p46, 0, %s45
      %s48 = sadd.s32 1, %s39
      %s49 = scalar_select %p46, %s48, %s39
      %p50 = scmp.ge.s32.totalorder %s49, 2
      %s51 = scalar_select %p50, 0, %s49
      %s52 = ssub.s32 %s39, %s51
      %p53 = scmp.eq.s32.totalorder %s52, 0
      %s55 = sadd.s32 %s54, 1
      %s56 = scalar_select %p53, %s54, %s55
      %p59 = pneg %p53
      %p60 = scmp.eq.s32.totalorder %s32, 3
      %p61 = por %p59, %p60
      %p62 = scmp.ne.s32.totalorder %s54, %s57
      %p63 = scmp.eq.s32.totalorder %s32, 0
      %p64 = por %p62, %p63
      %p65 = scmp.ne.s32.totalorder %s54, %s57
      %p66 = scmp.eq.s32.totalorder %s37, 3
      %p67 = por %p65, %p66
      %p68 = scmp.ne.s32.totalorder %s57, %s58
      %p69 = scmp.eq.s32.totalorder %s37, 0
      %p70 = por %p68, %p69
      %p71 = scmp.ne.s32.totalorder %s57, %s58
      %p72 = scmp.eq.s32.totalorder %s38, 3
      %p73 = por %p71, %p72
      %p75 = scmp.ne.s32.totalorder %s58, %s74
      %p76 = scmp.eq.s32.totalorder %s38, 0
      %p77 = por %p75, %p76
      %s78 = ssub.s32 %s39, %s51
      %p79 = scmp.eq.s32.totalorder %s78, 0
      %s81 = sadd.s32 %s80, 1
      %s82 = scalar_select %p79, %s80, %s81
      %p85 = pneg %p79
      %p86 = scmp.eq.s32.totalorder %s32, 3
      %p87 = por %p85, %p86
      %p88 = scmp.ne.s32.totalorder %s80, %s83
      %p89 = scmp.eq.s32.totalorder %s32, 0
      %p90 = por %p88, %p89
      %p91 = scmp.ne.s32.totalorder %s80, %s83
      %p92 = scmp.eq.s32.totalorder %s37, 3
      %p93 = por %p91, %p92
      %p94 = scmp.ne.s32.totalorder %s83, %s84
      %p95 = scmp.eq.s32.totalorder %s37, 0
      %p96 = por %p94, %p95
      %p97 = scmp.ne.s32.totalorder %s83, %s84
      %p98 = scmp.eq.s32.totalorder %s38, 3
      %p99 = por %p97, %p98
      %p101 = scmp.ne.s32.totalorder %s84, %s100
      %p102 = scmp.eq.s32.totalorder %s38, 0
      %p103 = por %p101, %p102
      %s105 = sadd.s32 %s104, 1
      %p108 = scmp.eq.s32.totalorder %s32, 3
      %p109 = scmp.ne.s32.totalorder %s104, %s106
      %p110 = scmp.eq.s32.totalorder %s32, 0
      %p111 = por %p109, %p110
      %p112 = scmp.ne.s32.totalorder %s104, %s106
      %p113 = scmp.eq.s32.totalorder %s37, 3
      %p114 = por %p112, %p113
      %p115 = scmp.ne.s32.totalorder %s106, %s107
      %p116 = scmp.eq.s32.totalorder %s37, 0
      %p117 = por %p115, %p116
      %p118 = scmp.ne.s32.totalorder %s106, %s107
      %p119 = scmp.eq.s32.totalorder %s38, 3
      %p120 = por %p118, %p119
      %p122 = scmp.ne.s32.totalorder %s107, %s121
      %p123 = scmp.eq.s32.totalorder %s38, 0
      %p124 = por %p122, %p123
      %s126 = sadd.s32 %s125, 1
      %p129 = scmp.eq.s32.totalorder %s32, 3
      %p130 = scmp.ne.s32.totalorder %s125, %s127
      %p131 = scmp.eq.s32.totalorder %s32, 0
      %p132 = por %p130, %p131
      %p133 = scmp.ne.s32.totalorder %s125, %s127
      %p134 = scmp.eq.s32.totalorder %s37, 3
      %p135 = por %p133, %p134
      %p136 = scmp.ne.s32.totalorder %s127, %s128
      %p137 = scmp.eq.s32.totalorder %s37, 0
      %p138 = por %p136, %p137
      %p139 = scmp.ne.s32.totalorder %s127, %s128
      %p140 = scmp.eq.s32.totalorder %s38, 3
      %p141 = por %p139, %p140
      %p143 = scmp.ne.s32.totalorder %s128, %s142
      %p144 = scmp.eq.s32.totalorder %s38, 0
      %p145 = por %p143, %p144
      %s147 = sadd.s32 %s146, 1
      %p150 = scmp.eq.s32.totalorder %s32, 3
      %p151 = scmp.ne.s32.totalorder %s146, %s148
      %p152 = scmp.eq.s32.totalorder %s32, 0
      %p153 = por %p151, %p152
      %p154 = scmp.ne.s32.totalorder %s146, %s148
      %p155 = scmp.eq.s32.totalorder %s37, 3
      %p156 = por %p154, %p155
      %p157 = scmp.ne.s32.totalorder %s148, %s149
      %p158 = scmp.eq.s32.totalorder %s37, 0
      %p159 = por %p157, %p158
      %p160 = scmp.ne.s32.totalorder %s148, %s149
      %p161 = scmp.eq.s32.totalorder %s38, 3
      %p162 = por %p160, %p161
      %p164 = scmp.ne.s32.totalorder %s149, %s163
      %p165 = scmp.eq.s32.totalorder %s38, 0
      %p166 = por %p164, %p165
      %s168 = sadd.s32 %s167, 1
      %p171 = scmp.eq.s32.totalorder %s32, 3
      %p172 = scmp.ne.s32.totalorder %s167, %s169
      %p173 = scmp.eq.s32.totalorder %s32, 0
      %p174 = por %p172, %p173
      %p175 = scmp.ne.s32.totalorder %s167, %s169
      %p176 = scmp.eq.s32.totalorder %s37, 3
      %p177 = por %p175, %p176
      %p178 = scmp.ne.s32.totalorder %s169, %s170
      %p179 = scmp.eq.s32.totalorder %s37, 0
      %p180 = por %p178, %p179
      %p181 = scmp.ne.s32.totalorder %s169, %s170
      %p182 = scmp.eq.s32.totalorder %s38, 3
      %p183 = por %p181, %p182
      %p185 = scmp.ne.s32.totalorder %s170, %s184
      %p186 = scmp.eq.s32.totalorder %s38, 0
      %p187 = por %p185, %p186
      %s189 = sadd.s32 %s188, 1
      %p192 = scmp.eq.s32.totalorder %s32, 3
      %p193 = scmp.ne.s32.totalorder %s188, %s190
      %p194 = scmp.eq.s32.totalorder %s32, 0
      %p195 = por %p193, %p194
      %p196 = scmp.ne.s32.totalorder %s188, %s190
      %p197 = scmp.eq.s32.totalorder %s37, 3
      %p198 = por %p196, %p197
      %p199 = scmp.ne.s32.totalorder %s190, %s191
      %p200 = scmp.eq.s32.totalorder %s37, 0
      %p201 = por %p199, %p200
      %p202 = scmp.ne.s32.totalorder %s190, %s191
      %p203 = scmp.eq.s32.totalorder %s38, 3
      %p204 = por %p202, %p203
      %p206 = scmp.ne.s32.totalorder %s191, %s205
      %p207 = scmp.eq.s32.totalorder %s38, 0
      %p208 = por %p206, %p207
      %s210 = sadd.s32 %s209, 1
      %p213 = scmp.eq.s32.totalorder %s32, 3
      %p214 = scmp.ne.s32.totalorder %s209, %s211
      %p215 = scmp.eq.s32.totalorder %s32, 0
      %p216 = por %p214, %p215
      %p217 = scmp.ne.s32.totalorder %s209, %s211
      %p218 = scmp.eq.s32.totalorder %s37, 3
      %p219 = por %p217, %p218
      %p220 = scmp.ne.s32.totalorder %s211, %s212
      %p221 = scmp.eq.s32.totalorder %s37, 0
      %p222 = por %p220, %p221
      %p223 = scmp.ne.s32.totalorder %s211, %s212
      %p224 = scmp.eq.s32.totalorder %s38, 3
      %p225 = por %p223, %p224
      %p227 = scmp.ne.s32.totalorder %s212, %s226
      %p228 = scmp.eq.s32.totalorder %s38, 0
      %p229 = por %p227, %p228
      %s231 = sadd.s32 %s230, 1
      %p234 = scmp.eq.s32.totalorder %s32, 3
      %p235 = scmp.ne.s32.totalorder %s230, %s232
      %p236 = scmp.eq.s32.totalorder %s32, 0
      %p237 = por %p235, %p236
      %p238 = scmp.ne.s32.totalorder %s230, %s232
      %p239 = scmp.eq.s32.totalorder %s37, 3
      %p240 = por %p238, %p239
      %p241 = scmp.ne.s32.totalorder %s232, %s233
      %p242 = scmp.eq.s32.totalorder %s37, 0
      %p243 = por %p241, %p242
      %p244 = scmp.ne.s32.totalorder %s232, %s233
      %p245 = scmp.eq.s32.totalorder %s38, 3
      %p246 = por %p244, %p245
      %p248 = scmp.ne.s32.totalorder %s233, %s247
      %p249 = scmp.eq.s32.totalorder %s38, 0
      %p250 = por %p248, %p249
      %s252 = sadd.s32 %s251, 1
      %p255 = scmp.eq.s32.totalorder %s32, 3
      %p256 = scmp.ne.s32.totalorder %s251, %s253
      %p257 = scmp.eq.s32.totalorder %s32, 0
      %p258 = por %p256, %p257
      %p259 = scmp.ne.s32.totalorder %s251, %s253
      %p260 = scmp.eq.s32.totalorder %s37, 3
      %p261 = por %p259, %p260
      %p262 = scmp.ne.s32.totalorder %s253, %s254
      %p263 = scmp.eq.s32.totalorder %s37, 0
      %p264 = por %p262, %p263
      %p265 = scmp.ne.s32.totalorder %s253, %s254
      %p266 = scmp.eq.s32.totalorder %s38, 3
      %p267 = por %p265, %p266
      %p269 = scmp.ne.s32.totalorder %s254, %s268
      %p270 = scmp.eq.s32.totalorder %s38, 0
      %p271 = por %p269, %p270
      %s273 = sadd.s32 %s272, 1
      %p276 = scmp.eq.s32.totalorder %s32, 3
      %p277 = scmp.ne.s32.totalorder %s272, %s274
      %p278 = scmp.eq.s32.totalorder %s32, 0
      %p279 = por %p277, %p278
      %p280 = scmp.ne.s32.totalorder %s272, %s274
      %p281 = scmp.eq.s32.totalorder %s37, 3
      %p282 = por %p280, %p281
      %p283 = scmp.ne.s32.totalorder %s274, %s275
      %p284 = scmp.eq.s32.totalorder %s37, 0
      %p285 = por %p283, %p284
      %p286 = scmp.ne.s32.totalorder %s274, %s275
      %p287 = scmp.eq.s32.totalorder %s38, 3
      %p288 = por %p286, %p287
      %p290 = scmp.ne.s32.totalorder %s275, %s289
      %p291 = scmp.eq.s32.totalorder %s38, 0
      %p292 = por %p290, %p291
      %s294 = sadd.s32 %s293, 1
      %p297 = scmp.eq.s32.totalorder %s32, 3
      %p298 = scmp.ne.s32.totalorder %s293, %s295
      %p299 = scmp.eq.s32.totalorder %s32, 0
      %p300 = por %p298, %p299
      %p301 = scmp.ne.s32.totalorder %s293, %s295
      %p302 = scmp.eq.s32.totalorder %s37, 3
      %p303 = por %p301, %p302
      %p304 = scmp.ne.s32.totalorder %s295, %s296
      %p305 = scmp.eq.s32.totalorder %s37, 0
      %p306 = por %p304, %p305
      %p307 = scmp.ne.s32.totalorder %s295, %s296
      %p308 = scmp.eq.s32.totalorder %s38, 3
      %p309 = por %p307, %p308
      %p311 = scmp.ne.s32.totalorder %s296, %s310
      %p312 = scmp.eq.s32.totalorder %s38, 0
      %p313 = por %p311, %p312
      %s315 = sadd.s32 %s314, 1
      %p318 = scmp.eq.s32.totalorder %s32, 3
      %p319 = scmp.ne.s32.totalorder %s314, %s316
      %p320 = scmp.eq.s32.totalorder %s32, 0
      %p321 = por %p319, %p320
      %p322 = scmp.ne.s32.totalorder %s314, %s316
      %p323 = scmp.eq.s32.totalorder %s37, 3
      %p324 = por %p322, %p323
      %p325 = scmp.ne.s32.totalorder %s316, %s317
      %p326 = scmp.eq.s32.totalorder %s37, 0
      %p327 = por %p325, %p326
      %p328 = scmp.ne.s32.totalorder %s316, %s317
      %p329 = scmp.eq.s32.totalorder %s38, 3
      %p330 = por %p328, %p329
      %p332 = scmp.ne.s32.totalorder %s317, %s331
      %p333 = scmp.eq.s32.totalorder %s38, 0
      %p334 = por %p332, %p333
      %s336 = sadd.s32 %s335, 1
      %p339 = scmp.eq.s32.totalorder %s32, 3
      %p340 = scmp.ne.s32.totalorder %s335, %s337
      %p341 = scmp.eq.s32.totalorder %s32, 0
      %p342 = por %p340, %p341
      %p343 = scmp.ne.s32.totalorder %s335, %s337
      %p344 = scmp.eq.s32.totalorder %s37, 3
      %p345 = por %p343, %p344
      %p346 = scmp.ne.s32.totalorder %s337, %s338
      %p347 = scmp.eq.s32.totalorder %s37, 0
      %p348 = por %p346, %p347
      %p349 = scmp.ne.s32.totalorder %s337, %s338
      %p350 = scmp.eq.s32.totalorder %s38, 3
      %p351 = por %p349, %p350
      %p353 = scmp.ne.s32.totalorder %s338, %s352
      %p354 = scmp.eq.s32.totalorder %s38, 0
      %p355 = por %p353, %p354
      %s357 = sadd.s32 %s356, 1
      %p360 = scmp.eq.s32.totalorder %s32, 3
      %p361 = scmp.ne.s32.totalorder %s356, %s358
      %p362 = scmp.eq.s32.totalorder %s32, 0
      %p363 = por %p361, %p362
      %p364 = scmp.ne.s32.totalorder %s356, %s358
      %p365 = scmp.eq.s32.totalorder %s37, 3
      %p366 = por %p364, %p365
      %p367 = scmp.ne.s32.totalorder %s358, %s359
      %p368 = scmp.eq.s32.totalorder %s37, 0
      %p369 = por %p367, %p368
      %p370 = scmp.ne.s32.totalorder %s358, %s359
      %p371 = scmp.eq.s32.totalorder %s38, 3
      %p372 = por %p370, %p371
      %p374 = scmp.ne.s32.totalorder %s359, %s373
      %p375 = scmp.eq.s32.totalorder %s38, 0
      %p376 = por %p374, %p375
      %s378 = sadd.s32 %s377, 1
      %p381 = scmp.eq.s32.totalorder %s32, 3
      %p382 = scmp.ne.s32.totalorder %s377, %s379
      %p383 = scmp.eq.s32.totalorder %s32, 0
      %p384 = por %p382, %p383
      %p385 = scmp.ne.s32.totalorder %s377, %s379
      %p386 = scmp.eq.s32.totalorder %s37, 3
      %p387 = por %p385, %p386
      %p388 = scmp.ne.s32.totalorder %s379, %s380
      %p389 = scmp.eq.s32.totalorder %s37, 0
      %p390 = por %p388, %p389
      %p391 = scmp.ne.s32.totalorder %s379, %s380
      %p392 = scmp.eq.s32.totalorder %s38, 3
      %p393 = por %p391, %p392
      %p395 = scmp.ne.s32.totalorder %s380, %s394
      %p396 = scmp.eq.s32.totalorder %s38, 0
      %p397 = por %p395, %p396
      %s399 = sadd.s32 %s398, 1
      %p402 = scmp.eq.s32.totalorder %s32, 3
      %p403 = scmp.ne.s32.totalorder %s398, %s400
      %p404 = scmp.eq.s32.totalorder %s32, 0
      %p405 = por %p403, %p404
      %p406 = scmp.ne.s32.totalorder %s398, %s400
      %p407 = scmp.eq.s32.totalorder %s37, 3
      %p408 = por %p406, %p407
      %p409 = scmp.ne.s32.totalorder %s400, %s401
      %p410 = scmp.eq.s32.totalorder %s37, 0
      %p411 = por %p409, %p410
      %p412 = scmp.ne.s32.totalorder %s400, %s401
      %p413 = scmp.eq.s32.totalorder %s38, 3
      %p414 = por %p412, %p413
      %p416 = scmp.ne.s32.totalorder %s401, %s415
      %p417 = scmp.eq.s32.totalorder %s38, 0
      %p418 = por %p416, %p417
      %s420 = sadd.s32 %s419, 1
      %p423 = scmp.eq.s32.totalorder %s32, 3
      %p424 = scmp.ne.s32.totalorder %s419, %s421
      %p425 = scmp.eq.s32.totalorder %s32, 0
      %p426 = por %p424, %p425
      %p427 = scmp.ne.s32.totalorder %s419, %s421
      %p428 = scmp.eq.s32.totalorder %s37, 3
      %p429 = por %p427, %p428
      %p430 = scmp.ne.s32.totalorder %s421, %s422
      %p431 = scmp.eq.s32.totalorder %s37, 0
      %p432 = por %p430, %p431
      %p433 = scmp.ne.s32.totalorder %s421, %s422
      %p434 = scmp.eq.s32.totalorder %s38, 3
      %p435 = por %p433, %p434
      %p437 = scmp.ne.s32.totalorder %s422, %s436
      %p438 = scmp.eq.s32.totalorder %s38, 0
      %p439 = por %p437, %p438
      %s440 = ssub.s32 %s39, %s51
      %s441 = ssub.s32 %s40, %s47
      %s442 = sor.u32 %s440, %s441
      %p443 = scmp.eq.s32.totalorder %s442, 0
      %s445 = sadd.s32 %s444, 1
      %s446 = scalar_select %p443, %s444, %s445
      %p449 = pneg %p443
      %p450 = scmp.eq.s32.totalorder %s32, 3
      %p451 = por %p449, %p450
      %p452 = scmp.ne.s32.totalorder %s444, %s447
      %p453 = scmp.eq.s32.totalorder %s32, 0
      %p454 = por %p452, %p453
      %p455 = scmp.ne.s32.totalorder %s444, %s447
      %p456 = scmp.eq.s32.totalorder %s37, 3
      %p457 = por %p455, %p456
      %p458 = scmp.ne.s32.totalorder %s447, %s448
      %p459 = scmp.eq.s32.totalorder %s37, 0
      %p460 = por %p458, %p459
      %p461 = scmp.ne.s32.totalorder %s447, %s448
      %p462 = scmp.eq.s32.totalorder %s38, 3
      %p463 = por %p461, %p462
      %p465 = scmp.ne.s32.totalorder %s448, %s464
      %p466 = scmp.eq.s32.totalorder %s38, 0
      %p467 = por %p465, %p466
      %p468 = scmp.le.s32.totalorder 1, %s32
      %p469 = scmp.lt.s32.totalorder %s32, 5
      %p470 = pnand %p468, %p469
      %p471 = pneg %p470
      // Predicated region
      $region9: #{tpu_custom_call.1} parent=5 // pred_check
        _
      $region10: #{tpu_custom_call.1} parent=5 // pred_check_branch
        %473 = sbr.rel (%p470) target = $region12
      $region11: #{tpu_custom_call.1} parent=5 // pred_region
        %s474 = ssub.s32 %s32, 1
        // Predicated region
        $region13: #{tpu_custom_call.1} parent=11 // pred_check
          %p475 = pneg %p117
        $region14: #{tpu_custom_call.1} parent=11 // pred_check_branch
          %477 = sbr.rel (%p475) target = $region16
        $region15: #{tpu_custom_call.1} parent=11 // pred_region
          _
        $region16: #{tpu_custom_call.1} parent=11 // pred_fallthru
          _
        // Predicated region
        $region17: #{tpu_custom_call.1} parent=11 // pred_check
          %p478 = pneg %p138
        $region18: #{tpu_custom_call.1} parent=11 // pred_check_branch
          %480 = sbr.rel (%p478) target = $region20
        $region19: #{tpu_custom_call.1} parent=11 // pred_region
          _
        $region20: #{tpu_custom_call.1} parent=11 // pred_fallthru
          _
        // Predicated region
        $region21: #{tpu_custom_call.1} parent=11 // pred_check
          %p481 = pneg %p159
        $region22: #{tpu_custom_call.1} parent=11 // pred_check_branch
          %483 = sbr.rel (%p481) target = $region24
        $region23: #{tpu_custom_call.1} parent=11 // pred_region
          _
        $region24: #{tpu_custom_call.1} parent=11 // pred_fallthru
          _
        // Predicated region
        $region25: #{tpu_custom_call.1} parent=11 // pred_check
          %p484 = pneg %p180
        $region26: #{tpu_custom_call.1} parent=11 // pred_check_branch
          %486 = sbr.rel (%p484) target = $region28
        $region27: #{tpu_custom_call.1} parent=11 // pred_region
          _
        $region28: #{tpu_custom_call.1} parent=11 // pred_fallthru
          _
        // Predicated region
        $region29: #{tpu_custom_call.1} parent=11 // pred_check
          %p487 = pneg %p201
        $region30: #{tpu_custom_call.1} parent=11 // pred_check_branch
          %489 = sbr.rel (%p487) target = $region32
        $region31: #{tpu_custom_call.1} parent=11 // pred_region
          %491 = vsyncadd [#allocation8], 0
          %s492 = sshll.u32 %s6, 4
          %s493 = int_to_ptr.hbm [resolvable:$true] %s492
          %s494 = sshll.u32 [#allocation7], 4
          %s495 = int_to_ptr.vmem [resolvable:$true] %s494
          %500 = dma.hbm_to_vmem [thread:$0]  %s493, 512, %s495, [#allocation8], 128, 128, 8
        $region32: #{tpu_custom_call.1} parent=11 // pred_fallthru
          _
        // Predicated region
        $region33: #{tpu_custom_call.1} parent=11 // pred_check
          %p501 = pneg %p222
        $region34: #{tpu_custom_call.1} parent=11 // pred_check_branch
          %503 = sbr.rel (%p501) target = $region36
        $region35: #{tpu_custom_call.1} parent=11 // pred_region
          _
        $region36: #{tpu_custom_call.1} parent=11 // pred_fallthru
          _
        // Predicated region
        $region37: #{tpu_custom_call.1} parent=11 // pred_check
          %p504 = pneg %p243
        $region38: #{tpu_custom_call.1} parent=11 // pred_check_branch
          %506 = sbr.rel (%p504) target = $region40
        $region39: #{tpu_custom_call.1} parent=11 // pred_region
          %508 = vsyncadd [#allocation8], 0
          %s509 = sshll.u32 %s8, 4
          %s510 = int_to_ptr.hbm [resolvable:$true] %s509
          %s511 = sshll.u32 [#allocation9], 4
          %s512 = int_to_ptr.vmem [resolvable:$true] %s511
          %517 = dma.hbm_to_vmem [thread:$0]  %s510, 512, %s512, [#allocation8], 128, 128, 8
        $region40: #{tpu_custom_call.1} parent=11 // pred_fallthru
          _
        // Predicated region
        $region41: #{tpu_custom_call.1} parent=11 // pred_check
          %p518 = pneg %p264
        $region42: #{tpu_custom_call.1} parent=11 // pred_check_branch
          %520 = sbr.rel (%p518) target = $region44
        $region43: #{tpu_custom_call.1} parent=11 // pred_region
          _
        $region44: #{tpu_custom_call.1} parent=11 // pred_fallthru
          _
        // Predicated region
        $region45: #{tpu_custom_call.1} parent=11 // pred_check
          %p521 = pneg %p285
        $region46: #{tpu_custom_call.1} parent=11 // pred_check_branch
          %523 = sbr.rel (%p521) target = $region48
        $region47: #{tpu_custom_call.1} parent=11 // pred_region
          %525 = vsyncadd [#allocation11], 0
          %s526 = sshll.u32 %s10, 4
          %s527 = int_to_ptr.hbm [resolvable:$true] %s526
          %s528 = sshll.u32 [#allocation10], 4
          %s529 = int_to_ptr.vmem [resolvable:$true] %s528
          %534 = dma.hbm_to_vmem [thread:$0]  %s527, 512, %s529, [#allocation11], 128, 128, 8
        $region48: #{tpu_custom_call.1} parent=11 // pred_fallthru
          _
        // Predicated region
        $region49: #{tpu_custom_call.1} parent=11 // pred_check
          %p535 = pneg %p306
        $region50: #{tpu_custom_call.1} parent=11 // pred_check_branch
          %537 = sbr.rel (%p535) target = $region52
        $region51: #{tpu_custom_call.1} parent=11 // pred_region
          _
        $region52: #{tpu_custom_call.1} parent=11 // pred_fallthru
          _
        // Predicated region
        $region53: #{tpu_custom_call.1} parent=11 // pred_check
          %p538 = pneg %p327
        $region54: #{tpu_custom_call.1} parent=11 // pred_check_branch
          %540 = sbr.rel (%p538) target = $region56
        $region55: #{tpu_custom_call.1} parent=11 // pred_region
          _
        $region56: #{tpu_custom_call.1} parent=11 // pred_fallthru
          _
        // Predicated region
        $region57: #{tpu_custom_call.1} parent=11 // pred_check
          %p541 = pneg %p348
        $region58: #{tpu_custom_call.1} parent=11 // pred_check_branch
          %543 = sbr.rel (%p541) target = $region60
        $region59: #{tpu_custom_call.1} parent=11 // pred_region
          _
        $region60: #{tpu_custom_call.1} parent=11 // pred_fallthru
          _
        // Predicated region
        $region61: #{tpu_custom_call.1} parent=11 // pred_check
          %p544 = pneg %p369
        $region62: #{tpu_custom_call.1} parent=11 // pred_check_branch
          %546 = sbr.rel (%p544) target = $region64
        $region63: #{tpu_custom_call.1} parent=11 // pred_region
          _
        $region64: #{tpu_custom_call.1} parent=11 // pred_fallthru
          _
        // Predicated region
        $region65: #{tpu_custom_call.1} parent=11 // pred_check
          %p547 = pneg %p390
        $region66: #{tpu_custom_call.1} parent=11 // pred_check_branch
          %549 = sbr.rel (%p547) target = $region68
        $region67: #{tpu_custom_call.1} parent=11 // pred_region
          _
        $region68: #{tpu_custom_call.1} parent=11 // pred_fallthru
          _
        // Predicated region
        $region69: #{tpu_custom_call.1} parent=11 // pred_check
          %p550 = pneg %p411
        $region70: #{tpu_custom_call.1} parent=11 // pred_check_branch
          %552 = sbr.rel (%p550) target = $region72
        $region71: #{tpu_custom_call.1} parent=11 // pred_region
          _
        $region72: #{tpu_custom_call.1} parent=11 // pred_fallthru
          _
        // Predicated region
        $region73: #{tpu_custom_call.1} parent=11 // pred_check
          %p553 = pneg %p432
        $region74: #{tpu_custom_call.1} parent=11 // pred_check_branch
          %555 = sbr.rel (%p553) target = $region76
        $region75: #{tpu_custom_call.1} parent=11 // pred_region
          _
        $region76: #{tpu_custom_call.1} parent=11 // pred_fallthru
          _
      $region12: #{tpu_custom_call.1} parent=5 // pred_fallthru
        _
      %p556 = scmp.lt.s32.totalorder %s32, 4
      // Predicated region
      $region77: #{tpu_custom_call.1} parent=5 // pred_check
        %p557 = pneg %p556
      $region78: #{tpu_custom_call.1} parent=5 // pred_check_branch
        %559 = sbr.rel (%p557) target = $region80
      $region79: #{tpu_custom_call.1} parent=5 // pred_region
        // Predicated region
        $region81: #{tpu_custom_call.1} parent=79 // pred_check
          %p560 = pneg %p64
        $region82: #{tpu_custom_call.1} parent=79 // pred_check_branch
          %562 = sbr.rel (%p560) target = $region84
        $region83: #{tpu_custom_call.1} parent=79 // pred_region
          %p563 = scmp.lt.s32.totalorder %s39, 1
          %s564 = scalar_select %p563, %s39, 1
          %s565 = smul.addr %s564, 2
          %s566 = smul.addr %s565, 8
          %s567 = scalar_lea.vmem %s0, %s566
        $region84: #{tpu_custom_call.1} parent=79 // pred_fallthru
          _
        // Predicated region
        $region85: #{tpu_custom_call.1} parent=79 // pred_check
          %p568 = pneg %p90
        $region86: #{tpu_custom_call.1} parent=79 // pred_check_branch
          %570 = sbr.rel (%p568) target = $region88
        $region87: #{tpu_custom_call.1} parent=79 // pred_region
          %s571 = sand.u32 %s80, 1
          %s572 = scalar_lea.sflag [#allocation5], %s571
          %s573 = sand.u32 %s80, 1
          %s574 = scalar_lea.vmem [#allocation4], %s573
          %576 = vsyncadd %s572, 0
          %s577 = scalar_lea.hbm %s1, %s39
          %s579 = sshll.u32 %s577, 4
          %s580 = int_to_ptr.hbm [resolvable:$true] %s579
          %s581 = sshll.u32 %s574, 4
          %s582 = int_to_ptr.vmem [resolvable:$true] %s581
          %584 = dma.hbm_to_vmem [thread:$0]  %s580, 16, %s582, %s572
        $region88: #{tpu_custom_call.1} parent=79 // pred_fallthru
          _
      $region80: #{tpu_custom_call.1} parent=5 // pred_fallthru
        _
      %p585 = scmp.le.s32.totalorder 1, %s32
      %p586 = scmp.lt.s32.totalorder %s32, 5
      %p587 = pnand %p585, %p586
      %p588 = pneg %p587
      // Predicated region
      $region89: #{tpu_custom_call.1} parent=5 // pred_check
        _
      $region90: #{tpu_custom_call.1} parent=5 // pred_check_branch
        %590 = sbr.rel (%p587) target = $region92
      $region91: #{tpu_custom_call.1} parent=5 // pred_region
        %s591 = ssub.s32 %s32, 1
        %s592 = sand.u32 %s83, 1
        %s593 = scalar_lea.sflag [#allocation5], %s592
        %s594 = sand.u32 %s83, 1
        %s595 = scalar_lea.vmem [#allocation4], %s594
        // Predicated region
        $region93: #{tpu_custom_call.1} parent=91 // pred_check
          %p596 = pneg %p96
        $region94: #{tpu_custom_call.1} parent=91 // pred_check_branch
          %598 = sbr.rel (%p596) target = $region96
        $region95: #{tpu_custom_call.1} parent=91 // pred_region
          %600 = dma.done %s593, 16
        $region96: #{tpu_custom_call.1} parent=91 // pred_fallthru
          _
        // Predicated region
        $region97: #{tpu_custom_call.1} parent=91 // pred_check
          %p601 = pneg %p201
        $region98: #{tpu_custom_call.1} parent=91 // pred_check_branch
          %603 = sbr.rel (%p601) target = $region100
        $region99: #{tpu_custom_call.1} parent=91 // pred_region
          %605 = dma.done [#allocation8], 512
        $region100: #{tpu_custom_call.1} parent=91 // pred_fallthru
          _
        // Predicated region
        $region101: #{tpu_custom_call.1} parent=91 // pred_check
          %p606 = pneg %p243
        $region102: #{tpu_custom_call.1} parent=91 // pred_check_branch
          %608 = sbr.rel (%p606) target = $region104
        $region103: #{tpu_custom_call.1} parent=91 // pred_region
          %610 = dma.done [#allocation8], 512
        $region104: #{tpu_custom_call.1} parent=91 // pred_fallthru
          _
        // Predicated region
        $region105: #{tpu_custom_call.1} parent=91 // pred_check
          %p611 = pneg %p285
        $region106: #{tpu_custom_call.1} parent=91 // pred_check_branch
          %613 = sbr.rel (%p611) target = $region108
        $region107: #{tpu_custom_call.1} parent=91 // pred_region
          %615 = dma.done [#allocation11], 512
        $region108: #{tpu_custom_call.1} parent=91 // pred_fallthru
          _
        %p616 = scmp.lt.s32.totalorder %s41, 1
        %s617 = scalar_select %p616, %s41, 1
        %s618 = smul.addr %s617, 2
        %s619 = smul.addr %s618, 8
        %s620 = scalar_lea.vmem %s0, %s619
        %p621 = pneg %p70
        %p622 = pneg %p67
        %s623 = sand.u32 %s83, 1
        %s624 = scalar_lea.sflag [#allocation5], %s623
        %s625 = sand.u32 %s83, 1
        %s626 = scalar_lea.vmem [#allocation4], %s625
        %p627 = pneg %p96
        %p628 = pneg %p93
        %p629 = pneg %p117
        %p630 = pneg %p114
        %p631 = pneg %p138
        %p632 = pneg %p135
        %p633 = pneg %p159
        %p634 = pneg %p156
        %p635 = pneg %p180
        %p636 = pneg %p177
        %p637 = pneg %p201
        %p638 = pneg %p198
        %p639 = pneg %p222
        %p640 = pneg %p219
        %p641 = pneg %p243
        %p642 = pneg %p240
        %p643 = pneg %p264
        %p644 = pneg %p261
        %p645 = pneg %p285
        %p646 = pneg %p282
        %p647 = pneg %p306
        %p648 = pneg %p303
        %p649 = pneg %p327
        %p650 = pneg %p324
        %p651 = pneg %p348
        %p652 = pneg %p345
        %p653 = pneg %p369
        %p654 = pneg %p366
        %p655 = pneg %p390
        %p656 = pneg %p387
        %p657 = pneg %p411
        %p658 = pneg %p408
        %p659 = pneg %p432
        %p660 = pneg %p429
        %p661 = pneg %p460
        %p662 = pneg %p457
        %s663 = sand.u32 %s447, 1
        %s664 = scalar_lea.sflag [#allocation6], %s663
        %s665 = sand.u32 %s447, 1
        %s666 = smul.addr %s665, 8
        %s667 = scalar_lea.vmem [#allocation12], %s666
        %p668 = scmp.lt.s32.totalorder %s41, 1
        %s669 = scalar_select %p668, %s41, 1
        %s670 = smul.addr %s669, 2
        %s671 = smul.addr %s670, 8
        %s672 = scalar_lea.vmem %s0, %s671
        %v673 = vld [vmem:[%s595] sm:$0x1]
        %v674 = vsub.f32 %v673, 1.0
        %v675 = vmul.f32 %v674, 1e+09
        %p676 = scmp.eq.s32.totalorder %s42, 0
        // Predicated region
        $region109: #{tpu_custom_call.1} parent=91 // pred_check
          %p677 = pneg %p676
        $region110: #{tpu_custom_call.1} parent=91 // pred_check_branch
          %679 = sbr.rel (%p677) target = $region112
        $region111: #{tpu_custom_call.1} parent=91 // pred_region
          %v680 = vld [vmem:[%s672] sm:$0xff]
          %v681 = vld [vmem:[%s672 + $0x8] sm:$0xff]
          %v682 = vld [vmem:[%s14] sm:$0x1]
          %v683 = vld [vmem:[%s15] sm:$0x1]
          %vm684 = vcmask 261120
          %v685 = vsel %vm684, %v680, 0.0
          %686 = vadd.xlane.f32.xlu0 %v685
          %v687 = vpop.xlane.xlu0 %686
          %v688 = vsel %vm684, %v681, 0.0
          %689 = vadd.xlane.f32.xlu0 %v688
          %v690 = vpop.xlane.xlu0 %689
          %v691 = vrcp.pop 32.0
          %v692 = vmul.f32 32.0, %v691
          %v693 = vsub.f32 1.0, %v692
          %v694 = vmul.f32 %v691, %v693
          %v695 = vadd.f32 %v691, %v694
          %vm696 = vweird.f32 %v691
          %v697 = vsel %vm696, %v691, %v695
          %v698 = vmul.f32 %v687, %v697
          %v699 = vmul.f32 %v690, %v697
          %v700 = vsub.f32 %v680, %v698
          %v701 = vsub.f32 %v681, %v699
          %v702 = vmul.f32 %v700, %v700
          %v703 = vmul.f32 %v701, %v701
          %v704 = vsel %vm684, %v702, 0.0
          %705 = vadd.xlane.f32.xlu0 %v704
          %v706 = vpop.xlane.xlu0 %705
          %v707 = vsel %vm684, %v703, 0.0
          %708 = vadd.xlane.f32.xlu0 %v707
          %v709 = vpop.xlane.xlu0 %708
          %v710 = vrcp.pop 31.0
          %v711 = vmul.f32 31.0, %v710
          %v712 = vsub.f32 1.0, %v711
          %v713 = vmul.f32 %v710, %v712
          %v714 = vadd.f32 %v710, %v713
          %vm715 = vweird.f32 %v710
          %v716 = vsel %vm715, %v710, %v714
          %v717 = vmul.f32 %v706, %v716
          %v718 = vmul.f32 %v709, %v716
          %v719 = vrsqrt.pop %v717
          %v720 = vmul.f32 %v719, %v717
          %v721 = vmul.f32 %v720, %v719
          %v722 = vmul.f32 0.5, %v721
          %v723 = vsub.f32 1.5, %v722
          %v724 = vmul.f32 %v719, %v723
          %v725 = vmul.f32 %v717, %v724
          %vm726 = vcmp.eq.f32.partialorder %v717, inf
          %v727 = vsel %vm726, %v717, %v725
          %vm728 = vcmp.eq.f32.partialorder %v717, 0.0
          %v729 = vand.u32 %v717, 2147483648
          %v730 = vsel %vm728, %v729, %v727
          %v731 = vrsqrt.pop %v718
          %v732 = vmul.f32 %v731, %v718
          %v733 = vmul.f32 %v732, %v731
          %v734 = vmul.f32 0.5, %v733
          %v735 = vsub.f32 1.5, %v734
          %v736 = vmul.f32 %v731, %v735
          %v737 = vmul.f32 %v718, %v736
          %vm738 = vcmp.eq.f32.partialorder %v718, inf
          %v739 = vsel %vm738, %v718, %v737
          %vm740 = vcmp.eq.f32.partialorder %v718, 0.0
          %v741 = vand.u32 %v718, 2147483648
          %v742 = vsel %vm740, %v741, %v739
          %v744 = vperm.slane %v682, 0
          %v746 = vmul.f32 %v744, %v700
          %v747 = vmul.f32 %v744, %v701
          %v748 = vadd.f32 %v730, 1e-06
          %v749 = vadd.f32 %v742, 1e-06
          %v750 = vrcp.pop %v748
          %v751 = vmul.f32 %v748, %v750
          %v752 = vsub.f32 1.0, %v751
          %v753 = vmul.f32 %v750, %v752
          %v754 = vadd.f32 %v750, %v753
          %vm755 = vweird.f32 %v748
          %vm756 = vweird.f32 %v750
          %vm757 = vmor %vm755, %vm756
          %v758 = vsel %vm757, %v750, %v754
          %v759 = vand.u32 2147483647, %v748
          %vm760 = vcmp.eq.f32.partialorder %v759, 8.507059e+37
          %v761 = vand.u32 %v748, 2147483648
          %v762 = vor.u32 1.1754944e-38, %v761
          %v763 = vsel %vm760, %v762, %v758
          %v764 = vmul.f32 %v746, %v763
          %v765 = vrcp.pop %v749
          %v766 = vmul.f32 %v749, %v765
          %v767 = vsub.f32 1.0, %v766
          %v768 = vmul.f32 %v765, %v767
          %v769 = vadd.f32 %v765, %v768
          %vm770 = vweird.f32 %v749
          %vm771 = vweird.f32 %v765
          %vm772 = vmor %vm770, %vm771
          %v773 = vsel %vm772, %v765, %v769
          %v774 = vand.u32 2147483647, %v749
          %vm775 = vcmp.eq.f32.partialorder %v774, 8.507059e+37
          %v776 = vand.u32 %v749, 2147483648
          %v777 = vor.u32 1.1754944e-38, %v776
          %v778 = vsel %vm775, %v777, %v773
          %v779 = vmul.f32 %v747, %v778
          %v781 = vperm.slane %v683, 0
          %v783 = vadd.f32 %v764, %v781
          %v784 = vadd.f32 %v779, %v781
          %v785 = vld [vmem:[%s4] sm:$0xff]
          %v786 = vld [vmem:[%s4 + $0x8] sm:$0xff]
          %v787 = vld [vmem:[%s4 + $0x10] sm:$0xff]
          %v788 = vld [vmem:[%s4 + $0x18] sm:$0xff]
          %v789 = vld [vmem:[%s5] sm:$0x1]
          %v791 = vperm.slane %v789, 0
          %v794 = vsel %vm684, %v783, 0
          %v797 = vsel %vm684, %v784, 0
          %799 = vmatpush.msra.mxu0 0.0
          %800 = vmatpush.msra.mxu0 0.0
          %801 = vmatpush.msra.mxu0 0.0
          %802 = vmatpush.msra.mxu0 0.0
          %803 = vmatpush.msra.mxu0 0.0
          %804 = vmatpush.msra.mxu0 0.0
          %805 = vmatpush.msra.mxu0 0.0
          %806 = vmatpush.msra.mxu0 0.0
          %807 = vmatpush.msra.mxu0 0.0
          %808 = vmatpush.msra.mxu0 0.0
          %809 = vmatpush.msra.mxu0 0.0
          %810 = vmatpush.msra.mxu0 0.0
          %811 = vmatpush.msra.mxu0 %v788
          %812 = vmatpush.msra.mxu0 %v787
          %813 = vmatpush.msra.mxu0 %v786
          %814 = vmatpush.msra.mxu0 %v785
          %815 = vmatmul.f32.gmra.mxu0 %v794
          %v816 = vpop.f32.mrf.mxu0
          %v817 = vadd.f32 %v791, %v816
          %818 = vmatmul.f32.gmra.mxu0 %v797
          %v819 = vpop.f32.mrf.mxu0
          %v820 = vadd.f32 %v791, %v819
          %821 = vdwg.mxu0
          %v822 = vld [vmem:[#allocation7] sm:$0xff]
          %v823 = vld [vmem:[#allocation7 + $0x8] sm:$0xff]
          %v824 = vld [vmem:[#allocation7 + $0x10] sm:$0xff]
          %v825 = vld [vmem:[#allocation7 + $0x18] sm:$0xff]
          %v826 = vld [vmem:[%s7] sm:$0x1]
          %v828 = vperm.slane %v826, 0
          %830 = vmatpush.msra.mxu0 0.0
          %831 = vmatpush.msra.mxu0 0.0
          %832 = vmatpush.msra.mxu0 0.0
          %833 = vmatpush.msra.mxu0 0.0
          %834 = vmatpush.msra.mxu0 0.0
          %835 = vmatpush.msra.mxu0 0.0
          %836 = vmatpush.msra.mxu0 0.0
          %837 = vmatpush.msra.mxu0 0.0
          %838 = vmatpush.msra.mxu0 0.0
          %839 = vmatpush.msra.mxu0 0.0
          %840 = vmatpush.msra.mxu0 0.0
          %841 = vmatpush.msra.mxu0 0.0
          %842 = vmatpush.msra.mxu0 %v825
          %843 = vmatpush.msra.mxu0 %v824
          %844 = vmatpush.msra.mxu0 %v823
          %845 = vmatpush.msra.mxu0 %v822
          %846 = vmatmul.f32.gmra.mxu0 %v794
          %v847 = vpop.f32.mrf.mxu0
          %v848 = vadd.f32 %v828, %v847
          %849 = vmatmul.f32.gmra.mxu0 %v797
          %v850 = vpop.f32.mrf.mxu0
          %v851 = vadd.f32 %v828, %v850
          %852 = vdwg.mxu0
          %855 = vrot.lane.b32.xlu0 %v817, 120
          %v856 = vpop.permute.xlu0 %855
          %857 = vrot.lane.b32.xlu0 %v820, 120
          %v858 = vpop.permute.xlu0 %857
          %861 = vrot.lane.b32.xlu0 %v817, 112
          %v862 = vpop.permute.xlu0 %861
          %863 = vrot.lane.b32.xlu0 %v820, 112
          %v864 = vpop.permute.xlu0 %863
          %867 = vrot.lane.b32.xlu0 %v817, 104
          %v868 = vpop.permute.xlu0 %867
          %869 = vrot.lane.b32.xlu0 %v820, 104
          %v870 = vpop.permute.xlu0 %869
          %v873 = vrot.slane %v862, 4
          %vm874 = vcmask 1047556
          %v875 = vsel %vm874, %v873, %v817
          %v876 = vrot.slane %v817, 4
          %v877 = vsel %vm874, %v862, %v876
          %v879 = vunpack.c.l.s4 1983009808
          %v880 = vunpack.c.0.s8 %v879
          %v881 = vperm.slane %v875, %v880
          %v883 = vunpack.c.l.s4 1983009808
          %v884 = vunpack.c.0.s8 %v883
          %v885 = vperm.slane %v877, %v884
          %v886 = vrot.slane %v868, 4
          %v887 = vsel %vm874, %v886, %v856
          %v888 = vrot.slane %v856, 4
          %v889 = vsel %vm874, %v868, %v888
          %v891 = vunpack.c.l.s4 1983009808
          %v892 = vunpack.c.0.s8 %v891
          %v893 = vperm.slane %v887, %v892
          %v895 = vunpack.c.l.s4 1983009808
          %v896 = vunpack.c.0.s8 %v895
          %v897 = vperm.slane %v889, %v896
          %v898 = vrot.slane %v893, 4
          %v899 = vsel %vm874, %v898, %v881
          %v900 = vrot.slane %v881, 4
          %v901 = vsel %vm874, %v893, %v900
          %v903 = vunpack.c.l.s4 1934713408
          %v904 = vunpack.c.0.s8 %v903
          %v905 = vperm.slane %v899, %v904
          %v907 = vunpack.c.l.s4 1934713408
          %v908 = vunpack.c.0.s8 %v907
          %v909 = vperm.slane %v901, %v908
          %v910 = vrot.slane %v897, 4
          %v911 = vsel %vm874, %v910, %v885
          %v912 = vrot.slane %v885, 4
          %v913 = vsel %vm874, %v897, %v912
          %v915 = vunpack.c.l.s4 1934713408
          %v916 = vunpack.c.0.s8 %v915
          %v917 = vperm.slane %v911, %v916
          %v919 = vunpack.c.l.s4 1934713408
          %v920 = vunpack.c.0.s8 %v919
          %v921 = vperm.slane %v913, %v920
          %v922 = vrot.slane %v905, 4
          %v923 = vsel %vm874, 0.0, %v922
          %v924 = vrot.slane %v909, 4
          %v925 = vsel %vm874, 0.0, %v924
          %v926 = vrot.slane %v917, 4
          %v927 = vsel %vm874, 0.0, %v926
          %v928 = vrot.slane %v921, 4
          %v929 = vsel %vm874, 0.0, %v928
          %v930 = vrot.slane %v864, 4
          %v931 = vsel %vm874, %v930, %v820
          %v932 = vrot.slane %v820, 4
          %v933 = vsel %vm874, %v864, %v932
          %v935 = vunpack.c.l.s4 1983009808
          %v936 = vunpack.c.0.s8 %v935
          %v937 = vperm.slane %v931, %v936
          %v939 = vunpack.c.l.s4 1983009808
          %v940 = vunpack.c.0.s8 %v939
          %v941 = vperm.slane %v933, %v940
          %v942 = vrot.slane %v870, 4
          %v943 = vsel %vm874, %v942, %v858
          %v944 = vrot.slane %v858, 4
          %v945 = vsel %vm874, %v870, %v944
          %v947 = vunpack.c.l.s4 1983009808
          %v948 = vunpack.c.0.s8 %v947
          %v949 = vperm.slane %v943, %v948
          %v951 = vunpack.c.l.s4 1983009808
          %v952 = vunpack.c.0.s8 %v951
          %v953 = vperm.slane %v945, %v952
          %v954 = vrot.slane %v949, 4
          %v955 = vsel %vm874, %v954, %v937
          %v956 = vrot.slane %v937, 4
          %v957 = vsel %vm874, %v949, %v956
          %v959 = vunpack.c.l.s4 1934713408
          %v960 = vunpack.c.0.s8 %v959
          %v961 = vperm.slane %v955, %v960
          %v963 = vunpack.c.l.s4 1934713408
          %v964 = vunpack.c.0.s8 %v963
          %v965 = vperm.slane %v957, %v964
          %v966 = vrot.slane %v953, 4
          %v967 = vsel %vm874, %v966, %v941
          %v968 = vrot.slane %v941, 4
          %v969 = vsel %vm874, %v953, %v968
          %v971 = vunpack.c.l.s4 1934713408
          %v972 = vunpack.c.0.s8 %v971
          %v973 = vperm.slane %v967, %v972
          %v975 = vunpack.c.l.s4 1934713408
          %v976 = vunpack.c.0.s8 %v975
          %v977 = vperm.slane %v969, %v976
          %v978 = vrot.slane %v961, 4
          %v979 = vsel %vm874, 0.0, %v978
          %v980 = vrot.slane %v965, 4
          %v981 = vsel %vm874, 0.0, %v980
          %v982 = vrot.slane %v973, 4
          %v983 = vsel %vm874, 0.0, %v982
          %v984 = vrot.slane %v977, 4
          %v985 = vsel %vm874, 0.0, %v984
          %v986 = vsel %vm874, %v924, %v905
          %v988 = vunpack.c.l.s4 1983009808
          %v989 = vunpack.c.0.s8 %v988
          %v990 = vperm.slane %v986, %v989
          %v991 = vrot.slane %v925, 4
          %v992 = vsel %vm874, %v991, %v923
          %v994 = vunpack.c.l.s4 1983009808
          %v995 = vunpack.c.0.s8 %v994
          %v996 = vperm.slane %v992, %v995
          %v997 = vsel %vm874, %v928, %v917
          %v999 = vunpack.c.l.s4 1983009808
          %v1000 = vunpack.c.0.s8 %v999
          %v1001 = vperm.slane %v997, %v1000
          %v1002 = vrot.slane %v929, 4
          %v1003 = vsel %vm874, %v1002, %v927
          %v1005 = vunpack.c.l.s4 1983009808
          %v1006 = vunpack.c.0.s8 %v1005
          %v1007 = vperm.slane %v1003, %v1006
          %v1008 = vrot.slane %v996, 4
          %v1009 = vsel %vm874, %v1008, %v990
          %v1010 = vrot.slane %v990, 4
          %v1011 = vsel %vm874, %v996, %v1010
          %v1013 = vunpack.c.l.s4 1934713408
          %v1014 = vunpack.c.0.s8 %v1013
          %v1015 = vperm.slane %v1009, %v1014
          %v1017 = vunpack.c.l.s4 1934713408
          %v1018 = vunpack.c.0.s8 %v1017
          %v1019 = vperm.slane %v1011, %v1018
          %v1020 = vrot.slane %v1007, 4
          %v1021 = vsel %vm874, %v1020, %v1001
          %v1022 = vrot.slane %v1001, 4
          %v1023 = vsel %vm874, %v1007, %v1022
          %v1025 = vunpack.c.l.s4 1934713408
          %v1026 = vunpack.c.0.s8 %v1025
          %v1027 = vperm.slane %v1021, %v1026
          %v1029 = vunpack.c.l.s4 1934713408
          %v1030 = vunpack.c.0.s8 %v1029
          %v1031 = vperm.slane %v1023, %v1030
          %v1032 = vrot.slane %v1027, 4
          %v1033 = vsel %vm874, %v1032, %v1015
          %v1034 = vrot.slane %v1015, 4
          %v1035 = vsel %vm874, %v1027, %v1034
          %v1036 = vrot.slane %v1031, 4
          %v1037 = vsel %vm874, %v1036, %v1019
          %v1038 = vrot.slane %v1019, 4
          %v1039 = vsel %vm874, %v1031, %v1038
          %v1040 = vsel %vm874, %v980, %v961
          %v1042 = vunpack.c.l.s4 1983009808
          %v1043 = vunpack.c.0.s8 %v1042
          %v1044 = vperm.slane %v1040, %v1043
          %v1045 = vrot.slane %v981, 4
          %v1046 = vsel %vm874, %v1045, %v979
          %v1048 = vunpack.c.l.s4 1983009808
          %v1049 = vunpack.c.0.s8 %v1048
          %v1050 = vperm.slane %v1046, %v1049
          %v1051 = vsel %vm874, %v984, %v973
          %v1053 = vunpack.c.l.s4 1983009808
          %v1054 = vunpack.c.0.s8 %v1053
          %v1055 = vperm.slane %v1051, %v1054
          %v1056 = vrot.slane %v985, 4
          %v1057 = vsel %vm874, %v1056, %v983
          %v1059 = vunpack.c.l.s4 1983009808
          %v1060 = vunpack.c.0.s8 %v1059
          %v1061 = vperm.slane %v1057, %v1060
          %v1062 = vrot.slane %v1050, 4
          %v1063 = vsel %vm874, %v1062, %v1044
          %v1064 = vrot.slane %v1044, 4
          %v1065 = vsel %vm874, %v1050, %v1064
          %v1067 = vunpack.c.l.s4 1934713408
          %v1068 = vunpack.c.0.s8 %v1067
          %v1069 = vperm.slane %v1063, %v1068
          %v1071 = vunpack.c.l.s4 1934713408
          %v1072 = vunpack.c.0.s8 %v1071
          %v1073 = vperm.slane %v1065, %v1072
          %v1074 = vrot.slane %v1061, 4
          %v1075 = vsel %vm874, %v1074, %v1055
          %v1076 = vrot.slane %v1055, 4
          %v1077 = vsel %vm874, %v1061, %v1076
          %v1079 = vunpack.c.l.s4 1934713408
          %v1080 = vunpack.c.0.s8 %v1079
          %v1081 = vperm.slane %v1075, %v1080
          %v1083 = vunpack.c.l.s4 1934713408
          %v1084 = vunpack.c.0.s8 %v1083
          %v1085 = vperm.slane %v1077, %v1084
          %v1086 = vrot.slane %v1081, 4
          %v1087 = vsel %vm874, %v1086, %v1069
          %v1088 = vrot.slane %v1069, 4
          %v1089 = vsel %vm874, %v1081, %v1088
          %v1090 = vrot.slane %v1085, 4
          %v1091 = vsel %vm874, %v1090, %v1073
          %v1092 = vrot.slane %v1073, 4
          %v1093 = vsel %vm874, %v1085, %v1092
          %vm1094 = vcmask 64512
          %1095 = vst.msk [vmem:[#allocation2] sm:$0xff] %vm1094, %v1033
          %1096 = vst.msk [vmem:[#allocation2 + $0x8] sm:$0xff] %vm1094, %v1087
          %1097 = vst.msk [vmem:[#allocation2 + $0x10] sm:$0xff] %vm1094, %v1035
          %1098 = vst.msk [vmem:[#allocation2 + $0x18] sm:$0xff] %vm1094, %v1089
          %1099 = vst.msk [vmem:[#allocation2 + $0x20] sm:$0xff] %vm1094, %v1037
          %1100 = vst.msk [vmem:[#allocation2 + $0x28] sm:$0xff] %vm1094, %v1091
          %1101 = vst.msk [vmem:[#allocation2 + $0x30] sm:$0xff] %vm1094, %v1039
          %1102 = vst.msk [vmem:[#allocation2 + $0x38] sm:$0xff] %vm1094, %v1093
          %1105 = vrot.lane.b32.xlu0 %v848, 120
          %v1106 = vpop.permute.xlu0 %1105
          %1107 = vrot.lane.b32.xlu0 %v851, 120
          %v1108 = vpop.permute.xlu0 %1107
          %1111 = vrot.lane.b32.xlu0 %v848, 112
          %v1112 = vpop.permute.xlu0 %1111
          %1113 = vrot.lane.b32.xlu0 %v851, 112
          %v1114 = vpop.permute.xlu0 %1113
          %1117 = vrot.lane.b32.xlu0 %v848, 104
          %v1118 = vpop.permute.xlu0 %1117
          %1119 = vrot.lane.b32.xlu0 %v851, 104
          %v1120 = vpop.permute.xlu0 %1119
          %v1123 = vrot.slane %v1112, 4
          %v1124 = vsel %vm874, %v1123, %v848
          %v1125 = vrot.slane %v848, 4
          %v1126 = vsel %vm874, %v1112, %v1125
          %v1128 = vunpack.c.l.s4 1983009808
          %v1129 = vunpack.c.0.s8 %v1128
          %v1130 = vperm.slane %v1124, %v1129
          %v1132 = vunpack.c.l.s4 1983009808
          %v1133 = vunpack.c.0.s8 %v1132
          %v1134 = vperm.slane %v1126, %v1133
          %v1135 = vrot.slane %v1118, 4
          %v1136 = vsel %vm874, %v1135, %v1106
          %v1137 = vrot.slane %v1106, 4
          %v1138 = vsel %vm874, %v1118, %v1137
          %v1140 = vunpack.c.l.s4 1983009808
          %v1141 = vunpack.c.0.s8 %v1140
          %v1142 = vperm.slane %v1136, %v1141
          %v1144 = vunpack.c.l.s4 1983009808
          %v1145 = vunpack.c.0.s8 %v1144
          %v1146 = vperm.slane %v1138, %v1145
          %v1147 = vrot.slane %v1142, 4
          %v1148 = vsel %vm874, %v1147, %v1130
          %v1149 = vrot.slane %v1130, 4
          %v1150 = vsel %vm874, %v1142, %v1149
          %v1152 = vunpack.c.l.s4 1934713408
          %v1153 = vunpack.c.0.s8 %v1152
          %v1154 = vperm.slane %v1148, %v1153
          %v1156 = vunpack.c.l.s4 1934713408
          %v1157 = vunpack.c.0.s8 %v1156
          %v1158 = vperm.slane %v1150, %v1157
          %v1159 = vrot.slane %v1146, 4
          %v1160 = vsel %vm874, %v1159, %v1134
          %v1161 = vrot.slane %v1134, 4
          %v1162 = vsel %vm874, %v1146, %v1161
          %v1164 = vunpack.c.l.s4 1934713408
          %v1165 = vunpack.c.0.s8 %v1164
          %v1166 = vperm.slane %v1160, %v1165
          %v1168 = vunpack.c.l.s4 1934713408
          %v1169 = vunpack.c.0.s8 %v1168
          %v1170 = vperm.slane %v1162, %v1169
          %v1171 = vrot.slane %v1154, 4
          %v1172 = vsel %vm874, 0.0, %v1171
          %v1173 = vrot.slane %v1158, 4
          %v1174 = vsel %vm874, 0.0, %v1173
          %v1175 = vrot.slane %v1166, 4
          %v1176 = vsel %vm874, 0.0, %v1175
          %v1177 = vrot.slane %v1170, 4
          %v1178 = vsel %vm874, 0.0, %v1177
          %v1179 = vrot.slane %v1114, 4
          %v1180 = vsel %vm874, %v1179, %v851
          %v1181 = vrot.slane %v851, 4
          %v1182 = vsel %vm874, %v1114, %v1181
          %v1184 = vunpack.c.l.s4 1983009808
          %v1185 = vunpack.c.0.s8 %v1184
          %v1186 = vperm.slane %v1180, %v1185
          %v1188 = vunpack.c.l.s4 1983009808
          %v1189 = vunpack.c.0.s8 %v1188
          %v1190 = vperm.slane %v1182, %v1189
          %v1191 = vrot.slane %v1120, 4
          %v1192 = vsel %vm874, %v1191, %v1108
          %v1193 = vrot.slane %v1108, 4
          %v1194 = vsel %vm874, %v1120, %v1193
          %v1196 = vunpack.c.l.s4 1983009808
          %v1197 = vunpack.c.0.s8 %v1196
          %v1198 = vperm.slane %v1192, %v1197
          %v1200 = vunpack.c.l.s4 1983009808
          %v1201 = vunpack.c.0.s8 %v1200
          %v1202 = vperm.slane %v1194, %v1201
          %v1203 = vrot.slane %v1198, 4
          %v1204 = vsel %vm874, %v1203, %v1186
          %v1205 = vrot.slane %v1186, 4
          %v1206 = vsel %vm874, %v1198, %v1205
          %v1208 = vunpack.c.l.s4 1934713408
          %v1209 = vunpack.c.0.s8 %v1208
          %v1210 = vperm.slane %v1204, %v1209
          %v1212 = vunpack.c.l.s4 1934713408
          %v1213 = vunpack.c.0.s8 %v1212
          %v1214 = vperm.slane %v1206, %v1213
          %v1215 = vrot.slane %v1202, 4
          %v1216 = vsel %vm874, %v1215, %v1190
          %v1217 = vrot.slane %v1190, 4
          %v1218 = vsel %vm874, %v1202, %v1217
          %v1220 = vunpack.c.l.s4 1934713408
          %v1221 = vunpack.c.0.s8 %v1220
          %v1222 = vperm.slane %v1216, %v1221
          %v1224 = vunpack.c.l.s4 1934713408
          %v1225 = vunpack.c.0.s8 %v1224
          %v1226 = vperm.slane %v1218, %v1225
          %v1227 = vrot.slane %v1210, 4
          %v1228 = vsel %vm874, 0.0, %v1227
          %v1229 = vrot.slane %v1214, 4
          %v1230 = vsel %vm874, 0.0, %v1229
          %v1231 = vrot.slane %v1222, 4
          %v1232 = vsel %vm874, 0.0, %v1231
          %v1233 = vrot.slane %v1226, 4
          %v1234 = vsel %vm874, 0.0, %v1233
          %v1235 = vsel %vm874, %v1173, %v1154
          %v1237 = vunpack.c.l.s4 1983009808
          %v1238 = vunpack.c.0.s8 %v1237
          %v1239 = vperm.slane %v1235, %v1238
          %v1240 = vrot.slane %v1174, 4
          %v1241 = vsel %vm874, %v1240, %v1172
          %v1243 = vunpack.c.l.s4 1983009808
          %v1244 = vunpack.c.0.s8 %v1243
          %v1245 = vperm.slane %v1241, %v1244
          %v1246 = vsel %vm874, %v1177, %v1166
          %v1248 = vunpack.c.l.s4 1983009808
          %v1249 = vunpack.c.0.s8 %v1248
          %v1250 = vperm.slane %v1246, %v1249
          %v1251 = vrot.slane %v1178, 4
          %v1252 = vsel %vm874, %v1251, %v1176
          %v1254 = vunpack.c.l.s4 1983009808
          %v1255 = vunpack.c.0.s8 %v1254
          %v1256 = vperm.slane %v1252, %v1255
          %v1257 = vrot.slane %v1245, 4
          %v1258 = vsel %vm874, %v1257, %v1239
          %v1259 = vrot.slane %v1239, 4
          %v1260 = vsel %vm874, %v1245, %v1259
          %v1262 = vunpack.c.l.s4 1934713408
          %v1263 = vunpack.c.0.s8 %v1262
          %v1264 = vperm.slane %v1258, %v1263
          %v1266 = vunpack.c.l.s4 1934713408
          %v1267 = vunpack.c.0.s8 %v1266
          %v1268 = vperm.slane %v1260, %v1267
          %v1269 = vrot.slane %v1256, 4
          %v1270 = vsel %vm874, %v1269, %v1250
          %v1271 = vrot.slane %v1250, 4
          %v1272 = vsel %vm874, %v1256, %v1271
          %v1274 = vunpack.c.l.s4 1934713408
          %v1275 = vunpack.c.0.s8 %v1274
          %v1276 = vperm.slane %v1270, %v1275
          %v1278 = vunpack.c.l.s4 1934713408
          %v1279 = vunpack.c.0.s8 %v1278
          %v1280 = vperm.slane %v1272, %v1279
          %v1281 = vrot.slane %v1276, 4
          %v1282 = vsel %vm874, %v1281, %v1264
          %v1283 = vrot.slane %v1264, 4
          %v1284 = vsel %vm874, %v1276, %v1283
          %v1285 = vrot.slane %v1280, 4
          %v1286 = vsel %vm874, %v1285, %v1268
          %v1287 = vrot.slane %v1268, 4
          %v1288 = vsel %vm874, %v1280, %v1287
          %v1289 = vsel %vm874, %v1229, %v1210
          %v1291 = vunpack.c.l.s4 1983009808
          %v1292 = vunpack.c.0.s8 %v1291
          %v1293 = vperm.slane %v1289, %v1292
          %v1294 = vrot.slane %v1230, 4
          %v1295 = vsel %vm874, %v1294, %v1228
          %v1297 = vunpack.c.l.s4 1983009808
          %v1298 = vunpack.c.0.s8 %v1297
          %v1299 = vperm.slane %v1295, %v1298
          %v1300 = vsel %vm874, %v1233, %v1222
          %v1302 = vunpack.c.l.s4 1983009808
          %v1303 = vunpack.c.0.s8 %v1302
          %v1304 = vperm.slane %v1300, %v1303
          %v1305 = vrot.slane %v1234, 4
          %v1306 = vsel %vm874, %v1305, %v1232
          %v1308 = vunpack.c.l.s4 1983009808
          %v1309 = vunpack.c.0.s8 %v1308
          %v1310 = vperm.slane %v1306, %v1309
          %v1311 = vrot.slane %v1299, 4
          %v1312 = vsel %vm874, %v1311, %v1293
          %v1313 = vrot.slane %v1293, 4
          %v1314 = vsel %vm874, %v1299, %v1313
          %v1316 = vunpack.c.l.s4 1934713408
          %v1317 = vunpack.c.0.s8 %v1316
          %v1318 = vperm.slane %v1312, %v1317
          %v1320 = vunpack.c.l.s4 1934713408
          %v1321 = vunpack.c.0.s8 %v1320
          %v1322 = vperm.slane %v1314, %v1321
          %v1323 = vrot.slane %v1310, 4
          %v1324 = vsel %vm874, %v1323, %v1304
          %v1325 = vrot.slane %v1304, 4
          %v1326 = vsel %vm874, %v1310, %v1325
          %v1328 = vunpack.c.l.s4 1934713408
          %v1329 = vunpack.c.0.s8 %v1328
          %v1330 = vperm.slane %v1324, %v1329
          %v1332 = vunpack.c.l.s4 1934713408
          %v1333 = vunpack.c.0.s8 %v1332
          %v1334 = vperm.slane %v1326, %v1333
          %v1335 = vrot.slane %v1330, 4
          %v1336 = vsel %vm874, %v1335, %v1318
          %v1337 = vrot.slane %v1318, 4
          %v1338 = vsel %vm874, %v1330, %v1337
          %v1339 = vrot.slane %v1334, 4
          %v1340 = vsel %vm874, %v1339, %v1322
          %v1341 = vrot.slane %v1322, 4
          %v1342 = vsel %vm874, %v1334, %v1341
          %1343 = vst.msk [vmem:[#allocation3] sm:$0xff] %vm1094, %v1282
          %1344 = vst.msk [vmem:[#allocation3 + $0x8] sm:$0xff] %vm1094, %v1336
          %1345 = vst.msk [vmem:[#allocation3 + $0x10] sm:$0xff] %vm1094, %v1284
          %1346 = vst.msk [vmem:[#allocation3 + $0x18] sm:$0xff] %vm1094, %v1338
          %1347 = vst.msk [vmem:[#allocation3 + $0x20] sm:$0xff] %vm1094, %v1286
          %1348 = vst.msk [vmem:[#allocation3 + $0x28] sm:$0xff] %vm1094, %v1340
          %1349 = vst.msk [vmem:[#allocation3 + $0x30] sm:$0xff] %vm1094, %v1288
          %1350 = vst.msk [vmem:[#allocation3 + $0x38] sm:$0xff] %vm1094, %v1342
        $region112: #{tpu_custom_call.1} parent=91 // pred_fallthru
          _
        %s1351 = smul.u32 %s42, 8
        %s1352 = scalar_lea.vmem %s672, %s1351
        %v1353 = vld [vmem:[%s1352] sm:$0xff]
        %v1354 = vld [vmem:[%s14] sm:$0x1]
        %v1355 = vld [vmem:[%s15] sm:$0x1]
        %vm1356 = vcmask 261120
        %v1357 = vsel %vm1356, %v1353, 0.0
        %1358 = vadd.xlane.f32.xlu0 %v1357
        %v1359 = vpop.xlane.xlu0 %1358
        %v1360 = vrcp.pop 32.0
        %v1361 = vmul.f32 32.0, %v1360
        %v1362 = vsub.f32 1.0, %v1361
        %v1363 = vmul.f32 %v1360, %v1362
        %v1364 = vadd.f32 %v1360, %v1363
        %vm1365 = vweird.f32 %v1360
        %v1366 = vsel %vm1365, %v1360, %v1364
        %v1367 = vmul.f32 %v1359, %v1366
        %v1368 = vsub.f32 %v1353, %v1367
        %v1369 = vmul.f32 %v1368, %v1368
        %v1370 = vsel %vm1356, %v1369, 0.0
        %1371 = vadd.xlane.f32.xlu0 %v1370
        %v1372 = vpop.xlane.xlu0 %1371
        %v1373 = vrcp.pop 31.0
        %v1374 = vmul.f32 31.0, %v1373
        %v1375 = vsub.f32 1.0, %v1374
        %v1376 = vmul.f32 %v1373, %v1375
        %v1377 = vadd.f32 %v1373, %v1376
        %vm1378 = vweird.f32 %v1373
        %v1379 = vsel %vm1378, %v1373, %v1377
        %v1380 = vmul.f32 %v1372, %v1379
        %v1381 = vrsqrt.pop %v1380
        %v1382 = vmul.f32 %v1381, %v1380
        %v1383 = vmul.f32 %v1382, %v1381
        %v1384 = vmul.f32 0.5, %v1383
        %v1385 = vsub.f32 1.5, %v1384
        %v1386 = vmul.f32 %v1381, %v1385
        %v1387 = vmul.f32 %v1380, %v1386
        %vm1388 = vcmp.eq.f32.partialorder %v1380, inf
        %v1389 = vsel %vm1388, %v1380, %v1387
        %vm1390 = vcmp.eq.f32.partialorder %v1380, 0.0
        %v1391 = vand.u32 %v1380, 2147483648
        %v1392 = vsel %vm1390, %v1391, %v1389
        %v1394 = vperm.slane %v1354, 0
        %v1396 = vmul.f32 %v1394, %v1368
        %v1397 = vadd.f32 %v1392, 1e-06
        %v1398 = vrcp.pop %v1397
        %v1399 = vmul.f32 %v1397, %v1398
        %v1400 = vsub.f32 1.0, %v1399
        %v1401 = vmul.f32 %v1398, %v1400
        %v1402 = vadd.f32 %v1398, %v1401
        %vm1403 = vweird.f32 %v1397
        %vm1404 = vweird.f32 %v1398
        %vm1405 = vmor %vm1403, %vm1404
        %v1406 = vsel %vm1405, %v1398, %v1402
        %v1407 = vand.u32 2147483647, %v1397
        %vm1408 = vcmp.eq.f32.partialorder %v1407, 8.507059e+37
        %v1409 = vand.u32 %v1397, 2147483648
        %v1410 = vor.u32 1.1754944e-38, %v1409
        %v1411 = vsel %vm1408, %v1410, %v1406
        %v1412 = vmul.f32 %v1396, %v1411
        %v1414 = vperm.slane %v1355, 0
        %v1416 = vadd.f32 %v1412, %v1414
        %v1417 = vld [vmem:[%s2] sm:$0xff]
        %v1418 = vld [vmem:[%s2 + $0x8] sm:$0xff]
        %v1419 = vld [vmem:[%s2 + $0x10] sm:$0xff]
        %v1420 = vld [vmem:[%s2 + $0x18] sm:$0xff]
        %v1421 = vld [vmem:[%s3] sm:$0x1]
        %v1423 = vperm.slane %v1421, 0
        %v1426 = vsel %vm1356, %v1416, 0
        %1428 = vmatpush.msra.mxu0 0.0
        %1429 = vmatpush.msra.mxu0 0.0
        %1430 = vmatpush.msra.mxu0 0.0
        %1431 = vmatpush.msra.mxu0 0.0
        %1432 = vmatpush.msra.mxu0 0.0
        %1433 = vmatpush.msra.mxu0 0.0
        %1434 = vmatpush.msra.mxu0 0.0
        %1435 = vmatpush.msra.mxu0 0.0
        %1436 = vmatpush.msra.mxu0 0.0
        %1437 = vmatpush.msra.mxu0 0.0
        %1438 = vmatpush.msra.mxu0 0.0
        %1439 = vmatpush.msra.mxu0 0.0
        %1440 = vmatpush.msra.mxu0 %v1420
        %1441 = vmatpush.msra.mxu0 %v1419
        %1442 = vmatpush.msra.mxu0 %v1418
        %1443 = vmatpush.msra.mxu0 %v1417
        %1444 = vmatmul.f32.gmra.mxu0 %v1426
        %v1445 = vpop.f32.mrf.mxu0
        %v1446 = vadd.f32 %v1423, %v1445
        %1447 = vdwg.mxu0
        %v1448 = vmul.f32 %v1446, 0.35355338
        %1450 = vrot.lane.b32.xlu0 %v1448, 120
        %v1451 = vpop.permute.xlu0 %1450
        %1453 = vrot.lane.b32.xlu0 %v1448, 112
        %v1454 = vpop.permute.xlu0 %1453
        %1456 = vrot.lane.b32.xlu0 %v1448, 104
        %v1457 = vpop.permute.xlu0 %1456
        %v1459 = vrot.slane %v1454, 4
        %vm1460 = vcmask 1047556
        %v1461 = vsel %vm1460, %v1459, %v1448
        %v1462 = vrot.slane %v1448, 4
        %v1463 = vsel %vm1460, %v1454, %v1462
        %v1465 = vunpack.c.l.s4 1983009808
        %v1466 = vunpack.c.0.s8 %v1465
        %v1467 = vperm.slane %v1461, %v1466
        %v1469 = vunpack.c.l.s4 1983009808
        %v1470 = vunpack.c.0.s8 %v1469
        %v1471 = vperm.slane %v1463, %v1470
        %v1472 = vrot.slane %v1457, 4
        %v1473 = vsel %vm1460, %v1472, %v1451
        %v1474 = vrot.slane %v1451, 4
        %v1475 = vsel %vm1460, %v1457, %v1474
        %v1477 = vunpack.c.l.s4 1983009808
        %v1478 = vunpack.c.0.s8 %v1477
        %v1479 = vperm.slane %v1473, %v1478
        %v1481 = vunpack.c.l.s4 1983009808
        %v1482 = vunpack.c.0.s8 %v1481
        %v1483 = vperm.slane %v1475, %v1482
        %v1484 = vrot.slane %v1479, 4
        %v1485 = vsel %vm1460, %v1484, %v1467
        %v1486 = vrot.slane %v1467, 4
        %v1487 = vsel %vm1460, %v1479, %v1486
        %v1489 = vunpack.c.l.s4 1934713408
        %v1490 = vunpack.c.0.s8 %v1489
        %v1491 = vperm.slane %v1485, %v1490
        %v1493 = vunpack.c.l.s4 1934713408
        %v1494 = vunpack.c.0.s8 %v1493
        %v1495 = vperm.slane %v1487, %v1494
        %v1496 = vrot.slane %v1483, 4
        %v1497 = vsel %vm1460, %v1496, %v1471
        %v1498 = vrot.slane %v1471, 4
        %v1499 = vsel %vm1460, %v1483, %v1498
        %v1501 = vunpack.c.l.s4 1934713408
        %v1502 = vunpack.c.0.s8 %v1501
        %v1503 = vperm.slane %v1497, %v1502
        %v1505 = vunpack.c.l.s4 1934713408
        %v1506 = vunpack.c.0.s8 %v1505
        %v1507 = vperm.slane %v1499, %v1506
        %v1508 = vrot.slane %v1491, 4
        %v1509 = vsel %vm1460, 0.0, %v1508
        %v1510 = vrot.slane %v1495, 4
        %v1511 = vsel %vm1460, 0.0, %v1510
        %v1512 = vrot.slane %v1503, 4
        %v1513 = vsel %vm1460, 0.0, %v1512
        %v1514 = vrot.slane %v1507, 4
        %v1515 = vsel %vm1460, 0.0, %v1514
        %v1516 = vsel %vm1460, %v1510, %v1491
        %v1518 = vunpack.c.l.s4 1983009808
        %v1519 = vunpack.c.0.s8 %v1518
        %v1520 = vperm.slane %v1516, %v1519
        %v1521 = vrot.slane %v1511, 4
        %v1522 = vsel %vm1460, %v1521, %v1509
        %v1524 = vunpack.c.l.s4 1983009808
        %v1525 = vunpack.c.0.s8 %v1524
        %v1526 = vperm.slane %v1522, %v1525
        %v1527 = vsel %vm1460, %v1514, %v1503
        %v1529 = vunpack.c.l.s4 1983009808
        %v1530 = vunpack.c.0.s8 %v1529
        %v1531 = vperm.slane %v1527, %v1530
        %v1532 = vrot.slane %v1515, 4
        %v1533 = vsel %vm1460, %v1532, %v1513
        %v1535 = vunpack.c.l.s4 1983009808
        %v1536 = vunpack.c.0.s8 %v1535
        %v1537 = vperm.slane %v1533, %v1536
        %v1538 = vrot.slane %v1526, 4
        %v1539 = vsel %vm1460, %v1538, %v1520
        %v1540 = vrot.slane %v1520, 4
        %v1541 = vsel %vm1460, %v1526, %v1540
        %v1543 = vunpack.c.l.s4 1934713408
        %v1544 = vunpack.c.0.s8 %v1543
        %v1545 = vperm.slane %v1539, %v1544
        %v1547 = vunpack.c.l.s4 1934713408
        %v1548 = vunpack.c.0.s8 %v1547
        %v1549 = vperm.slane %v1541, %v1548
        %v1550 = vrot.slane %v1537, 4
        %v1551 = vsel %vm1460, %v1550, %v1531
        %v1552 = vrot.slane %v1531, 4
        %v1553 = vsel %vm1460, %v1537, %v1552
        %v1555 = vunpack.c.l.s4 1934713408
        %v1556 = vunpack.c.0.s8 %v1555
        %v1557 = vperm.slane %v1551, %v1556
        %v1559 = vunpack.c.l.s4 1934713408
        %v1560 = vunpack.c.0.s8 %v1559
        %v1561 = vperm.slane %v1553, %v1560
        %v1562 = vrot.slane %v1557, 4
        %v1563 = vsel %vm1460, %v1562, %v1545
        %v1564 = vrot.slane %v1545, 4
        %v1565 = vsel %vm1460, %v1557, %v1564
        %v1566 = vrot.slane %v1561, 4
        %v1567 = vsel %vm1460, %v1566, %v1549
        %v1568 = vrot.slane %v1549, 4
        %v1569 = vsel %vm1460, %v1561, %v1568
        %v1570 = vld [vmem:[#allocation2] sm:$0xff]
        %v1571 = vld [vmem:[#allocation2 + $0x8] sm:$0xff]
        %v1572 = vld [vmem:[#allocation2 + $0x10] sm:$0xff]
        %v1573 = vld [vmem:[#allocation2 + $0x18] sm:$0xff]
        %v1574 = vld [vmem:[#allocation2 + $0x20] sm:$0xff]
        %v1575 = vld [vmem:[#allocation2 + $0x28] sm:$0xff]
        %v1576 = vld [vmem:[#allocation2 + $0x30] sm:$0xff]
        %v1577 = vld [vmem:[#allocation2 + $0x38] sm:$0xff]
        %v1579 = vperm.slane %v675, 0
        %vm1581 = vcmask 64512
        %v1583 = vsel %vm1581, %v1563, 0
        %v1586 = vsel %vm1581, %v1570, 0
        %v1589 = vsel %vm1581, %v1571, 0
        %1591 = vmatpush.xpose.msra.mxu0 0.0
        %1592 = vmatpush.xpose.msra.mxu0 0.0
        %1593 = vmatpush.xpose.msra.mxu0 0.0
        %1594 = vmatpush.xpose.msra.mxu0 0.0
        %1595 = vmatpush.xpose.msra.mxu0 0.0
        %1596 = vmatpush.xpose.msra.mxu0 0.0
        %1597 = vmatpush.xpose.msra.mxu0 0.0
        %1598 = vmatpush.xpose.msra.mxu0 0.0
        %1599 = vmatpush.xpose.msra.mxu0 0.0
        %1600 = vmatpush.xpose.msra.mxu0 0.0
        %1601 = vmatpush.xpose.msra.mxu0 0.0
        %1602 = vmatpush.xpose.msra.mxu0 0.0
        %1603 = vmatpush.xpose.msra.mxu0 0.0
        %1604 = vmatpush.xpose.msra.mxu0 0.0
        %1605 = vmatpush.xpose.msra.mxu0 %v1589
        %1606 = vmatpush.xpose.msra.mxu0 %v1586
        %1607 = vmatmul.f32.gmra.mxu0 %v1583
        %v1608 = vpop.f32.mrf.mxu0
        %v1609 = vadd.f32 %v1579, %v1608
        %1610 = vdwg.mxu0
        %v1612 = vsel %vm1581, %v1565, 0
        %v1615 = vsel %vm1581, %v1572, 0
        %v1618 = vsel %vm1581, %v1573, 0
        %1620 = vmatpush.xpose.msra.mxu0 0.0
        %1621 = vmatpush.xpose.msra.mxu0 0.0
        %1622 = vmatpush.xpose.msra.mxu0 0.0
        %1623 = vmatpush.xpose.msra.mxu0 0.0
        %1624 = vmatpush.xpose.msra.mxu0 0.0
        %1625 = vmatpush.xpose.msra.mxu0 0.0
        %1626 = vmatpush.xpose.msra.mxu0 0.0
        %1627 = vmatpush.xpose.msra.mxu0 0.0
        %1628 = vmatpush.xpose.msra.mxu0 0.0
        %1629 = vmatpush.xpose.msra.mxu0 0.0
        %1630 = vmatpush.xpose.msra.mxu0 0.0
        %1631 = vmatpush.xpose.msra.mxu0 0.0
        %1632 = vmatpush.xpose.msra.mxu0 0.0
        %1633 = vmatpush.xpose.msra.mxu0 0.0
        %1634 = vmatpush.xpose.msra.mxu0 %v1618
        %1635 = vmatpush.xpose.msra.mxu0 %v1615
        %1636 = vmatmul.f32.gmra.mxu0 %v1612
        %v1637 = vpop.f32.mrf.mxu0
        %v1638 = vadd.f32 %v1579, %v1637
        %1639 = vdwg.mxu0
        %v1641 = vsel %vm1581, %v1567, 0
        %v1644 = vsel %vm1581, %v1574, 0
        %v1647 = vsel %vm1581, %v1575, 0
        %1649 = vmatpush.xpose.msra.mxu0 0.0
        %1650 = vmatpush.xpose.msra.mxu0 0.0
        %1651 = vmatpush.xpose.msra.mxu0 0.0
        %1652 = vmatpush.xpose.msra.mxu0 0.0
        %1653 = vmatpush.xpose.msra.mxu0 0.0
        %1654 = vmatpush.xpose.msra.mxu0 0.0
        %1655 = vmatpush.xpose.msra.mxu0 0.0
        %1656 = vmatpush.xpose.msra.mxu0 0.0
        %1657 = vmatpush.xpose.msra.mxu0 0.0
        %1658 = vmatpush.xpose.msra.mxu0 0.0
        %1659 = vmatpush.xpose.msra.mxu0 0.0
        %1660 = vmatpush.xpose.msra.mxu0 0.0
        %1661 = vmatpush.xpose.msra.mxu0 0.0
        %1662 = vmatpush.xpose.msra.mxu0 0.0
        %1663 = vmatpush.xpose.msra.mxu0 %v1647
        %1664 = vmatpush.xpose.msra.mxu0 %v1644
        %1665 = vmatmul.f32.gmra.mxu0 %v1641
        %v1666 = vpop.f32.mrf.mxu0
        %v1667 = vadd.f32 %v1579, %v1666
        %1668 = vdwg.mxu0
        %v1670 = vsel %vm1581, %v1569, 0
        %v1673 = vsel %vm1581, %v1576, 0
        %v1676 = vsel %vm1581, %v1577, 0
        %1678 = vmatpush.xpose.msra.mxu0 0.0
        %1679 = vmatpush.xpose.msra.mxu0 0.0
        %1680 = vmatpush.xpose.msra.mxu0 0.0
        %1681 = vmatpush.xpose.msra.mxu0 0.0
        %1682 = vmatpush.xpose.msra.mxu0 0.0
        %1683 = vmatpush.xpose.msra.mxu0 0.0
        %1684 = vmatpush.xpose.msra.mxu0 0.0
        %1685 = vmatpush.xpose.msra.mxu0 0.0
        %1686 = vmatpush.xpose.msra.mxu0 0.0
        %1687 = vmatpush.xpose.msra.mxu0 0.0
        %1688 = vmatpush.xpose.msra.mxu0 0.0
        %1689 = vmatpush.xpose.msra.mxu0 0.0
        %1690 = vmatpush.xpose.msra.mxu0 0.0
        %1691 = vmatpush.xpose.msra.mxu0 0.0
        %1692 = vmatpush.xpose.msra.mxu0 %v1676
        %1693 = vmatpush.xpose.msra.mxu0 %v1673
        %1694 = vmatmul.f32.gmra.mxu0 %v1670
        %v1695 = vpop.f32.mrf.mxu0
        %v1696 = vadd.f32 %v1579, %v1695
        %1697 = vdwg.mxu0
        %vm1698 = vcmask 130048
        %v1699 = vsel %vm1698, %v1609, -inf
        %1700 = vmax.xlane.f32.xlu0 %v1699
        %v1701 = vpop.xlane.xlu0 %1700
        %v1702 = vsel %vm1698, %v1638, -inf
        %1703 = vmax.xlane.f32.xlu0 %v1702
        %v1704 = vpop.xlane.xlu0 %1703
        %v1705 = vsel %vm1698, %v1667, -inf
        %1706 = vmax.xlane.f32.xlu0 %v1705
        %v1707 = vpop.xlane.xlu0 %1706
        %v1708 = vsel %vm1698, %v1696, -inf
        %1709 = vmax.xlane.f32.xlu0 %v1708
        %v1710 = vpop.xlane.xlu0 %1709
        %v1711 = vsub.f32 %v1609, %v1701
        %v1712 = vsub.f32 %v1638, %v1704
        %v1713 = vsub.f32 %v1667, %v1707
        %v1714 = vsub.f32 %v1696, %v1710
        %v1715 = vmul.f32 %v1711, 1.442695
        %v1716 = vpow.pop %v1715
        %v1717 = vmul.f32 %v1712, 1.442695
        %v1718 = vpow.pop %v1717
        %v1719 = vmul.f32 %v1713, 1.442695
        %v1720 = vpow.pop %v1719
        %v1721 = vmul.f32 %v1714, 1.442695
        %v1722 = vpow.pop %v1721
        %v1723 = vsel %vm1698, %v1716, 0.0
        %1724 = vadd.xlane.f32.xlu0 %v1723
        %v1725 = vpop.xlane.xlu0 %1724
        %v1726 = vsel %vm1698, %v1718, 0.0
        %1727 = vadd.xlane.f32.xlu0 %v1726
        %v1728 = vpop.xlane.xlu0 %1727
        %v1729 = vsel %vm1698, %v1720, 0.0
        %1730 = vadd.xlane.f32.xlu0 %v1729
        %v1731 = vpop.xlane.xlu0 %1730
        %v1732 = vsel %vm1698, %v1722, 0.0
        %1733 = vadd.xlane.f32.xlu0 %v1732
        %v1734 = vpop.xlane.xlu0 %1733
        %v1735 = vrcp.pop %v1725
        %v1736 = vmul.f32 %v1725, %v1735
        %v1737 = vsub.f32 1.0, %v1736
        %v1738 = vmul.f32 %v1735, %v1737
        %v1739 = vadd.f32 %v1735, %v1738
        %vm1740 = vweird.f32 %v1725
        %vm1741 = vweird.f32 %v1735
        %vm1742 = vmor %vm1740, %vm1741
        %v1743 = vsel %vm1742, %v1735, %v1739
        %v1744 = vand.u32 2147483647, %v1725
        %vm1745 = vcmp.eq.f32.partialorder %v1744, 8.507059e+37
        %v1746 = vand.u32 %v1725, 2147483648
        %v1747 = vor.u32 1.1754944e-38, %v1746
        %v1748 = vsel %vm1745, %v1747, %v1743
        %v1749 = vrcp.pop %v1728
        %v1750 = vmul.f32 %v1728, %v1749
        %v1751 = vsub.f32 1.0, %v1750
        %v1752 = vmul.f32 %v1749, %v1751
        %v1753 = vadd.f32 %v1749, %v1752
        %vm1754 = vweird.f32 %v1728
        %vm1755 = vweird.f32 %v1749
        %vm1756 = vmor %vm1754, %vm1755
        %v1757 = vsel %vm1756, %v1749, %v1753
        %v1758 = vand.u32 2147483647, %v1728
        %vm1759 = vcmp.eq.f32.partialorder %v1758, 8.507059e+37
        %v1760 = vand.u32 %v1728, 2147483648
        %v1761 = vor.u32 1.1754944e-38, %v1760
        %v1762 = vsel %vm1759, %v1761, %v1757
        %v1763 = vrcp.pop %v1731
        %v1764 = vmul.f32 %v1731, %v1763
        %v1765 = vsub.f32 1.0, %v1764
        %v1766 = vmul.f32 %v1763, %v1765
        %v1767 = vadd.f32 %v1763, %v1766
        %vm1768 = vweird.f32 %v1731
        %vm1769 = vweird.f32 %v1763
        %vm1770 = vmor %vm1768, %vm1769
        %v1771 = vsel %vm1770, %v1763, %v1767
        %v1772 = vand.u32 2147483647, %v1731
        %vm1773 = vcmp.eq.f32.partialorder %v1772, 8.507059e+37
        %v1774 = vand.u32 %v1731, 2147483648
        %v1775 = vor.u32 1.1754944e-38, %v1774
        %v1776 = vsel %vm1773, %v1775, %v1771
        %v1777 = vrcp.pop %v1734
        %v1778 = vmul.f32 %v1734, %v1777
        %v1779 = vsub.f32 1.0, %v1778
        %v1780 = vmul.f32 %v1777, %v1779
        %v1781 = vadd.f32 %v1777, %v1780
        %vm1782 = vweird.f32 %v1734
        %vm1783 = vweird.f32 %v1777
        %vm1784 = vmor %vm1782, %vm1783
        %v1785 = vsel %vm1784, %v1777, %v1781
        %v1786 = vand.u32 2147483647, %v1734
        %vm1787 = vcmp.eq.f32.partialorder %v1786, 8.507059e+37
        %v1788 = vand.u32 %v1734, 2147483648
        %v1789 = vor.u32 1.1754944e-38, %v1788
        %v1790 = vsel %vm1787, %v1789, %v1785
        %v1791 = vmul.f32 %v1716, %v1748
        %v1792 = vmul.f32 %v1718, %v1762
        %v1793 = vmul.f32 %v1720, %v1776
        %v1794 = vmul.f32 %v1722, %v1790
        %v1795 = vld [vmem:[#allocation3] sm:$0xff]
        %v1796 = vld [vmem:[#allocation3 + $0x8] sm:$0xff]
        %v1797 = vld [vmem:[#allocation3 + $0x10] sm:$0xff]
        %v1798 = vld [vmem:[#allocation3 + $0x18] sm:$0xff]
        %v1799 = vld [vmem:[#allocation3 + $0x20] sm:$0xff]
        %v1800 = vld [vmem:[#allocation3 + $0x28] sm:$0xff]
        %v1801 = vld [vmem:[#allocation3 + $0x30] sm:$0xff]
        %v1802 = vld [vmem:[#allocation3 + $0x38] sm:$0xff]
        %v1804 = vsel %vm1698, %v1791, 0
        %1806 = vmatpush.msra.mxu0 0.0
        %1807 = vmatpush.msra.mxu0 0.0
        %1808 = vmatpush.msra.mxu0 0.0
        %1809 = vmatpush.msra.mxu0 0.0
        %1810 = vmatpush.msra.mxu0 0.0
        %1811 = vmatpush.msra.mxu0 0.0
        %1812 = vmatpush.msra.mxu0 0.0
        %1813 = vmatpush.msra.mxu0 0.0
        %1814 = vmatpush.msra.mxu0 0.0
        %1815 = vmatpush.msra.mxu0 0.0
        %1816 = vmatpush.msra.mxu0 0.0
        %1817 = vmatpush.msra.mxu0 0.0
        %1818 = vmatpush.msra.mxu0 0.0
        %1819 = vmatpush.msra.mxu0 0.0
        %1820 = vmatpush.msra.mxu0 %v1796
        %1821 = vmatpush.msra.mxu0 %v1795
        %1822 = vmatmul.f32.gmra.mxu0 %v1804
        %v1823 = vpop.f32.mrf.mxu0
        %v1824 = vadd.f32 0.0, %v1823
        %1825 = vdwg.mxu0
        %v1827 = vsel %vm1698, %v1792, 0
        %1829 = vmatpush.msra.mxu0 0.0
        %1830 = vmatpush.msra.mxu0 0.0
        %1831 = vmatpush.msra.mxu0 0.0
        %1832 = vmatpush.msra.mxu0 0.0
        %1833 = vmatpush.msra.mxu0 0.0
        %1834 = vmatpush.msra.mxu0 0.0
        %1835 = vmatpush.msra.mxu0 0.0
        %1836 = vmatpush.msra.mxu0 0.0
        %1837 = vmatpush.msra.mxu0 0.0
        %1838 = vmatpush.msra.mxu0 0.0
        %1839 = vmatpush.msra.mxu0 0.0
        %1840 = vmatpush.msra.mxu0 0.0
        %1841 = vmatpush.msra.mxu0 0.0
        %1842 = vmatpush.msra.mxu0 0.0
        %1843 = vmatpush.msra.mxu0 %v1798
        %1844 = vmatpush.msra.mxu0 %v1797
        %1845 = vmatmul.f32.gmra.mxu0 %v1827
        %v1846 = vpop.f32.mrf.mxu0
        %v1847 = vadd.f32 0.0, %v1846
        %1848 = vdwg.mxu0
        %v1850 = vsel %vm1698, %v1793, 0
        %1852 = vmatpush.msra.mxu0 0.0
        %1853 = vmatpush.msra.mxu0 0.0
        %1854 = vmatpush.msra.mxu0 0.0
        %1855 = vmatpush.msra.mxu0 0.0
        %1856 = vmatpush.msra.mxu0 0.0
        %1857 = vmatpush.msra.mxu0 0.0
        %1858 = vmatpush.msra.mxu0 0.0
        %1859 = vmatpush.msra.mxu0 0.0
        %1860 = vmatpush.msra.mxu0 0.0
        %1861 = vmatpush.msra.mxu0 0.0
        %1862 = vmatpush.msra.mxu0 0.0
        %1863 = vmatpush.msra.mxu0 0.0
        %1864 = vmatpush.msra.mxu0 0.0
        %1865 = vmatpush.msra.mxu0 0.0
        %1866 = vmatpush.msra.mxu0 %v1800
        %1867 = vmatpush.msra.mxu0 %v1799
        %1868 = vmatmul.f32.gmra.mxu0 %v1850
        %v1869 = vpop.f32.mrf.mxu0
        %v1870 = vadd.f32 0.0, %v1869
        %1871 = vdwg.mxu0
        %v1873 = vsel %vm1698, %v1794, 0
        %1875 = vmatpush.msra.mxu0 0.0
        %1876 = vmatpush.msra.mxu0 0.0
        %1877 = vmatpush.msra.mxu0 0.0
        %1878 = vmatpush.msra.mxu0 0.0
        %1879 = vmatpush.msra.mxu0 0.0
        %1880 = vmatpush.msra.mxu0 0.0
        %1881 = vmatpush.msra.mxu0 0.0
        %1882 = vmatpush.msra.mxu0 0.0
        %1883 = vmatpush.msra.mxu0 0.0
        %1884 = vmatpush.msra.mxu0 0.0
        %1885 = vmatpush.msra.mxu0 0.0
        %1886 = vmatpush.msra.mxu0 0.0
        %1887 = vmatpush.msra.mxu0 0.0
        %1888 = vmatpush.msra.mxu0 0.0
        %1889 = vmatpush.msra.mxu0 %v1802
        %1890 = vmatpush.msra.mxu0 %v1801
        %1891 = vmatmul.f32.gmra.mxu0 %v1873
        %v1892 = vpop.f32.mrf.mxu0
        %v1893 = vadd.f32 0.0, %v1892
        %1894 = vdwg.mxu0
        %v1895 = vrot.slane %v1870, 4
        %v1896 = vsel %vm1460, %v1895, %v1824
        %v1897 = vrot.slane %v1824, 4
        %v1898 = vsel %vm1460, %v1870, %v1897
        %v1900 = vunpack.c.l.s4 1983009808
        %v1901 = vunpack.c.0.s8 %v1900
        %v1902 = vperm.slane %v1896, %v1901
        %v1904 = vunpack.c.l.s4 1983009808
        %v1905 = vunpack.c.0.s8 %v1904
        %v1906 = vperm.slane %v1898, %v1905
        %v1907 = vrot.slane %v1893, 4
        %v1908 = vsel %vm1460, %v1907, %v1847
        %v1909 = vrot.slane %v1847, 4
        %v1910 = vsel %vm1460, %v1893, %v1909
        %v1912 = vunpack.c.l.s4 1983009808
        %v1913 = vunpack.c.0.s8 %v1912
        %v1914 = vperm.slane %v1908, %v1913
        %v1916 = vunpack.c.l.s4 1983009808
        %v1917 = vunpack.c.0.s8 %v1916
        %v1918 = vperm.slane %v1910, %v1917
        %v1919 = vrot.slane %v1914, 4
        %v1920 = vsel %vm1460, %v1919, %v1902
        %v1921 = vrot.slane %v1902, 4
        %v1922 = vsel %vm1460, %v1914, %v1921
        %v1924 = vunpack.c.l.s4 1934713408
        %v1925 = vunpack.c.0.s8 %v1924
        %v1926 = vperm.slane %v1920, %v1925
        %v1928 = vunpack.c.l.s4 1934713408
        %v1929 = vunpack.c.0.s8 %v1928
        %v1930 = vperm.slane %v1922, %v1929
        %v1931 = vrot.slane %v1918, 4
        %v1932 = vsel %vm1460, %v1931, %v1906
        %v1933 = vrot.slane %v1906, 4
        %v1934 = vsel %vm1460, %v1918, %v1933
        %v1936 = vunpack.c.l.s4 1934713408
        %v1937 = vunpack.c.0.s8 %v1936
        %v1938 = vperm.slane %v1932, %v1937
        %v1940 = vunpack.c.l.s4 1934713408
        %v1941 = vunpack.c.0.s8 %v1940
        %v1942 = vperm.slane %v1934, %v1941
        %v1943 = vrot.slane %v1926, 4
        %v1944 = vsel %vm1460, 0.0, %v1943
        %v1945 = vrot.slane %v1930, 4
        %v1946 = vsel %vm1460, 0.0, %v1945
        %v1947 = vrot.slane %v1938, 4
        %v1948 = vsel %vm1460, 0.0, %v1947
        %v1949 = vrot.slane %v1942, 4
        %v1950 = vsel %vm1460, 0.0, %v1949
        %v1951 = vsel %vm1460, %v1945, %v1926
        %v1953 = vunpack.c.l.s4 1983009808
        %v1954 = vunpack.c.0.s8 %v1953
        %v1955 = vperm.slane %v1951, %v1954
        %v1956 = vrot.slane %v1946, 4
        %v1957 = vsel %vm1460, %v1956, %v1944
        %v1959 = vunpack.c.l.s4 1983009808
        %v1960 = vunpack.c.0.s8 %v1959
        %v1961 = vperm.slane %v1957, %v1960
        %v1962 = vsel %vm1460, %v1949, %v1938
        %v1964 = vunpack.c.l.s4 1983009808
        %v1965 = vunpack.c.0.s8 %v1964
        %v1966 = vperm.slane %v1962, %v1965
        %v1967 = vrot.slane %v1950, 4
        %v1968 = vsel %vm1460, %v1967, %v1948
        %v1970 = vunpack.c.l.s4 1983009808
        %v1971 = vunpack.c.0.s8 %v1970
        %v1972 = vperm.slane %v1968, %v1971
        %v1973 = vrot.slane %v1961, 4
        %v1974 = vsel %vm1460, %v1973, %v1955
        %v1975 = vrot.slane %v1955, 4
        %v1976 = vsel %vm1460, %v1961, %v1975
        %v1978 = vunpack.c.l.s4 1934713408
        %v1979 = vunpack.c.0.s8 %v1978
        %v1980 = vperm.slane %v1974, %v1979
        %v1982 = vunpack.c.l.s4 1934713408
        %v1983 = vunpack.c.0.s8 %v1982
        %v1984 = vperm.slane %v1976, %v1983
        %v1985 = vrot.slane %v1972, 4
        %v1986 = vsel %vm1460, %v1985, %v1966
        %v1987 = vrot.slane %v1966, 4
        %v1988 = vsel %vm1460, %v1972, %v1987
        %v1990 = vunpack.c.l.s4 1934713408
        %v1991 = vunpack.c.0.s8 %v1990
        %v1992 = vperm.slane %v1986, %v1991
        %v1994 = vunpack.c.l.s4 1934713408
        %v1995 = vunpack.c.0.s8 %v1994
        %v1996 = vperm.slane %v1988, %v1995
        %v1997 = vrot.slane %v1992, 4
        %v1998 = vsel %vm1460, %v1997, %v1980
        %v1999 = vrot.slane %v1980, 4
        %v2000 = vsel %vm1460, %v1992, %v1999
        %v2001 = vrot.slane %v1996, 4
        %v2002 = vsel %vm1460, %v2001, %v1984
        %v2003 = vrot.slane %v1984, 4
        %v2004 = vsel %vm1460, %v1996, %v2003
        %2006 = vrot.lane.b32.xlu0 %v2000, 8
        %v2007 = vpop.permute.xlu0 %2006
        %2010 = vrot.lane.b32.xlu0 %v2002, 16
        %v2011 = vpop.permute.xlu0 %2010
        %2014 = vrot.lane.b32.xlu0 %v2004, 24
        %v2015 = vpop.permute.xlu0 %2014
        %v2017 = vsel %vm1581, %v1998, %v2007
        %v2018 = vsel %vm1698, %v2017, %v2011
        %vm2019 = vcmask 195584
        %v2020 = vsel %vm2019, %v2018, %v2015
        %v2021 = vld [vmem:[#allocation9] sm:$0xff]
        %v2022 = vld [vmem:[#allocation9 + $0x8] sm:$0xff]
        %v2023 = vld [vmem:[#allocation9 + $0x10] sm:$0xff]
        %v2024 = vld [vmem:[#allocation9 + $0x18] sm:$0xff]
        %v2025 = vld [vmem:[%s9] sm:$0x1]
        %v2027 = vperm.slane %v2025, 0
        %v2030 = vsel %vm1356, %v2020, 0
        %2032 = vmatpush.msra.mxu0 0.0
        %2033 = vmatpush.msra.mxu0 0.0
        %2034 = vmatpush.msra.mxu0 0.0
        %2035 = vmatpush.msra.mxu0 0.0
        %2036 = vmatpush.msra.mxu0 0.0
        %2037 = vmatpush.msra.mxu0 0.0
        %2038 = vmatpush.msra.mxu0 0.0
        %2039 = vmatpush.msra.mxu0 0.0
        %2040 = vmatpush.msra.mxu0 0.0
        %2041 = vmatpush.msra.mxu0 0.0
        %2042 = vmatpush.msra.mxu0 0.0
        %2043 = vmatpush.msra.mxu0 0.0
        %2044 = vmatpush.msra.mxu0 %v2024
        %2045 = vmatpush.msra.mxu0 %v2023
        %2046 = vmatpush.msra.mxu0 %v2022
        %2047 = vmatpush.msra.mxu0 %v2021
        %2048 = vmatmul.f32.gmra.mxu0 %v2030
        %v2049 = vpop.f32.mrf.mxu0
        %v2050 = vadd.f32 %v2027, %v2049
        %2051 = vdwg.mxu0
        %v2052 = vadd.f32 %v1353, %v2050
        %v2053 = vld [vmem:[%s16] sm:$0x1]
        %v2054 = vld [vmem:[%s17] sm:$0x1]
        %v2055 = vsel %vm1356, %v2052, 0.0
        %2056 = vadd.xlane.f32.xlu0 %v2055
        %v2057 = vpop.xlane.xlu0 %2056
        %v2058 = vmul.f32 %v2057, %v1366
        %v2059 = vsub.f32 %v2052, %v2058
        %v2060 = vmul.f32 %v2059, %v2059
        %v2061 = vsel %vm1356, %v2060, 0.0
        %2062 = vadd.xlane.f32.xlu0 %v2061
        %v2063 = vpop.xlane.xlu0 %2062
        %v2064 = vmul.f32 %v2063, %v1379
        %v2065 = vrsqrt.pop %v2064
        %v2066 = vmul.f32 %v2065, %v2064
        %v2067 = vmul.f32 %v2066, %v2065
        %v2068 = vmul.f32 0.5, %v2067
        %v2069 = vsub.f32 1.5, %v2068
        %v2070 = vmul.f32 %v2065, %v2069
        %v2071 = vmul.f32 %v2064, %v2070
        %vm2072 = vcmp.eq.f32.partialorder %v2064, inf
        %v2073 = vsel %vm2072, %v2064, %v2071
        %vm2074 = vcmp.eq.f32.partialorder %v2064, 0.0
        %v2075 = vand.u32 %v2064, 2147483648
        %v2076 = vsel %vm2074, %v2075, %v2073
        %v2078 = vperm.slane %v2053, 0
        %v2080 = vmul.f32 %v2078, %v2059
        %v2081 = vadd.f32 %v2076, 1e-06
        %v2082 = vrcp.pop %v2081
        %v2083 = vmul.f32 %v2081, %v2082
        %v2084 = vsub.f32 1.0, %v2083
        %v2085 = vmul.f32 %v2082, %v2084
        %v2086 = vadd.f32 %v2082, %v2085
        %vm2087 = vweird.f32 %v2081
        %vm2088 = vweird.f32 %v2082
        %vm2089 = vmor %vm2087, %vm2088
        %v2090 = vsel %vm2089, %v2082, %v2086
        %v2091 = vand.u32 2147483647, %v2081
        %vm2092 = vcmp.eq.f32.partialorder %v2091, 8.507059e+37
        %v2093 = vand.u32 %v2081, 2147483648
        %v2094 = vor.u32 1.1754944e-38, %v2093
        %v2095 = vsel %vm2092, %v2094, %v2090
        %v2096 = vmul.f32 %v2080, %v2095
        %v2098 = vperm.slane %v2054, 0
        %v2100 = vadd.f32 %v2096, %v2098
        %v2101 = vld [vmem:[%s13] sm:$0x1]
        %v2103 = vperm.slane %v2101, 0
        %v2105 = vadd.f32 %v2052, %v2103
        %v2106 = vld [vmem:[#allocation10] sm:$0xff]
        %v2107 = vld [vmem:[#allocation10 + $0x8] sm:$0xff]
        %v2108 = vld [vmem:[#allocation10 + $0x10] sm:$0xff]
        %v2109 = vld [vmem:[#allocation10 + $0x18] sm:$0xff]
        %v2110 = vld [vmem:[%s11] sm:$0x1]
        %v2112 = vperm.slane %v2110, 0
        %v2115 = vsel %vm1356, %v2100, 0
        %2117 = vmatpush.msra.mxu0 0.0
        %2118 = vmatpush.msra.mxu0 0.0
        %2119 = vmatpush.msra.mxu0 0.0
        %2120 = vmatpush.msra.mxu0 0.0
        %2121 = vmatpush.msra.mxu0 0.0
        %2122 = vmatpush.msra.mxu0 0.0
        %2123 = vmatpush.msra.mxu0 0.0
        %2124 = vmatpush.msra.mxu0 0.0
        %2125 = vmatpush.msra.mxu0 0.0
        %2126 = vmatpush.msra.mxu0 0.0
        %2127 = vmatpush.msra.mxu0 0.0
        %2128 = vmatpush.msra.mxu0 0.0
        %2129 = vmatpush.msra.mxu0 %v2109
        %2130 = vmatpush.msra.mxu0 %v2108
        %2131 = vmatpush.msra.mxu0 %v2107
        %2132 = vmatpush.msra.mxu0 %v2106
        %2133 = vmatmul.f32.gmra.mxu0 %v2115
        %v2134 = vpop.f32.mrf.mxu0
        %v2135 = vadd.f32 %v2112, %v2134
        %2136 = vdwg.mxu0
        %v2137 = vmax.f32 %v2135, 0.0
        %v2138 = vld [vmem:[%s12] sm:$0xff]
        %v2139 = vld [vmem:[%s12 + $0x8] sm:$0xff]
        %v2140 = vld [vmem:[%s12 + $0x10] sm:$0xff]
        %v2141 = vld [vmem:[%s12 + $0x18] sm:$0xff]
        %v2142 = vld [vmem:[%s12 + $0x20] sm:$0xff]
        %v2143 = vld [vmem:[%s12 + $0x28] sm:$0xff]
        %v2144 = vld [vmem:[%s12 + $0x30] sm:$0xff]
        %v2145 = vld [vmem:[%s12 + $0x38] sm:$0xff]
        %vm2146 = vcmask 523264
        %v2148 = vsel %vm2146, %v2137, 0
        %2150 = vmatpush.msra.mxu0 0.0
        %2151 = vmatpush.msra.mxu0 0.0
        %2152 = vmatpush.msra.mxu0 0.0
        %2153 = vmatpush.msra.mxu0 0.0
        %2154 = vmatpush.msra.mxu0 0.0
        %2155 = vmatpush.msra.mxu0 0.0
        %2156 = vmatpush.msra.mxu0 0.0
        %2157 = vmatpush.msra.mxu0 0.0
        %2158 = vmatpush.msra.mxu0 %v2145
        %2159 = vmatpush.msra.mxu0 %v2144
        %2160 = vmatpush.msra.mxu0 %v2143
        %2161 = vmatpush.msra.mxu0 %v2142
        %2162 = vmatpush.msra.mxu0 %v2141
        %2163 = vmatpush.msra.mxu0 %v2140
        %2164 = vmatpush.msra.mxu0 %v2139
        %2165 = vmatpush.msra.mxu0 %v2138
        %2166 = vmatmul.f32.gmra.mxu0 %v2148
        %v2167 = vpop.f32.mrf.mxu0
        %v2168 = vadd.f32 0.0, %v2167
        %2169 = vdwg.mxu0
        %v2170 = vadd.f32 %v2105, %v2168
        %2171 = vst.msk [vmem:[%s667] sm:$0xff] %vm1356, %v2170
        %s2172 = sand.u32 %s447, 1
        %s2173 = scalar_lea.sflag [#allocation6], %s2172
        %s2174 = sand.u32 %s447, 1
        %s2175 = smul.addr %s2174, 8
        %s2176 = scalar_lea.vmem [#allocation12], %s2175
        // Predicated region
        $region113: #{tpu_custom_call.1} parent=91 // pred_check
          %p2177 = pneg %p457
        $region114: #{tpu_custom_call.1} parent=91 // pred_check_branch
          %2179 = sbr.rel (%p2177) target = $region116
        $region115: #{tpu_custom_call.1} parent=91 // pred_region
          %2181 = vsyncadd %s2173, 0
          %s2182 = smul.addr %s41, 2
          %s2183 = sadd.s32 %s42, %s2182
          %s2184 = smul.addr %s2183, 8
          %s2185 = scalar_lea.hbm %s18, %s2184
          %s2187 = sshll.u32 %s2176, 4
          %s2188 = int_to_ptr.vmem [resolvable:$true] %s2187
          %s2189 = sshll.u32 %s2185, 4
          %s2190 = int_to_ptr.hbm [resolvable:$true] %s2189
          %2192 = dma.vmem_to_hbm [thread:$0]  %s2188, 128, %s2190, %s2173
        $region116: #{tpu_custom_call.1} parent=91 // pred_fallthru
          _
      $region92: #{tpu_custom_call.1} parent=5 // pred_fallthru
        _
      %p2193 = scmp.le.s32.totalorder 2, %s32
      // Predicated region
      $region117: #{tpu_custom_call.1} parent=5 // pred_check
        %p2194 = pneg %p2193
      $region118: #{tpu_custom_call.1} parent=5 // pred_check_branch
        %2196 = sbr.rel (%p2194) target = $region120
      $region119: #{tpu_custom_call.1} parent=5 // pred_region
        %s2197 = ssub.s32 %s32, 2
        // Predicated region
        $region121: #{tpu_custom_call.1} parent=119 // pred_check
          %p2198 = pneg %p463
        $region122: #{tpu_custom_call.1} parent=119 // pred_check_branch
          %2200 = sbr.rel (%p2198) target = $region124
        $region123: #{tpu_custom_call.1} parent=119 // pred_region
          %s2201 = sand.u32 %s448, 1
          %s2202 = scalar_lea.sflag [#allocation6], %s2201
          %s2203 = sand.u32 %s448, 1
          %s2204 = smul.addr %s2203, 8
          %s2205 = scalar_lea.vmem [#allocation12], %s2204
          %2207 = dma.done %s2202, 128
        $region124: #{tpu_custom_call.1} parent=119 // pred_fallthru
          _
      $region120: #{tpu_custom_call.1} parent=5 // pred_fallthru
        _
    $region6: #{tpu_custom_call.1} parent=1 // loop_footer
      %s36 = sadd.s32 1, %s32
    $region7: #{tpu_custom_call.1} parent=1 // loop_footer_branch
      %31 = sbr.rel target = $region3
    $region8: #{tpu_custom_call.1} parent=1 // loop_exit
      _
    %2208 = vsyncpa [#allocation5], 1
    %s2209 = scalar_lea.sflag [#allocation5], 1
    %2210 = vsyncpa %s2209, 1
    %2211 = vsyncpa [#allocation8], 1
    %2212 = vsyncpa [#allocation11], 1
    %2213 = vsyncpa [#allocation6], 1
    %s2214 = scalar_lea.sflag [#allocation6], 1
    %2215 = vsyncpa %s2214, 1

// kernel: tpu_custom_call.1
$region0: #{tpu_custom_call.1}
  #allocation0 [shape = 'u32[]', space=smem, size = 0x4, offset = 0x4, fixed_abs, tag = 'smem constant byte address 0x4 - core index']
  #allocation1 [shape = 'u32[72,128]{1,0:T(1,128)}', space=vmem, size = 0x9000, scoped, tag = 'internal scratch']
  #allocation2 [shape = 'f32[4,16,8]{2,1,0:T(8,128)}', space=vmem, size = 0x8000, scoped, tag = 'scratch operand']
  #allocation3 [shape = 'f32[4,16,8]{2,1,0:T(8,128)}', space=vmem, size = 0x8000, scoped, tag = 'scratch operand']
  %s0 = inlined_call_operand.vmem [shape: f32[2,16,32], index: 0, kind: input, shape index: {}]
  %s1 = inlined_call_operand.hbm [shape: f32[2,1,16], index: 1, kind: input, shape index: {}]
  %s2 = inlined_call_operand.vmem [shape: f32[32,32], index: 2, kind: input, shape index: {}]
  %s3 = inlined_call_operand.vmem [shape: f32[1,32], index: 3, kind: input, shape index: {}]
  %s4 = inlined_call_operand.vmem [shape: f32[32,32], index: 4, kind: input, shape index: {}]
  %s5 = inlined_call_operand.vmem [shape: f32[1,32], index: 5, kind: input, shape index: {}]
  %s6 = inlined_call_operand.hbm [shape: f32[32,32], index: 6, kind: input, shape index: {}]
  %s7 = inlined_call_operand.vmem [shape: f32[1,32], index: 7, kind: input, shape index: {}]
  %s8 = inlined_call_operand.hbm [shape: f32[32,32], index: 8, kind: input, shape index: {}]
  %s9 = inlined_call_operand.vmem [shape: f32[1,32], index: 9, kind: input, shape index: {}]
  %s10 = inlined_call_operand.hbm [shape: f32[32,64], index: 10, kind: input, shape index: {}]
  %s11 = inlined_call_operand.vmem [shape: f32[1,64], index: 11, kind: input, shape index: {}]
  %s12 = inlined_call_operand.vmem [shape: f32[64,32], index: 12, kind: input, shape index: {}]
  %s13 = inlined_call_operand.vmem [shape: f32[1,32], index: 13, kind: input, shape index: {}]
  %s14 = inlined_call_operand.vmem [shape: f32[1,32], index: 14, kind: input, shape index: {}]
  %s15 = inlined_call_operand.vmem [shape: f32[1,32], index: 15, kind: input, shape index: {}]
  %s16 = inlined_call_operand.vmem [shape: f32[1,32], index: 16, kind: input, shape index: {}]
  %s17 = inlined_call_operand.vmem [shape: f32[1,32], index: 17, kind: input, shape index: {}]
  %s18 = inlined_call_operand.hbm [shape: f32[2,16,32], index: 18, kind: output, shape index: {}]
  %s19 = sld [smem:[#allocation0]]
  $region125: #{tpu_custom_call.1} parent=0
    _
  %s21 = ssub.s32 1, %s19
  %s22 = scalar_select 0, %s21, %s19
  $region1: #{tpu_custom_call.1} parent=0
    #allocation4 [shape = 'u8[1024]{0}', space=vmem, size = 0x400, scoped, tag = 'input window, operand 1']
    #allocation5 [shape = 's32[2]{0}', space=sflag, size = 0x8, scoped, tag = 'scoped memory for tpu_custom_call.1']
    #allocation6 [shape = 's32[2]{0}', space=sflag, size = 0x8, scoped, tag = 'scoped memory for tpu_custom_call.1']
    #allocation7 [shape = 'u8[16384]{0}', space=vmem, size = 0x4000, scoped, tag = 'input window, operand 6, single buffered']
    #allocation8 [shape = 's32[1]{0}', space=sflag, size = 0x4, scoped, tag = 'scoped memory for tpu_custom_call.1']
    #allocation9 [shape = 'u8[16384]{0}', space=vmem, size = 0x4000, scoped, tag = 'input window, operand 8, single buffered']
    #allocation10 [shape = 'u8[16384]{0}', space=vmem, size = 0x4000, scoped, tag = 'input window, operand 10, single buffered']
    #allocation11 [shape = 's32[1]{0}', space=sflag, size = 0x4, scoped, tag = 'scoped memory for tpu_custom_call.1']
    #allocation12 [shape = 'u8[8192]{0}', space=vmem, size = 0x2000, scoped, tag = 'output window, operand 0']
    %23 = vsyncpa [#allocation5], 0
    %s24 = scalar_lea.sflag [#allocation5], 1
    %25 = vsyncpa %s24, 0
    %26 = vsyncpa [#allocation8], 0
    %27 = vsyncpa [#allocation11], 0
    %28 = vsyncpa [#allocation6], 0
    %s29 = scalar_lea.sflag [#allocation6], 1
    %30 = vsyncpa %s29, 0
    loop: start=0, step=1, limit=6
    $region2: #{tpu_custom_call.1} parent=1 // loop_pre_header
      _
    $region3: #{tpu_custom_call.1} parent=1 // loop_header
      %s32 = sphi 0, %s36
      %p33 = scmp.ge.s32.totalorder %s32, 6
      %s39 = sphi 0, %s51
      %s40 = sphi 0, %s47
      %s41 = sphi 0, %s39
      %s42 = sphi 0, %s40
      %s43 = sphi 0, %s41
      %s44 = sphi 0, %s42
      %s54 = sphi 0, %s56
      %s57 = sphi 0, %s54
      %s58 = sphi 0, %s57
      %s74 = sphi 0, %s58
      %s80 = sphi 0, %s82
      %s83 = sphi 0, %s80
      %s84 = sphi 0, %s83
      %s100 = sphi 0, %s84
      %s104 = sphi 0, %s104
      %s106 = sphi 0, %s104
      %s107 = sphi 0, %s106
      %s121 = sphi 0, %s107
      %s125 = sphi 0, %s125
      %s127 = sphi 0, %s125
      %s128 = sphi 0, %s127
      %s142 = sphi 0, %s128
      %s146 = sphi 0, %s146
      %s148 = sphi 0, %s146
      %s149 = sphi 0, %s148
      %s163 = sphi 0, %s149
      %s167 = sphi 0, %s167
      %s169 = sphi 0, %s167
      %s170 = sphi 0, %s169
      %s184 = sphi 0, %s170
      %s188 = sphi 0, %s188
      %s190 = sphi 0, %s188
      %s191 = sphi 0, %s190
      %s205 = sphi 0, %s191
      %s209 = sphi 0, %s209
      %s211 = sphi 0, %s209
      %s212 = sphi 0, %s211
      %s226 = sphi 0, %s212
      %s230 = sphi 0, %s230
      %s232 = sphi 0, %s230
      %s233 = sphi 0, %s232
      %s247 = sphi 0, %s233
      %s251 = sphi 0, %s251
      %s253 = sphi 0, %s251
      %s254 = sphi 0, %s253
      %s268 = sphi 0, %s254
      %s272 = sphi 0, %s272
      %s274 = sphi 0, %s272
      %s275 = sphi 0, %s274
      %s289 = sphi 0, %s275
      %s293 = sphi 0, %s293
      %s295 = sphi 0, %s293
      %s296 = sphi 0, %s295
      %s310 = sphi 0, %s296
      %s314 = sphi 0, %s314
      %s316 = sphi 0, %s314
      %s317 = sphi 0, %s316
      %s331 = sphi 0, %s317
      %s335 = sphi 0, %s335
      %s337 = sphi 0, %s335
      %s338 = sphi 0, %s337
      %s352 = sphi 0, %s338
      %s356 = sphi 0, %s356
      %s358 = sphi 0, %s356
      %s359 = sphi 0, %s358
      %s373 = sphi 0, %s359
      %s377 = sphi 0, %s377
      %s379 = sphi 0, %s377
      %s380 = sphi 0, %s379
      %s394 = sphi 0, %s380
      %s398 = sphi 0, %s398
      %s400 = sphi 0, %s398
      %s401 = sphi 0, %s400
      %s415 = sphi 0, %s401
      %s419 = sphi 0, %s419
      %s421 = sphi 0, %s419
      %s422 = sphi 0, %s421
      %s436 = sphi 0, %s422
      %s444 = sphi 0, %s446
      %s447 = sphi 0, %s444
      %s448 = sphi 0, %s447
      %s464 = sphi 0, %s448
    $region4: #{tpu_custom_call.1} parent=1 // loop_header_branch
      %35 = sbr.rel (%p33) target = $region8
    $region5: #{tpu_custom_call.1} parent=1 // loop_body
      %s37 = ssub.s32 %s32, 1
      %s38 = ssub.s32 %s32, 2
      %s45 = sadd.s32 1, %s40
      %p46 = scmp.ge.s32.totalorder %s45, 2
      %s47 = scalar_select %p46, 0, %s45
      %s48 = sadd.s32 1, %s39
      %s49 = scalar_select %p46, %s48, %s39
      %p50 = scmp.ge.s32.totalorder %s49, 2
      %s51 = scalar_select %p50, 0, %s49
      %s52 = ssub.s32 %s39, %s51
      %p53 = scmp.eq.s32.totalorder %s52, 0
      %s55 = sadd.s32 %s54, 1
      %s56 = scalar_select %p53, %s54, %s55
      %p59 = pneg %p53
      %p60 = scmp.eq.s32.totalorder %s32, 3
      %p61 = por %p59, %p60
      %p62 = scmp.ne.s32.totalorder %s54, %s57
      %p63 = scmp.eq.s32.totalorder %s32, 0
      %p64 = por %p62, %p63
      %p65 = scmp.ne.s32.totalorder %s54, %s57
      %p66 = scmp.eq.s32.totalorder %s37, 3
      %p67 = por %p65, %p66
      %p68 = scmp.ne.s32.totalorder %s57, %s58
      %p69 = scmp.eq.s32.totalorder %s37, 0
      %p70 = por %p68, %p69
      %p71 = scmp.ne.s32.totalorder %s57, %s58
      %p72 = scmp.eq.s32.totalorder %s38, 3
      %p73 = por %p71, %p72
      %p75 = scmp.ne.s32.totalorder %s58, %s74
      %p76 = scmp.eq.s32.totalorder %s38, 0
      %p77 = por %p75, %p76
      %s78 = ssub.s32 %s39, %s51
      %p79 = scmp.eq.s32.totalorder %s78, 0
      %s81 = sadd.s32 %s80, 1
      %s82 = scalar_select %p79, %s80, %s81
      %p85 = pneg %p79
      %p86 = scmp.eq.s32.totalorder %s32, 3
      %p87 = por %p85, %p86
      %p88 = scmp.ne.s32.totalorder %s80, %s83
      %p89 = scmp.eq.s32.totalorder %s32, 0
      %p90 = por %p88, %p89
      %p91 = scmp.ne.s32.totalorder %s80, %s83
      %p92 = scmp.eq.s32.totalorder %s37, 3
      %p93 = por %p91, %p92
      %p94 = scmp.ne.s32.totalorder %s83, %s84
      %p95 = scmp.eq.s32.totalorder %s37, 0
      %p96 = por %p94, %p95
      %p97 = scmp.ne.s32.totalorder %s83, %s84
      %p98 = scmp.eq.s32.totalorder %s38, 3
      %p99 = por %p97, %p98
      %p101 = scmp.ne.s32.totalorder %s84, %s100
      %p102 = scmp.eq.s32.totalorder %s38, 0
      %p103 = por %p101, %p102
      %s105 = sadd.s32 %s104, 1
      %p108 = scmp.eq.s32.totalorder %s32, 3
      %p109 = scmp.ne.s32.totalorder %s104, %s106
      %p110 = scmp.eq.s32.totalorder %s32, 0
      %p111 = por %p109, %p110
      %p112 = scmp.ne.s32.totalorder %s104, %s106
      %p113 = scmp.eq.s32.totalorder %s37, 3
      %p114 = por %p112, %p113
      %p115 = scmp.ne.s32.totalorder %s106, %s107
      %p116 = scmp.eq.s32.totalorder %s37, 0
      %p117 = por %p115, %p116
      %p118 = scmp.ne.s32.totalorder %s106, %s107
      %p119 = scmp.eq.s32.totalorder %s38, 3
      %p120 = por %p118, %p119
      %p122 = scmp.ne.s32.totalorder %s107, %s121
      %p123 = scmp.eq.s32.totalorder %s38, 0
      %p124 = por %p122, %p123
      %s126 = sadd.s32 %s125, 1
      %p129 = scmp.eq.s32.totalorder %s32, 3
      %p130 = scmp.ne.s32.totalorder %s125, %s127
      %p131 = scmp.eq.s32.totalorder %s32, 0
      %p132 = por %p130, %p131
      %p133 = scmp.ne.s32.totalorder %s125, %s127
      %p134 = scmp.eq.s32.totalorder %s37, 3
      %p135 = por %p133, %p134
      %p136 = scmp.ne.s32.totalorder %s127, %s128
      %p137 = scmp.eq.s32.totalorder %s37, 0
      %p138 = por %p136, %p137
      %p139 = scmp.ne.s32.totalorder %s127, %s128
      %p140 = scmp.eq.s32.totalorder %s38, 3
      %p141 = por %p139, %p140
      %p143 = scmp.ne.s32.totalorder %s128, %s142
      %p144 = scmp.eq.s32.totalorder %s38, 0
      %p145 = por %p143, %p144
      %s147 = sadd.s32 %s146, 1
      %p150 = scmp.eq.s32.totalorder %s32, 3
      %p151 = scmp.ne.s32.totalorder %s146, %s148
      %p152 = scmp.eq.s32.totalorder %s32, 0
      %p153 = por %p151, %p152
      %p154 = scmp.ne.s32.totalorder %s146, %s148
      %p155 = scmp.eq.s32.totalorder %s37, 3
      %p156 = por %p154, %p155
      %p157 = scmp.ne.s32.totalorder %s148, %s149
      %p158 = scmp.eq.s32.totalorder %s37, 0
      %p159 = por %p157, %p158
      %p160 = scmp.ne.s32.totalorder %s148, %s149
      %p161 = scmp.eq.s32.totalorder %s38, 3
      %p162 = por %p160, %p161
      %p164 = scmp.ne.s32.totalorder %s149, %s163
      %p165 = scmp.eq.s32.totalorder %s38, 0
      %p166 = por %p164, %p165
      %s168 = sadd.s32 %s167, 1
      %p171 = scmp.eq.s32.totalorder %s32, 3
      %p172 = scmp.ne.s32.totalorder %s167, %s169
      %p173 = scmp.eq.s32.totalorder %s32, 0
      %p174 = por %p172, %p173
      %p175 = scmp.ne.s32.totalorder %s167, %s169
      %p176 = scmp.eq.s32.totalorder %s37, 3
      %p177 = por %p175, %p176
      %p178 = scmp.ne.s32.totalorder %s169, %s170
      %p179 = scmp.eq.s32.totalorder %s37, 0
      %p180 = por %p178, %p179
      %p181 = scmp.ne.s32.totalorder %s169, %s170
      %p182 = scmp.eq.s32.totalorder %s38, 3
      %p183 = por %p181, %p182
      %p185 = scmp.ne.s32.totalorder %s170, %s184
      %p186 = scmp.eq.s32.totalorder %s38, 0
      %p187 = por %p185, %p186
      %s189 = sadd.s32 %s188, 1
      %p192 = scmp.eq.s32.totalorder %s32, 3
      %p193 = scmp.ne.s32.totalorder %s188, %s190
      %p194 = scmp.eq.s32.totalorder %s32, 0
      %p195 = por %p193, %p194
      %p196 = scmp.ne.s32.totalorder %s188, %s190
      %p197 = scmp.eq.s32.totalorder %s37, 3
      %p198 = por %p196, %p197
      %p199 = scmp.ne.s32.totalorder %s190, %s191
      %p200 = scmp.eq.s32.totalorder %s37, 0
      %p201 = por %p199, %p200
      %p202 = scmp.ne.s32.totalorder %s190, %s191
      %p203 = scmp.eq.s32.totalorder %s38, 3
      %p204 = por %p202, %p203
      %p206 = scmp.ne.s32.totalorder %s191, %s205
      %p207 = scmp.eq.s32.totalorder %s38, 0
      %p208 = por %p206, %p207
      %s210 = sadd.s32 %s209, 1
      %p213 = scmp.eq.s32.totalorder %s32, 3
      %p214 = scmp.ne.s32.totalorder %s209, %s211
      %p215 = scmp.eq.s32.totalorder %s32, 0
      %p216 = por %p214, %p215
      %p217 = scmp.ne.s32.totalorder %s209, %s211
      %p218 = scmp.eq.s32.totalorder %s37, 3
      %p219 = por %p217, %p218
      %p220 = scmp.ne.s32.totalorder %s211, %s212
      %p221 = scmp.eq.s32.totalorder %s37, 0
      %p222 = por %p220, %p221
      %p223 = scmp.ne.s32.totalorder %s211, %s212
      %p224 = scmp.eq.s32.totalorder %s38, 3
      %p225 = por %p223, %p224
      %p227 = scmp.ne.s32.totalorder %s212, %s226
      %p228 = scmp.eq.s32.totalorder %s38, 0
      %p229 = por %p227, %p228
      %s231 = sadd.s32 %s230, 1
      %p234 = scmp.eq.s32.totalorder %s32, 3
      %p235 = scmp.ne.s32.totalorder %s230, %s232
      %p236 = scmp.eq.s32.totalorder %s32, 0
      %p237 = por %p235, %p236
      %p238 = scmp.ne.s32.totalorder %s230, %s232
      %p239 = scmp.eq.s32.totalorder %s37, 3
      %p240 = por %p238, %p239
      %p241 = scmp.ne.s32.totalorder %s232, %s233
      %p242 = scmp.eq.s32.totalorder %s37, 0
      %p243 = por %p241, %p242
      %p244 = scmp.ne.s32.totalorder %s232, %s233
      %p245 = scmp.eq.s32.totalorder %s38, 3
      %p246 = por %p244, %p245
      %p248 = scmp.ne.s32.totalorder %s233, %s247
      %p249 = scmp.eq.s32.totalorder %s38, 0
      %p250 = por %p248, %p249
      %s252 = sadd.s32 %s251, 1
      %p255 = scmp.eq.s32.totalorder %s32, 3
      %p256 = scmp.ne.s32.totalorder %s251, %s253
      %p257 = scmp.eq.s32.totalorder %s32, 0
      %p258 = por %p256, %p257
      %p259 = scmp.ne.s32.totalorder %s251, %s253
      %p260 = scmp.eq.s32.totalorder %s37, 3
      %p261 = por %p259, %p260
      %p262 = scmp.ne.s32.totalorder %s253, %s254
      %p263 = scmp.eq.s32.totalorder %s37, 0
      %p264 = por %p262, %p263
      %p265 = scmp.ne.s32.totalorder %s253, %s254
      %p266 = scmp.eq.s32.totalorder %s38, 3
      %p267 = por %p265, %p266
      %p269 = scmp.ne.s32.totalorder %s254, %s268
      %p270 = scmp.eq.s32.totalorder %s38, 0
      %p271 = por %p269, %p270
      %s273 = sadd.s32 %s272, 1
      %p276 = scmp.eq.s32.totalorder %s32, 3
      %p277 = scmp.ne.s32.totalorder %s272, %s274
      %p278 = scmp.eq.s32.totalorder %s32, 0
      %p279 = por %p277, %p278
      %p280 = scmp.ne.s32.totalorder %s272, %s274
      %p281 = scmp.eq.s32.totalorder %s37, 3
      %p282 = por %p280, %p281
      %p283 = scmp.ne.s32.totalorder %s274, %s275
      %p284 = scmp.eq.s32.totalorder %s37, 0
      %p285 = por %p283, %p284
      %p286 = scmp.ne.s32.totalorder %s274, %s275
      %p287 = scmp.eq.s32.totalorder %s38, 3
      %p288 = por %p286, %p287
      %p290 = scmp.ne.s32.totalorder %s275, %s289
      %p291 = scmp.eq.s32.totalorder %s38, 0
      %p292 = por %p290, %p291
      %s294 = sadd.s32 %s293, 1
      %p297 = scmp.eq.s32.totalorder %s32, 3
      %p298 = scmp.ne.s32.totalorder %s293, %s295
      %p299 = scmp.eq.s32.totalorder %s32, 0
      %p300 = por %p298, %p299
      %p301 = scmp.ne.s32.totalorder %s293, %s295
      %p302 = scmp.eq.s32.totalorder %s37, 3
      %p303 = por %p301, %p302
      %p304 = scmp.ne.s32.totalorder %s295, %s296
      %p305 = scmp.eq.s32.totalorder %s37, 0
      %p306 = por %p304, %p305
      %p307 = scmp.ne.s32.totalorder %s295, %s296
      %p308 = scmp.eq.s32.totalorder %s38, 3
      %p309 = por %p307, %p308
      %p311 = scmp.ne.s32.totalorder %s296, %s310
      %p312 = scmp.eq.s32.totalorder %s38, 0
      %p313 = por %p311, %p312
      %s315 = sadd.s32 %s314, 1
      %p318 = scmp.eq.s32.totalorder %s32, 3
      %p319 = scmp.ne.s32.totalorder %s314, %s316
      %p320 = scmp.eq.s32.totalorder %s32, 0
      %p321 = por %p319, %p320
      %p322 = scmp.ne.s32.totalorder %s314, %s316
      %p323 = scmp.eq.s32.totalorder %s37, 3
      %p324 = por %p322, %p323
      %p325 = scmp.ne.s32.totalorder %s316, %s317
      %p326 = scmp.eq.s32.totalorder %s37, 0
      %p327 = por %p325, %p326
      %p328 = scmp.ne.s32.totalorder %s316, %s317
      %p329 = scmp.eq.s32.totalorder %s38, 3
      %p330 = por %p328, %p329
      %p332 = scmp.ne.s32.totalorder %s317, %s331
      %p333 = scmp.eq.s32.totalorder %s38, 0
      %p334 = por %p332, %p333
      %s336 = sadd.s32 %s335, 1
      %p339 = scmp.eq.s32.totalorder %s32, 3
      %p340 = scmp.ne.s32.totalorder %s335, %s337
      %p341 = scmp.eq.s32.totalorder %s32, 0
      %p342 = por %p340, %p341
      %p343 = scmp.ne.s32.totalorder %s335, %s337
      %p344 = scmp.eq.s32.totalorder %s37, 3
      %p345 = por %p343, %p344
      %p346 = scmp.ne.s32.totalorder %s337, %s338
      %p347 = scmp.eq.s32.totalorder %s37, 0
      %p348 = por %p346, %p347
      %p349 = scmp.ne.s32.totalorder %s337, %s338
      %p350 = scmp.eq.s32.totalorder %s38, 3
      %p351 = por %p349, %p350
      %p353 = scmp.ne.s32.totalorder %s338, %s352
      %p354 = scmp.eq.s32.totalorder %s38, 0
      %p355 = por %p353, %p354
      %s357 = sadd.s32 %s356, 1
      %p360 = scmp.eq.s32.totalorder %s32, 3
      %p361 = scmp.ne.s32.totalorder %s356, %s358
      %p362 = scmp.eq.s32.totalorder %s32, 0
      %p363 = por %p361, %p362
      %p364 = scmp.ne.s32.totalorder %s356, %s358
      %p365 = scmp.eq.s32.totalorder %s37, 3
      %p366 = por %p364, %p365
      %p367 = scmp.ne.s32.totalorder %s358, %s359
      %p368 = scmp.eq.s32.totalorder %s37, 0
      %p369 = por %p367, %p368
      %p370 = scmp.ne.s32.totalorder %s358, %s359
      %p371 = scmp.eq.s32.totalorder %s38, 3
      %p372 = por %p370, %p371
      %p374 = scmp.ne.s32.totalorder %s359, %s373
      %p375 = scmp.eq.s32.totalorder %s38, 0
      %p376 = por %p374, %p375
      %s378 = sadd.s32 %s377, 1
      %p381 = scmp.eq.s32.totalorder %s32, 3
      %p382 = scmp.ne.s32.totalorder %s377, %s379
      %p383 = scmp.eq.s32.totalorder %s32, 0
      %p384 = por %p382, %p383
      %p385 = scmp.ne.s32.totalorder %s377, %s379
      %p386 = scmp.eq.s32.totalorder %s37, 3
      %p387 = por %p385, %p386
      %p388 = scmp.ne.s32.totalorder %s379, %s380
      %p389 = scmp.eq.s32.totalorder %s37, 0
      %p390 = por %p388, %p389
      %p391 = scmp.ne.s32.totalorder %s379, %s380
      %p392 = scmp.eq.s32.totalorder %s38, 3
      %p393 = por %p391, %p392
      %p395 = scmp.ne.s32.totalorder %s380, %s394
      %p396 = scmp.eq.s32.totalorder %s38, 0
      %p397 = por %p395, %p396
      %s399 = sadd.s32 %s398, 1
      %p402 = scmp.eq.s32.totalorder %s32, 3
      %p403 = scmp.ne.s32.totalorder %s398, %s400
      %p404 = scmp.eq.s32.totalorder %s32, 0
      %p405 = por %p403, %p404
      %p406 = scmp.ne.s32.totalorder %s398, %s400
      %p407 = scmp.eq.s32.totalorder %s37, 3
      %p408 = por %p406, %p407
      %p409 = scmp.ne.s32.totalorder %s400, %s401
      %p410 = scmp.eq.s32.totalorder %s37, 0
      %p411 = por %p409, %p410
      %p412 = scmp.ne.s32.totalorder %s400, %s401
      %p413 = scmp.eq.s32.totalorder %s38, 3
      %p414 = por %p412, %p413
      %p416 = scmp.ne.s32.totalorder %s401, %s415
      %p417 = scmp.eq.s32.totalorder %s38, 0
      %p418 = por %p416, %p417
      %s420 = sadd.s32 %s419, 1
      %p423 = scmp.eq.s32.totalorder %s32, 3
      %p424 = scmp.ne.s32.totalorder %s419, %s421
      %p425 = scmp.eq.s32.totalorder %s32, 0
      %p426 = por %p424, %p425
      %p427 = scmp.ne.s32.totalorder %s419, %s421
      %p428 = scmp.eq.s32.totalorder %s37, 3
      %p429 = por %p427, %p428
      %p430 = scmp.ne.s32.totalorder %s421, %s422
      %p431 = scmp.eq.s32.totalorder %s37, 0
      %p432 = por %p430, %p431
      %p433 = scmp.ne.s32.totalorder %s421, %s422
      %p434 = scmp.eq.s32.totalorder %s38, 3
      %p435 = por %p433, %p434
      %p437 = scmp.ne.s32.totalorder %s422, %s436
      %p438 = scmp.eq.s32.totalorder %s38, 0
      %p439 = por %p437, %p438
      %s440 = ssub.s32 %s39, %s51
      %s441 = ssub.s32 %s40, %s47
      %s442 = sor.u32 %s440, %s441
      %p443 = scmp.eq.s32.totalorder %s442, 0
      %s445 = sadd.s32 %s444, 1
      %s446 = scalar_select %p443, %s444, %s445
      %p449 = pneg %p443
      %p450 = scmp.eq.s32.totalorder %s32, 3
      %p451 = por %p449, %p450
      %p452 = scmp.ne.s32.totalorder %s444, %s447
      %p453 = scmp.eq.s32.totalorder %s32, 0
      %p454 = por %p452, %p453
      %p455 = scmp.ne.s32.totalorder %s444, %s447
      %p456 = scmp.eq.s32.totalorder %s37, 3
      %p457 = por %p455, %p456
      %p458 = scmp.ne.s32.totalorder %s447, %s448
      %p459 = scmp.eq.s32.totalorder %s37, 0
      %p460 = por %p458, %p459
      %p461 = scmp.ne.s32.totalorder %s447, %s448
      %p462 = scmp.eq.s32.totalorder %s38, 3
      %p463 = por %p461, %p462
      %p465 = scmp.ne.s32.totalorder %s448, %s464
      %p466 = scmp.eq.s32.totalorder %s38, 0
      %p467 = por %p465, %p466
      %p468 = scmp.le.s32.totalorder 1, %s32
      %p469 = scmp.lt.s32.totalorder %s32, 5
      %p470 = pnand %p468, %p469
      %p471 = pneg %p470
      // Predicated region
      $region9: #{tpu_custom_call.1} parent=5 // pred_check
        _
      $region10: #{tpu_custom_call.1} parent=5 // pred_check_branch
        %473 = sbr.rel (%p470) target = $region12
      $region11: #{tpu_custom_call.1} parent=5 // pred_region
        %s474 = ssub.s32 %s32, 1
        // Predicated region
        $region13: #{tpu_custom_call.1} parent=11 // pred_check
          %p475 = pneg %p117
        $region14: #{tpu_custom_call.1} parent=11 // pred_check_branch
          %477 = sbr.rel (%p475) target = $region16
        $region15: #{tpu_custom_call.1} parent=11 // pred_region
          _
        $region16: #{tpu_custom_call.1} parent=11 // pred_fallthru
          _
        // Predicated region
        $region17: #{tpu_custom_call.1} parent=11 // pred_check
          %p478 = pneg %p138
        $region18: #{tpu_custom_call.1} parent=11 // pred_check_branch
          %480 = sbr.rel (%p478) target = $region20
        $region19: #{tpu_custom_call.1} parent=11 // pred_region
          _
        $region20: #{tpu_custom_call.1} parent=11 // pred_fallthru
          _
        // Predicated region
        $region21: #{tpu_custom_call.1} parent=11 // pred_check
          %p481 = pneg %p159
        $region22: #{tpu_custom_call.1} parent=11 // pred_check_branch
          %483 = sbr.rel (%p481) target = $region24
        $region23: #{tpu_custom_call.1} parent=11 // pred_region
          _
        $region24: #{tpu_custom_call.1} parent=11 // pred_fallthru
          _
        // Predicated region
        $region25: #{tpu_custom_call.1} parent=11 // pred_check
          %p484 = pneg %p180
        $region26: #{tpu_custom_call.1} parent=11 // pred_check_branch
          %486 = sbr.rel (%p484) target = $region28
        $region27: #{tpu_custom_call.1} parent=11 // pred_region
          _
        $region28: #{tpu_custom_call.1} parent=11 // pred_fallthru
          _
        // Predicated region
        $region29: #{tpu_custom_call.1} parent=11 // pred_check
          %p487 = pneg %p201
        $region30: #{tpu_custom_call.1} parent=11 // pred_check_branch
          %489 = sbr.rel (%p487) target = $region32
        $region31: #{tpu_custom_call.1} parent=11 // pred_region
          %491 = vsyncadd [#allocation8], 0
          %s492 = sshll.u32 %s6, 4
          %s493 = int_to_ptr.hbm [resolvable:$true] %s492
          %s494 = sshll.u32 [#allocation7], 4
          %s495 = int_to_ptr.vmem [resolvable:$true] %s494
          %500 = dma.hbm_to_vmem [thread:$0]  %s493, 512, %s495, [#allocation8], 128, 128, 8
        $region32: #{tpu_custom_call.1} parent=11 // pred_fallthru
          _
        // Predicated region
        $region33: #{tpu_custom_call.1} parent=11 // pred_check
          %p501 = pneg %p222
        $region34: #{tpu_custom_call.1} parent=11 // pred_check_branch
          %503 = sbr.rel (%p501) target = $region36
        $region35: #{tpu_custom_call.1} parent=11 // pred_region
          _
        $region36: #{tpu_custom_call.1} parent=11 // pred_fallthru
          _
        // Predicated region
        $region37: #{tpu_custom_call.1} parent=11 // pred_check
          %p504 = pneg %p243
        $region38: #{tpu_custom_call.1} parent=11 // pred_check_branch
          %506 = sbr.rel (%p504) target = $region40
        $region39: #{tpu_custom_call.1} parent=11 // pred_region
          %508 = vsyncadd [#allocation8], 0
          %s509 = sshll.u32 %s8, 4
          %s510 = int_to_ptr.hbm [resolvable:$true] %s509
          %s511 = sshll.u32 [#allocation9], 4
          %s512 = int_to_ptr.vmem [resolvable:$true] %s511
          %517 = dma.hbm_to_vmem [thread:$0]  %s510, 512, %s512, [#allocation8], 128, 128, 8
        $region40: #{tpu_custom_call.1} parent=11 // pred_fallthru
          _
        // Predicated region
        $region41: #{tpu_custom_call.1} parent=11 // pred_check
          %p518 = pneg %p264
        $region42: #{tpu_custom_call.1} parent=11 // pred_check_branch
          %520 = sbr.rel (%p518) target = $region44
        $region43: #{tpu_custom_call.1} parent=11 // pred_region
          _
        $region44: #{tpu_custom_call.1} parent=11 // pred_fallthru
          _
        // Predicated region
        $region45: #{tpu_custom_call.1} parent=11 // pred_check
          %p521 = pneg %p285
        $region46: #{tpu_custom_call.1} parent=11 // pred_check_branch
          %523 = sbr.rel (%p521) target = $region48
        $region47: #{tpu_custom_call.1} parent=11 // pred_region
          %525 = vsyncadd [#allocation11], 0
          %s526 = sshll.u32 %s10, 4
          %s527 = int_to_ptr.hbm [resolvable:$true] %s526
          %s528 = sshll.u32 [#allocation10], 4
          %s529 = int_to_ptr.vmem [resolvable:$true] %s528
          %534 = dma.hbm_to_vmem [thread:$0]  %s527, 512, %s529, [#allocation11], 128, 128, 8
        $region48: #{tpu_custom_call.1} parent=11 // pred_fallthru
          _
        // Predicated region
        $region49: #{tpu_custom_call.1} parent=11 // pred_check
          %p535 = pneg %p306
        $region50: #{tpu_custom_call.1} parent=11 // pred_check_branch
          %537 = sbr.rel (%p535) target = $region52
        $region51: #{tpu_custom_call.1} parent=11 // pred_region
          _
        $region52: #{tpu_custom_call.1} parent=11 // pred_fallthru
          _
        // Predicated region
        $region53: #{tpu_custom_call.1} parent=11 // pred_check
          %p538 = pneg %p327
        $region54: #{tpu_custom_call.1} parent=11 // pred_check_branch
          %540 = sbr.rel (%p538) target = $region56
        $region55: #{tpu_custom_call.1} parent=11 // pred_region
          _
        $region56: #{tpu_custom_call.1} parent=11 // pred_fallthru
          _
        // Predicated region
        $region57: #{tpu_custom_call.1} parent=11 // pred_check
          %p541 = pneg %p348
        $region58: #{tpu_custom_call.1} parent=11 // pred_check_branch
          %543 = sbr.rel (%p541) target = $region60
        $region59: #{tpu_custom_call.1} parent=11 // pred_region
          _
        $region60: #{tpu_custom_call.1} parent=11 // pred_fallthru
          _
        // Predicated region
        $region61: #{tpu_custom_call.1} parent=11 // pred_check
          %p544 = pneg %p369
        $region62: #{tpu_custom_call.1} parent=11 // pred_check_branch
          %546 = sbr.rel (%p544) target = $region64
        $region63: #{tpu_custom_call.1} parent=11 // pred_region
          _
        $region64: #{tpu_custom_call.1} parent=11 // pred_fallthru
          _
        // Predicated region
        $region65: #{tpu_custom_call.1} parent=11 // pred_check
          %p547 = pneg %p390
        $region66: #{tpu_custom_call.1} parent=11 // pred_check_branch
          %549 = sbr.rel (%p547) target = $region68
        $region67: #{tpu_custom_call.1} parent=11 // pred_region
          _
        $region68: #{tpu_custom_call.1} parent=11 // pred_fallthru
          _
        // Predicated region
        $region69: #{tpu_custom_call.1} parent=11 // pred_check
          %p550 = pneg %p411
        $region70: #{tpu_custom_call.1} parent=11 // pred_check_branch
          %552 = sbr.rel (%p550) target = $region72
        $region71: #{tpu_custom_call.1} parent=11 // pred_region
          _
        $region72: #{tpu_custom_call.1} parent=11 // pred_fallthru
          _
        // Predicated region
        $region73: #{tpu_custom_call.1} parent=11 // pred_check
          %p553 = pneg %p432
        $region74: #{tpu_custom_call.1} parent=11 // pred_check_branch
          %555 = sbr.rel (%p553) target = $region76
        $region75: #{tpu_custom_call.1} parent=11 // pred_region
          _
        $region76: #{tpu_custom_call.1} parent=11 // pred_fallthru
          _
      $region12: #{tpu_custom_call.1} parent=5 // pred_fallthru
        _
      %p556 = scmp.lt.s32.totalorder %s32, 4
      // Predicated region
      $region77: #{tpu_custom_call.1} parent=5 // pred_check
        %p557 = pneg %p556
      $region78: #{tpu_custom_call.1} parent=5 // pred_check_branch
        %559 = sbr.rel (%p557) target = $region80
      $region79: #{tpu_custom_call.1} parent=5 // pred_region
        // Predicated region
        $region81: #{tpu_custom_call.1} parent=79 // pred_check
          %p560 = pneg %p64
        $region82: #{tpu_custom_call.1} parent=79 // pred_check_branch
          %562 = sbr.rel (%p560) target = $region84
        $region83: #{tpu_custom_call.1} parent=79 // pred_region
          %p563 = scmp.lt.s32.totalorder %s39, 1
          %s564 = scalar_select %p563, %s39, 1
          %s565 = smul.addr %s564, 2
          %s566 = smul.addr %s565, 8
          %s567 = scalar_lea.vmem %s0, %s566
        $region84: #{tpu_custom_call.1} parent=79 // pred_fallthru
          _
        // Predicated region
        $region85: #{tpu_custom_call.1} parent=79 // pred_check
          %p568 = pneg %p90
        $region86: #{tpu_custom_call.1} parent=79 // pred_check_branch
          %570 = sbr.rel (%p568) target = $region88
        $region87: #{tpu_custom_call.1} parent=79 // pred_region
          %s571 = sand.u32 %s80, 1
          %s572 = scalar_lea.sflag [#allocation5], %s571
          %s573 = sand.u32 %s80, 1
          %s574 = scalar_lea.vmem [#allocation4], %s573
          %576 = vsyncadd %s572, 0
          %s577 = scalar_lea.hbm %s1, %s39
          %s579 = sshll.u32 %s577, 4
          %s580 = int_to_ptr.hbm [resolvable:$true] %s579
          %s581 = sshll.u32 %s574, 4
          %s582 = int_to_ptr.vmem [resolvable:$true] %s581
          %584 = dma.hbm_to_vmem [thread:$0]  %s580, 16, %s582, %s572
        $region88: #{tpu_custom_call.1} parent=79 // pred_fallthru
          _
      $region80: #{tpu_custom_call.1} parent=5 // pred_fallthru
        _
      %p585 = scmp.le.s32.totalorder 1, %s32
      %p586 = scmp.lt.s32.totalorder %s32, 5
      %p587 = pnand %p585, %p586
      %p588 = pneg %p587
      // Predicated region
      $region89: #{tpu_custom_call.1} parent=5 // pred_check
        _
      $region90: #{tpu_custom_call.1} parent=5 // pred_check_branch
        %590 = sbr.rel (%p587) target = $region92
      $region91: #{tpu_custom_call.1} parent=5 // pred_region
        %s591 = ssub.s32 %s32, 1
        %s592 = sand.u32 %s83, 1
        %s593 = scalar_lea.sflag [#allocation5], %s592
        %s594 = sand.u32 %s83, 1
        %s595 = scalar_lea.vmem [#allocation4], %s594
        // Predicated region
        $region93: #{tpu_custom_call.1} parent=91 // pred_check
          %p596 = pneg %p96
        $region94: #{tpu_custom_call.1} parent=91 // pred_check_branch
          %598 = sbr.rel (%p596) target = $region96
        $region95: #{tpu_custom_call.1} parent=91 // pred_region
          %600 = dma.done %s593, 16
        $region96: #{tpu_custom_call.1} parent=91 // pred_fallthru
          _
        // Predicated region
        $region97: #{tpu_custom_call.1} parent=91 // pred_check
          %p601 = pneg %p201
        $region98: #{tpu_custom_call.1} parent=91 // pred_check_branch
          %603 = sbr.rel (%p601) target = $region100
        $region99: #{tpu_custom_call.1} parent=91 // pred_region
          %605 = dma.done [#allocation8], 512
        $region100: #{tpu_custom_call.1} parent=91 // pred_fallthru
          _
        // Predicated region
        $region101: #{tpu_custom_call.1} parent=91 // pred_check
          %p606 = pneg %p243
        $region102: #{tpu_custom_call.1} parent=91 // pred_check_branch
          %608 = sbr.rel (%p606) target = $region104
        $region103: #{tpu_custom_call.1} parent=91 // pred_region
          %610 = dma.done [#allocation8], 512
        $region104: #{tpu_custom_call.1} parent=91 // pred_fallthru
          _
        // Predicated region
        $region105: #{tpu_custom_call.1} parent=91 // pred_check
          %p611 = pneg %p285
        $region106: #{tpu_custom_call.1} parent=91 // pred_check_branch
          %613 = sbr.rel (%p611) target = $region108
        $region107: #{tpu_custom_call.1} parent=91 // pred_region
          %615 = dma.done [#allocation11], 512
        $region108: #{tpu_custom_call.1} parent=91 // pred_fallthru
          _
        %p616 = scmp.lt.s32.totalorder %s41, 1
        %s617 = scalar_select %p616, %s41, 1
        %s618 = smul.addr %s617, 2
        %s619 = smul.addr %s618, 8
        %s620 = scalar_lea.vmem %s0, %s619
        %p621 = pneg %p70
        %p622 = pneg %p67
        %s623 = sand.u32 %s83, 1
        %s624 = scalar_lea.sflag [#allocation5], %s623
        %s625 = sand.u32 %s83, 1
        %s626 = scalar_lea.vmem [#allocation4], %s625
        %p627 = pneg %p96
        %p628 = pneg %p93
        %p629 = pneg %p117
        %p630 = pneg %p114
        %p631 = pneg %p138
        %p632 = pneg %p135
        %p633 = pneg %p159
        %p634 = pneg %p156
        %p635 = pneg %p180
        %p636 = pneg %p177
        %p637 = pneg %p201
        %p638 = pneg %p198
        %p639 = pneg %p222
        %p640 = pneg %p219
        %p641 = pneg %p243
        %p642 = pneg %p240
        %p643 = pneg %p264
        %p644 = pneg %p261
        %p645 = pneg %p285
        %p646 = pneg %p282
        %p647 = pneg %p306
        %p648 = pneg %p303
        %p649 = pneg %p327
        %p650 = pneg %p324
        %p651 = pneg %p348
        %p652 = pneg %p345
        %p653 = pneg %p369
        %p654 = pneg %p366
        %p655 = pneg %p390
        %p656 = pneg %p387
        %p657 = pneg %p411
        %p658 = pneg %p408
        %p659 = pneg %p432
        %p660 = pneg %p429
        %p661 = pneg %p460
        %p662 = pneg %p457
        %s663 = sand.u32 %s447, 1
        %s664 = scalar_lea.sflag [#allocation6], %s663
        %s665 = sand.u32 %s447, 1
        %s666 = smul.addr %s665, 8
        %s667 = scalar_lea.vmem [#allocation12], %s666
        %p668 = scmp.lt.s32.totalorder %s41, 1
        %s669 = scalar_select %p668, %s41, 1
        %s670 = smul.addr %s669, 2
        %s671 = smul.addr %s670, 8
        %s672 = scalar_lea.vmem %s0, %s671
        %v673 = vld [vmem:[%s595] sm:$0x1]
        %v674 = vsub.f32 %v673, 1.0
        %v675 = vmul.f32 %v674, 1e+09
        %p676 = scmp.eq.s32.totalorder %s42, 0
        // Predicated region
        $region109: #{tpu_custom_call.1} parent=91 // pred_check
          %p677 = pneg %p676
        $region110: #{tpu_custom_call.1} parent=91 // pred_check_branch
          %679 = sbr.rel (%p677) target = $region112
        $region111: #{tpu_custom_call.1} parent=91 // pred_region
          %v680 = vld [vmem:[%s672] sm:$0xff]
          %v681 = vld [vmem:[%s672 + $0x8] sm:$0xff]
          %v682 = vld [vmem:[%s14] sm:$0x1]
          %v683 = vld [vmem:[%s15] sm:$0x1]
          %vm684 = vcmask 261120
          %v685 = vsel %vm684, %v680, 0.0
          %686 = vadd.xlane.f32.xlu0 %v685
          %v687 = vpop.xlane.xlu0 %686
          %v688 = vsel %vm684, %v681, 0.0
          %689 = vadd.xlane.f32.xlu0 %v688
          %v690 = vpop.xlane.xlu0 %689
          %v691 = vrcp.pop 32.0
          %v692 = vmul.f32 32.0, %v691
          %v693 = vsub.f32 1.0, %v692
          %v694 = vmul.f32 %v691, %v693
          %v695 = vadd.f32 %v691, %v694
          %vm696 = vweird.f32 %v691
          %v697 = vsel %vm696, %v691, %v695
          %v698 = vmul.f32 %v687, %v697
          %v699 = vmul.f32 %v690, %v697
          %v700 = vsub.f32 %v680, %v698
          %v701 = vsub.f32 %v681, %v699
          %v702 = vmul.f32 %v700, %v700
          %v703 = vmul.f32 %v701, %v701
          %v704 = vsel %vm684, %v702, 0.0
          %705 = vadd.xlane.f32.xlu0 %v704
          %v706 = vpop.xlane.xlu0 %705
          %v707 = vsel %vm684, %v703, 0.0
          %708 = vadd.xlane.f32.xlu0 %v707
          %v709 = vpop.xlane.xlu0 %708
          %v710 = vrcp.pop 31.0
          %v711 = vmul.f32 31.0, %v710
          %v712 = vsub.f32 1.0, %v711
          %v713 = vmul.f32 %v710, %v712
          %v714 = vadd.f32 %v710, %v713
          %vm715 = vweird.f32 %v710
          %v716 = vsel %vm715, %v710, %v714
          %v717 = vmul.f32 %v706, %v716
          %v718 = vmul.f32 %v709, %v716
          %v719 = vrsqrt.pop %v717
          %v720 = vmul.f32 %v719, %v717
          %v721 = vmul.f32 %v720, %v719
          %v722 = vmul.f32 0.5, %v721
          %v723 = vsub.f32 1.5, %v722
          %v724 = vmul.f32 %v719, %v723
          %v725 = vmul.f32 %v717, %v724
          %vm726 = vcmp.eq.f32.partialorder %v717, inf
          %v727 = vsel %vm726, %v717, %v725
          %vm728 = vcmp.eq.f32.partialorder %v717, 0.0
          %v729 = vand.u32 %v717, 2147483648
          %v730 = vsel %vm728, %v729, %v727
          %v731 = vrsqrt.pop %v718
          %v732 = vmul.f32 %v731, %v718
          %v733 = vmul.f32 %v732, %v731
          %v734 = vmul.f32 0.5, %v733
          %v735 = vsub.f32 1.5, %v734
          %v736 = vmul.f32 %v731, %v735
          %v737 = vmul.f32 %v718, %v736
          %vm738 = vcmp.eq.f32.partialorder %v718, inf
          %v739 = vsel %vm738, %v718, %v737
          %vm740 = vcmp.eq.f32.partialorder %v718, 0.0
          %v741 = vand.u32 %v718, 2147483648
          %v742 = vsel %vm740, %v741, %v739
          %v744 = vperm.slane %v682, 0
          %v746 = vmul.f32 %v744, %v700
          %v747 = vmul.f32 %v744, %v701
          %v748 = vadd.f32 %v730, 1e-06
          %v749 = vadd.f32 %v742, 1e-06
          %v750 = vrcp.pop %v748
          %v751 = vmul.f32 %v748, %v750
          %v752 = vsub.f32 1.0, %v751
          %v753 = vmul.f32 %v750, %v752
          %v754 = vadd.f32 %v750, %v753
          %vm755 = vweird.f32 %v748
          %vm756 = vweird.f32 %v750
          %vm757 = vmor %vm755, %vm756
          %v758 = vsel %vm757, %v750, %v754
          %v759 = vand.u32 2147483647, %v748
          %vm760 = vcmp.eq.f32.partialorder %v759, 8.507059e+37
          %v761 = vand.u32 %v748, 2147483648
          %v762 = vor.u32 1.1754944e-38, %v761
          %v763 = vsel %vm760, %v762, %v758
          %v764 = vmul.f32 %v746, %v763
          %v765 = vrcp.pop %v749
          %v766 = vmul.f32 %v749, %v765
          %v767 = vsub.f32 1.0, %v766
          %v768 = vmul.f32 %v765, %v767
          %v769 = vadd.f32 %v765, %v768
          %vm770 = vweird.f32 %v749
          %vm771 = vweird.f32 %v765
          %vm772 = vmor %vm770, %vm771
          %v773 = vsel %vm772, %v765, %v769
          %v774 = vand.u32 2147483647, %v749
          %vm775 = vcmp.eq.f32.partialorder %v774, 8.507059e+37
          %v776 = vand.u32 %v749, 2147483648
          %v777 = vor.u32 1.1754944e-38, %v776
          %v778 = vsel %vm775, %v777, %v773
          %v779 = vmul.f32 %v747, %v778
          %v781 = vperm.slane %v683, 0
          %v783 = vadd.f32 %v764, %v781
          %v784 = vadd.f32 %v779, %v781
          %v785 = vld [vmem:[%s4] sm:$0xff]
          %v786 = vld [vmem:[%s4 + $0x8] sm:$0xff]
          %v787 = vld [vmem:[%s4 + $0x10] sm:$0xff]
          %v788 = vld [vmem:[%s4 + $0x18] sm:$0xff]
          %v789 = vld [vmem:[%s5] sm:$0x1]
          %v791 = vperm.slane %v789, 0
          %v794 = vsel %vm684, %v783, 0
          %v797 = vsel %vm684, %v784, 0
          %799 = vmatpush.msra.mxu0 0.0
          %800 = vmatpush.msra.mxu0 0.0
          %801 = vmatpush.msra.mxu0 0.0
          %802 = vmatpush.msra.mxu0 0.0
          %803 = vmatpush.msra.mxu0 0.0
          %804 = vmatpush.msra.mxu0 0.0
          %805 = vmatpush.msra.mxu0 0.0
          %806 = vmatpush.msra.mxu0 0.0
          %807 = vmatpush.msra.mxu0 0.0
          %808 = vmatpush.msra.mxu0 0.0
          %809 = vmatpush.msra.mxu0 0.0
          %810 = vmatpush.msra.mxu0 0.0
          %811 = vmatpush.msra.mxu0 %v788
          %812 = vmatpush.msra.mxu0 %v787
          %813 = vmatpush.msra.mxu0 %v786
          %814 = vmatpush.msra.mxu0 %v785
          %815 = vmatmul.f32.gmra.mxu0 %v794
          %v816 = vpop.f32.mrf.mxu0
          %v817 = vadd.f32 %v791, %v816
          %818 = vmatmul.f32.gmra.mxu0 %v797
          %v819 = vpop.f32.mrf.mxu0
          %v820 = vadd.f32 %v791, %v819
          %821 = vdwg.mxu0
          %v822 = vld [vmem:[#allocation7] sm:$0xff]
          %v823 = vld [vmem:[#allocation7 + $0x8] sm:$0xff]
          %v824 = vld [vmem:[#allocation7 + $0x10] sm:$0xff]
          %v825 = vld [vmem:[#allocation7 + $0x18] sm:$0xff]
          %v826 = vld [vmem:[%s7] sm:$0x1]
          %v828 = vperm.slane %v826, 0
          %830 = vmatpush.msra.mxu0 0.0
          %831 = vmatpush.msra.mxu0 0.0
          %832 = vmatpush.msra.mxu0 0.0
          %833 = vmatpush.msra.mxu0 0.0
          %834 = vmatpush.msra.mxu0 0.0
          %835 = vmatpush.msra.mxu0 0.0
          %836 = vmatpush.msra.mxu0 0.0
          %837 = vmatpush.msra.mxu0 0.0
          %838 = vmatpush.msra.mxu0 0.0
          %839 = vmatpush.msra.mxu0 0.0
          %840 = vmatpush.msra.mxu0 0.0
          %841 = vmatpush.msra.mxu0 0.0
          %842 = vmatpush.msra.mxu0 %v825
          %843 = vmatpush.msra.mxu0 %v824
          %844 = vmatpush.msra.mxu0 %v823
          %845 = vmatpush.msra.mxu0 %v822
          %846 = vmatmul.f32.gmra.mxu0 %v794
          %v847 = vpop.f32.mrf.mxu0
          %v848 = vadd.f32 %v828, %v847
          %849 = vmatmul.f32.gmra.mxu0 %v797
          %v850 = vpop.f32.mrf.mxu0
          %v851 = vadd.f32 %v828, %v850
          %852 = vdwg.mxu0
          %855 = vrot.lane.b32.xlu0 %v817, 120
          %v856 = vpop.permute.xlu0 %855
          %857 = vrot.lane.b32.xlu0 %v820, 120
          %v858 = vpop.permute.xlu0 %857
          %861 = vrot.lane.b32.xlu0 %v817, 112
          %v862 = vpop.permute.xlu0 %861
          %863 = vrot.lane.b32.xlu0 %v820, 112
          %v864 = vpop.permute.xlu0 %863
          %867 = vrot.lane.b32.xlu0 %v817, 104
          %v868 = vpop.permute.xlu0 %867
          %869 = vrot.lane.b32.xlu0 %v820, 104
          %v870 = vpop.permute.xlu0 %869
          %v873 = vrot.slane %v862, 4
          %vm874 = vcmask 1047556
          %v875 = vsel %vm874, %v873, %v817
          %v876 = vrot.slane %v817, 4
          %v877 = vsel %vm874, %v862, %v876
          %v879 = vunpack.c.l.s4 1983009808
          %v880 = vunpack.c.0.s8 %v879
          %v881 = vperm.slane %v875, %v880
          %v883 = vunpack.c.l.s4 1983009808
          %v884 = vunpack.c.0.s8 %v883
          %v885 = vperm.slane %v877, %v884
          %v886 = vrot.slane %v868, 4
          %v887 = vsel %vm874, %v886, %v856
          %v888 = vrot.slane %v856, 4
          %v889 = vsel %vm874, %v868, %v888
          %v891 = vunpack.c.l.s4 1983009808
          %v892 = vunpack.c.0.s8 %v891
          %v893 = vperm.slane %v887, %v892
          %v895 = vunpack.c.l.s4 1983009808
          %v896 = vunpack.c.0.s8 %v895
          %v897 = vperm.slane %v889, %v896
          %v898 = vrot.slane %v893, 4
          %v899 = vsel %vm874, %v898, %v881
          %v900 = vrot.slane %v881, 4
          %v901 = vsel %vm874, %v893, %v900
          %v903 = vunpack.c.l.s4 1934713408
          %v904 = vunpack.c.0.s8 %v903
          %v905 = vperm.slane %v899, %v904
          %v907 = vunpack.c.l.s4 1934713408
          %v908 = vunpack.c.0.s8 %v907
          %v909 = vperm.slane %v901, %v908
          %v910 = vrot.slane %v897, 4
          %v911 = vsel %vm874, %v910, %v885
          %v912 = vrot.slane %v885, 4
          %v913 = vsel %vm874, %v897, %v912
          %v915 = vunpack.c.l.s4 1934713408
          %v916 = vunpack.c.0.s8 %v915
          %v917 = vperm.slane %v911, %v916
          %v919 = vunpack.c.l.s4 1934713408
          %v920 = vunpack.c.0.s8 %v919
          %v921 = vperm.slane %v913, %v920
          %v922 = vrot.slane %v905, 4
          %v923 = vsel %vm874, 0.0, %v922
          %v924 = vrot.slane %v909, 4
          %v925 = vsel %vm874, 0.0, %v924
          %v926 = vrot.slane %v917, 4
          %v927 = vsel %vm874, 0.0, %v926
          %v928 = vrot.slane %v921, 4
          %v929 = vsel %vm874, 0.0, %v928
          %v930 = vrot.slane %v864, 4
          %v931 = vsel %vm874, %v930, %v820
          %v932 = vrot.slane %v820, 4
          %v933 = vsel %vm874, %v864, %v932
          %v935 = vunpack.c.l.s4 1983009808
          %v936 = vunpack.c.0.s8 %v935
          %v937 = vperm.slane %v931, %v936
          %v939 = vunpack.c.l.s4 1983009808
          %v940 = vunpack.c.0.s8 %v939
          %v941 = vperm.slane %v933, %v940
          %v942 = vrot.slane %v870, 4
          %v943 = vsel %vm874, %v942, %v858
          %v944 = vrot.slane %v858, 4
          %v945 = vsel %vm874, %v870, %v944
          %v947 = vunpack.c.l.s4 1983009808
          %v948 = vunpack.c.0.s8 %v947
          %v949 = vperm.slane %v943, %v948
          %v951 = vunpack.c.l.s4 1983009808
          %v952 = vunpack.c.0.s8 %v951
          %v953 = vperm.slane %v945, %v952
          %v954 = vrot.slane %v949, 4
          %v955 = vsel %vm874, %v954, %v937
          %v956 = vrot.slane %v937, 4
          %v957 = vsel %vm874, %v949, %v956
          %v959 = vunpack.c.l.s4 1934713408
          %v960 = vunpack.c.0.s8 %v959
          %v961 = vperm.slane %v955, %v960
          %v963 = vunpack.c.l.s4 1934713408
          %v964 = vunpack.c.0.s8 %v963
          %v965 = vperm.slane %v957, %v964
          %v966 = vrot.slane %v953, 4
          %v967 = vsel %vm874, %v966, %v941
          %v968 = vrot.slane %v941, 4
          %v969 = vsel %vm874, %v953, %v968
          %v971 = vunpack.c.l.s4 1934713408
          %v972 = vunpack.c.0.s8 %v971
          %v973 = vperm.slane %v967, %v972
          %v975 = vunpack.c.l.s4 1934713408
          %v976 = vunpack.c.0.s8 %v975
          %v977 = vperm.slane %v969, %v976
          %v978 = vrot.slane %v961, 4
          %v979 = vsel %vm874, 0.0, %v978
          %v980 = vrot.slane %v965, 4
          %v981 = vsel %vm874, 0.0, %v980
          %v982 = vrot.slane %v973, 4
          %v983 = vsel %vm874, 0.0, %v982
          %v984 = vrot.slane %v977, 4
          %v985 = vsel %vm874, 0.0, %v984
          %v986 = vsel %vm874, %v924, %v905
          %v988 = vunpack.c.l.s4 1983009808
          %v989 = vunpack.c.0.s8 %v988
          %v990 = vperm.slane %v986, %v989
          %v991 = vrot.slane %v925, 4
          %v992 = vsel %vm874, %v991, %v923
          %v994 = vunpack.c.l.s4 1983009808
          %v995 = vunpack.c.0.s8 %v994
          %v996 = vperm.slane %v992, %v995
          %v997 = vsel %vm874, %v928, %v917
          %v999 = vunpack.c.l.s4 1983009808
          %v1000 = vunpack.c.0.s8 %v999
          %v1001 = vperm.slane %v997, %v1000
          %v1002 = vrot.slane %v929, 4
          %v1003 = vsel %vm874, %v1002, %v927
          %v1005 = vunpack.c.l.s4 1983009808
          %v1006 = vunpack.c.0.s8 %v1005
          %v1007 = vperm.slane %v1003, %v1006
          %v1008 = vrot.slane %v996, 4
          %v1009 = vsel %vm874, %v1008, %v990
          %v1010 = vrot.slane %v990, 4
          %v1011 = vsel %vm874, %v996, %v1010
          %v1013 = vunpack.c.l.s4 1934713408
          %v1014 = vunpack.c.0.s8 %v1013
          %v1015 = vperm.slane %v1009, %v1014
          %v1017 = vunpack.c.l.s4 1934713408
          %v1018 = vunpack.c.0.s8 %v1017
          %v1019 = vperm.slane %v1011, %v1018
          %v1020 = vrot.slane %v1007, 4
          %v1021 = vsel %vm874, %v1020, %v1001
          %v1022 = vrot.slane %v1001, 4
          %v1023 = vsel %vm874, %v1007, %v1022
          %v1025 = vunpack.c.l.s4 1934713408
          %v1026 = vunpack.c.0.s8 %v1025
          %v1027 = vperm.slane %v1021, %v1026
          %v1029 = vunpack.c.l.s4 1934713408
          %v1030 = vunpack.c.0.s8 %v1029
          %v1031 = vperm.slane %v1023, %v1030
          %v1032 = vrot.slane %v1027, 4
          %v1033 = vsel %vm874, %v1032, %v1015
          %v1034 = vrot.slane %v1015, 4
          %v1035 = vsel %vm874, %v1027, %v1034
          %v1036 = vrot.slane %v1031, 4
          %v1037 = vsel %vm874, %v1036, %v1019
          %v1038 = vrot.slane %v1019, 4
          %v1039 = vsel %vm874, %v1031, %v1038
          %v1040 = vsel %vm874, %v980, %v961
          %v1042 = vunpack.c.l.s4 1983009808
          %v1043 = vunpack.c.0.s8 %v1042
          %v1044 = vperm.slane %v1040, %v1043
          %v1045 = vrot.slane %v981, 4
          %v1046 = vsel %vm874, %v1045, %v979
          %v1048 = vunpack.c.l.s4 1983009808
          %v1049 = vunpack.c.0.s8 %v1048
          %v1050 = vperm.slane %v1046, %v1049
          %v1051 = vsel %vm874, %v984, %v973
          %v1053 = vunpack.c.l.s4 1983009808
          %v1054 = vunpack.c.0.s8 %v1053
          %v1055 = vperm.slane %v1051, %v1054
          %v1056 = vrot.slane %v985, 4
          %v1057 = vsel %vm874, %v1056, %v983
          %v1059 = vunpack.c.l.s4 1983009808
          %v1060 = vunpack.c.0.s8 %v1059
          %v1061 = vperm.slane %v1057, %v1060
          %v1062 = vrot.slane %v1050, 4
          %v1063 = vsel %vm874, %v1062, %v1044
          %v1064 = vrot.slane %v1044, 4
          %v1065 = vsel %vm874, %v1050, %v1064
          %v1067 = vunpack.c.l.s4 1934713408
          %v1068 = vunpack.c.0.s8 %v1067
          %v1069 = vperm.slane %v1063, %v1068
          %v1071 = vunpack.c.l.s4 1934713408
          %v1072 = vunpack.c.0.s8 %v1071
          %v1073 = vperm.slane %v1065, %v1072
          %v1074 = vrot.slane %v1061, 4
          %v1075 = vsel %vm874, %v1074, %v1055
          %v1076 = vrot.slane %v1055, 4
          %v1077 = vsel %vm874, %v1061, %v1076
          %v1079 = vunpack.c.l.s4 1934713408
          %v1080 = vunpack.c.0.s8 %v1079
          %v1081 = vperm.slane %v1075, %v1080
          %v1083 = vunpack.c.l.s4 1934713408
          %v1084 = vunpack.c.0.s8 %v1083
          %v1085 = vperm.slane %v1077, %v1084
          %v1086 = vrot.slane %v1081, 4
          %v1087 = vsel %vm874, %v1086, %v1069
          %v1088 = vrot.slane %v1069, 4
          %v1089 = vsel %vm874, %v1081, %v1088
          %v1090 = vrot.slane %v1085, 4
          %v1091 = vsel %vm874, %v1090, %v1073
          %v1092 = vrot.slane %v1073, 4
          %v1093 = vsel %vm874, %v1085, %v1092
          %vm1094 = vcmask 64512
          %1095 = vst.msk [vmem:[#allocation2] sm:$0xff] %vm1094, %v1033
          %1096 = vst.msk [vmem:[#allocation2 + $0x8] sm:$0xff] %vm1094, %v1087
          %1097 = vst.msk [vmem:[#allocation2 + $0x10] sm:$0xff] %vm1094, %v1035
          %1098 = vst.msk [vmem:[#allocation2 + $0x18] sm:$0xff] %vm1094, %v1089
          %1099 = vst.msk [vmem:[#allocation2 + $0x20] sm:$0xff] %vm1094, %v1037
          %1100 = vst.msk [vmem:[#allocation2 + $0x28] sm:$0xff] %vm1094, %v1091
          %1101 = vst.msk [vmem:[#allocation2 + $0x30] sm:$0xff] %vm1094, %v1039
          %1102 = vst.msk [vmem:[#allocation2 + $0x38] sm:$0xff] %vm1094, %v1093
          %1105 = vrot.lane.b32.xlu0 %v848, 120
          %v1106 = vpop.permute.xlu0 %1105
          %1107 = vrot.lane.b32.xlu0 %v851, 120
          %v1108 = vpop.permute.xlu0 %1107
          %1111 = vrot.lane.b32.xlu0 %v848, 112
          %v1112 = vpop.permute.xlu0 %1111
          %1113 = vrot.lane.b32.xlu0 %v851, 112
          %v1114 = vpop.permute.xlu0 %1113
          %1117 = vrot.lane.b32.xlu0 %v848, 104
          %v1118 = vpop.permute.xlu0 %1117
          %1119 = vrot.lane.b32.xlu0 %v851, 104
          %v1120 = vpop.permute.xlu0 %1119
          %v1123 = vrot.slane %v1112, 4
          %v1124 = vsel %vm874, %v1123, %v848
          %v1125 = vrot.slane %v848, 4
          %v1126 = vsel %vm874, %v1112, %v1125
          %v1128 = vunpack.c.l.s4 1983009808
          %v1129 = vunpack.c.0.s8 %v1128
          %v1130 = vperm.slane %v1124, %v1129
          %v1132 = vunpack.c.l.s4 1983009808
          %v1133 = vunpack.c.0.s8 %v1132
          %v1134 = vperm.slane %v1126, %v1133
          %v1135 = vrot.slane %v1118, 4
          %v1136 = vsel %vm874, %v1135, %v1106
          %v1137 = vrot.slane %v1106, 4
          %v1138 = vsel %vm874, %v1118, %v1137
          %v1140 = vunpack.c.l.s4 1983009808
          %v1141 = vunpack.c.0.s8 %v1140
          %v1142 = vperm.slane %v1136, %v1141
          %v1144 = vunpack.c.l.s4 1983009808
          %v1145 = vunpack.c.0.s8 %v1144
          %v1146 = vperm.slane %v1138, %v1145
          %v1147 = vrot.slane %v1142, 4
          %v1148 = vsel %vm874, %v1147, %v1130
          %v1149 = vrot.slane %v1130, 4
          %v1150 = vsel %vm874, %v1142, %v1149
          %v1152 = vunpack.c.l.s4 1934713408
          %v1153 = vunpack.c.0.s8 %v1152
          %v1154 = vperm.slane %v1148, %v1153
          %v1156 = vunpack.c.l.s4 1934713408
          %v1157 = vunpack.c.0.s8 %v1156
          %v1158 = vperm.slane %v1150, %v1157
          %v1159 = vrot.slane %v1146, 4
          %v1160 = vsel %vm874, %v1159, %v1134
          %v1161 = vrot.slane %v1134, 4
          %v1162 = vsel %vm874, %v1146, %v1161
          %v1164 = vunpack.c.l.s4 1934713408
          %v1165 = vunpack.c.0.s8 %v1164
          %v1166 = vperm.slane %v1160, %v1165
          %v1168 = vunpack.c.l.s4 1934713408
          %v1169 = vunpack.c.0.s8 %v1168
          %v1170 = vperm.slane %v1162, %v1169
          %v1171 = vrot.slane %v1154, 4
          %v1172 = vsel %vm874, 0.0, %v1171
          %v1173 = vrot.slane %v1158, 4
          %v1174 = vsel %vm874, 0.0, %v1173
          %v1175 = vrot.slane %v1166, 4
          %v1176 = vsel %vm874, 0.0, %v1175
          %v1177 = vrot.slane %v1170, 4
          %v1178 = vsel %vm874, 0.0, %v1177
          %v1179 = vrot.slane %v1114, 4
          %v1180 = vsel %vm874, %v1179, %v851
          %v1181 = vrot.slane %v851, 4
          %v1182 = vsel %vm874, %v1114, %v1181
          %v1184 = vunpack.c.l.s4 1983009808
          %v1185 = vunpack.c.0.s8 %v1184
          %v1186 = vperm.slane %v1180, %v1185
          %v1188 = vunpack.c.l.s4 1983009808
          %v1189 = vunpack.c.0.s8 %v1188
          %v1190 = vperm.slane %v1182, %v1189
          %v1191 = vrot.slane %v1120, 4
          %v1192 = vsel %vm874, %v1191, %v1108
          %v1193 = vrot.slane %v1108, 4
          %v1194 = vsel %vm874, %v1120, %v1193
          %v1196 = vunpack.c.l.s4 1983009808
          %v1197 = vunpack.c.0.s8 %v1196
          %v1198 = vperm.slane %v1192, %v1197
          %v1200 = vunpack.c.l.s4 1983009808
          %v1201 = vunpack.c.0.s8 %v1200
          %v1202 = vperm.slane %v1194, %v1201
          %v1203 = vrot.slane %v1198, 4
          %v1204 = vsel %vm874, %v1203, %v1186
          %v1205 = vrot.slane %v1186, 4
          %v1206 = vsel %vm874, %v1198, %v1205
          %v1208 = vunpack.c.l.s4 1934713408
          %v1209 = vunpack.c.0.s8 %v1208
          %v1210 = vperm.slane %v1204, %v1209
          %v1212 = vunpack.c.l.s4 1934713408
          %v1213 = vunpack.c.0.s8 %v1212
          %v1214 = vperm.slane %v1206, %v1213
          %v1215 = vrot.slane %v1202, 4
          %v1216 = vsel %vm874, %v1215, %v1190
          %v1217 = vrot.slane %v1190, 4
          %v1218 = vsel %vm874, %v1202, %v1217
          %v1220 = vunpack.c.l.s4 1934713408
          %v1221 = vunpack.c.0.s8 %v1220
          %v1222 = vperm.slane %v1216, %v1221
          %v1224 = vunpack.c.l.s4 1934713408
          %v1225 = vunpack.c.0.s8 %v1224
          %v1226 = vperm.slane %v1218, %v1225
          %v1227 = vrot.slane %v1210, 4
          %v1228 = vsel %vm874, 0.0, %v1227
          %v1229 = vrot.slane %v1214, 4
          %v1230 = vsel %vm874, 0.0, %v1229
          %v1231 = vrot.slane %v1222, 4
          %v1232 = vsel %vm874, 0.0, %v1231
          %v1233 = vrot.slane %v1226, 4
          %v1234 = vsel %vm874, 0.0, %v1233
          %v1235 = vsel %vm874, %v1173, %v1154
          %v1237 = vunpack.c.l.s4 1983009808
          %v1238 = vunpack.c.0.s8 %v1237
          %v1239 = vperm.slane %v1235, %v1238
          %v1240 = vrot.slane %v1174, 4
          %v1241 = vsel %vm874, %v1240, %v1172
          %v1243 = vunpack.c.l.s4 1983009808
          %v1244 = vunpack.c.0.s8 %v1243
          %v1245 = vperm.slane %v1241, %v1244
          %v1246 = vsel %vm874, %v1177, %v1166
          %v1248 = vunpack.c.l.s4 1983009808
          %v1249 = vunpack.c.0.s8 %v1248
          %v1250 = vperm.slane %v1246, %v1249
          %v1251 = vrot.slane %v1178, 4
          %v1252 = vsel %vm874, %v1251, %v1176
          %v1254 = vunpack.c.l.s4 1983009808
          %v1255 = vunpack.c.0.s8 %v1254
          %v1256 = vperm.slane %v1252, %v1255
          %v1257 = vrot.slane %v1245, 4
          %v1258 = vsel %vm874, %v1257, %v1239
          %v1259 = vrot.slane %v1239, 4
          %v1260 = vsel %vm874, %v1245, %v1259
          %v1262 = vunpack.c.l.s4 1934713408
          %v1263 = vunpack.c.0.s8 %v1262
          %v1264 = vperm.slane %v1258, %v1263
          %v1266 = vunpack.c.l.s4 1934713408
          %v1267 = vunpack.c.0.s8 %v1266
          %v1268 = vperm.slane %v1260, %v1267
          %v1269 = vrot.slane %v1256, 4
          %v1270 = vsel %vm874, %v1269, %v1250
          %v1271 = vrot.slane %v1250, 4
          %v1272 = vsel %vm874, %v1256, %v1271
          %v1274 = vunpack.c.l.s4 1934713408
          %v1275 = vunpack.c.0.s8 %v1274
          %v1276 = vperm.slane %v1270, %v1275
          %v1278 = vunpack.c.l.s4 1934713408
          %v1279 = vunpack.c.0.s8 %v1278
          %v1280 = vperm.slane %v1272, %v1279
          %v1281 = vrot.slane %v1276, 4
          %v1282 = vsel %vm874, %v1281, %v1264
          %v1283 = vrot.slane %v1264, 4
          %v1284 = vsel %vm874, %v1276, %v1283
          %v1285 = vrot.slane %v1280, 4
          %v1286 = vsel %vm874, %v1285, %v1268
          %v1287 = vrot.slane %v1268, 4
          %v1288 = vsel %vm874, %v1280, %v1287
          %v1289 = vsel %vm874, %v1229, %v1210
          %v1291 = vunpack.c.l.s4 1983009808
          %v1292 = vunpack.c.0.s8 %v1291
          %v1293 = vperm.slane %v1289, %v1292
          %v1294 = vrot.slane %v1230, 4
          %v1295 = vsel %vm874, %v1294, %v1228
          %v1297 = vunpack.c.l.s4 1983009808
          %v1298 = vunpack.c.0.s8 %v1297
          %v1299 = vperm.slane %v1295, %v1298
          %v1300 = vsel %vm874, %v1233, %v1222
          %v1302 = vunpack.c.l.s4 1983009808
          %v1303 = vunpack.c.0.s8 %v1302
          %v1304 = vperm.slane %v1300, %v1303
          %v1305 = vrot.slane %v1234, 4
          %v1306 = vsel %vm874, %v1305, %v1232
          %v1308 = vunpack.c.l.s4 1983009808
          %v1309 = vunpack.c.0.s8 %v1308
          %v1310 = vperm.slane %v1306, %v1309
          %v1311 = vrot.slane %v1299, 4
          %v1312 = vsel %vm874, %v1311, %v1293
          %v1313 = vrot.slane %v1293, 4
          %v1314 = vsel %vm874, %v1299, %v1313
          %v1316 = vunpack.c.l.s4 1934713408
          %v1317 = vunpack.c.0.s8 %v1316
          %v1318 = vperm.slane %v1312, %v1317
          %v1320 = vunpack.c.l.s4 1934713408
          %v1321 = vunpack.c.0.s8 %v1320
          %v1322 = vperm.slane %v1314, %v1321
          %v1323 = vrot.slane %v1310, 4
          %v1324 = vsel %vm874, %v1323, %v1304
          %v1325 = vrot.slane %v1304, 4
          %v1326 = vsel %vm874, %v1310, %v1325
          %v1328 = vunpack.c.l.s4 1934713408
          %v1329 = vunpack.c.0.s8 %v1328
          %v1330 = vperm.slane %v1324, %v1329
          %v1332 = vunpack.c.l.s4 1934713408
          %v1333 = vunpack.c.0.s8 %v1332
          %v1334 = vperm.slane %v1326, %v1333
          %v1335 = vrot.slane %v1330, 4
          %v1336 = vsel %vm874, %v1335, %v1318
          %v1337 = vrot.slane %v1318, 4
          %v1338 = vsel %vm874, %v1330, %v1337
          %v1339 = vrot.slane %v1334, 4
          %v1340 = vsel %vm874, %v1339, %v1322
          %v1341 = vrot.slane %v1322, 4
          %v1342 = vsel %vm874, %v1334, %v1341
          %1343 = vst.msk [vmem:[#allocation3] sm:$0xff] %vm1094, %v1282
          %1344 = vst.msk [vmem:[#allocation3 + $0x8] sm:$0xff] %vm1094, %v1336
          %1345 = vst.msk [vmem:[#allocation3 + $0x10] sm:$0xff] %vm1094, %v1284
          %1346 = vst.msk [vmem:[#allocation3 + $0x18] sm:$0xff] %vm1094, %v1338
          %1347 = vst.msk [vmem:[#allocation3 + $0x20] sm:$0xff] %vm1094, %v1286
          %1348 = vst.msk [vmem:[#allocation3 + $0x28] sm:$0xff] %vm1094, %v1340
          %1349 = vst.msk [vmem:[#allocation3 + $0x30] sm:$0xff] %vm1094, %v1288
          %1350 = vst.msk [vmem:[#allocation3 + $0x38] sm:$0xff] %vm1094, %v1342
        $region112: #{tpu_custom_call.1} parent=91 // pred_fallthru
          _
        %s1351 = smul.u32 %s42, 8
        %s1352 = scalar_lea.vmem %s672, %s1351
        %v1353 = vld [vmem:[%s1352] sm:$0xff]
        %v1354 = vld [vmem:[%s14] sm:$0x1]
        %v1355 = vld [vmem:[%s15] sm:$0x1]
        %vm1356 = vcmask 261120
        %v1357 = vsel %vm1356, %v1353, 0.0
        %1358 = vadd.xlane.f32.xlu0 %v1357
        %v1359 = vpop.xlane.xlu0 %1358
        %v1360 = vrcp.pop 32.0
        %v1361 = vmul.f32 32.0, %v1360
        %v1362 = vsub.f32 1.0, %v1361
        %v1363 = vmul.f32 %v1360, %v1362
        %v1364 = vadd.f32 %v1360, %v1363
        %vm1365 = vweird.f32 %v1360
        %v1366 = vsel %vm1365, %v1360, %v1364
        %v1367 = vmul.f32 %v1359, %v1366
        %v1368 = vsub.f32 %v1353, %v1367
        %v1369 = vmul.f32 %v1368, %v1368
        %v1370 = vsel %vm1356, %v1369, 0.0
        %1371 = vadd.xlane.f32.xlu0 %v1370
        %v1372 = vpop.xlane.xlu0 %1371
        %v1373 = vrcp.pop 31.0
        %v1374 = vmul.f32 31.0, %v1373
        %v1375 = vsub.f32 1.0, %v1374
        %v1376 = vmul.f32 %v1373, %v1375
        %v1377 = vadd.f32 %v1373, %v1376
        %vm1378 = vweird.f32 %v1373
        %v1379 = vsel %vm1378, %v1373, %v1377
        %v1380 = vmul.f32 %v1372, %v1379
        %v1381 = vrsqrt.pop %v1380
        %v1382 = vmul.f32 %v1381, %v1380
        %v1383 = vmul.f32 %v1382, %v1381
        %v1384 = vmul.f32 0.5, %v1383
        %v1385 = vsub.f32 1.5, %v1384
        %v1386 = vmul.f32 %v1381, %v1385
        %v1387 = vmul.f32 %v1380, %v1386
        %vm1388 = vcmp.eq.f32.partialorder %v1380, inf
        %v1389 = vsel %vm1388, %v1380, %v1387
        %vm1390 = vcmp.eq.f32.partialorder %v1380, 0.0
        %v1391 = vand.u32 %v1380, 2147483648
        %v1392 = vsel %vm1390, %v1391, %v1389
        %v1394 = vperm.slane %v1354, 0
        %v1396 = vmul.f32 %v1394, %v1368
        %v1397 = vadd.f32 %v1392, 1e-06
        %v1398 = vrcp.pop %v1397
        %v1399 = vmul.f32 %v1397, %v1398
        %v1400 = vsub.f32 1.0, %v1399
        %v1401 = vmul.f32 %v1398, %v1400
        %v1402 = vadd.f32 %v1398, %v1401
        %vm1403 = vweird.f32 %v1397
        %vm1404 = vweird.f32 %v1398
        %vm1405 = vmor %vm1403, %vm1404
        %v1406 = vsel %vm1405, %v1398, %v1402
        %v1407 = vand.u32 2147483647, %v1397
        %vm1408 = vcmp.eq.f32.partialorder %v1407, 8.507059e+37
        %v1409 = vand.u32 %v1397, 2147483648
        %v1410 = vor.u32 1.1754944e-38, %v1409
        %v1411 = vsel %vm1408, %v1410, %v1406
        %v1412 = vmul.f32 %v1396, %v1411
        %v1414 = vperm.slane %v1355, 0
        %v1416 = vadd.f32 %v1412, %v1414
        %v1417 = vld [vmem:[%s2] sm:$0xff]
        %v1418 = vld [vmem:[%s2 + $0x8] sm:$0xff]
        %v1419 = vld [vmem:[%s2 + $0x10] sm:$0xff]
        %v1420 = vld [vmem:[%s2 + $0x18] sm:$0xff]
        %v1421 = vld [vmem:[%s3] sm:$0x1]
        %v1423 = vperm.slane %v1421, 0
        %v1426 = vsel %vm1356, %v1416, 0
        %1428 = vmatpush.msra.mxu0 0.0
        %1429 = vmatpush.msra.mxu0 0.0
        %1430 = vmatpush.msra.mxu0 0.0
        %1431 = vmatpush.msra.mxu0 0.0
        %1432 = vmatpush.msra.mxu0 0.0
        %1433 = vmatpush.msra.mxu0 0.0
        %1434 = vmatpush.msra.mxu0 0.0
        %1435 = vmatpush.msra.mxu0 0.0
        %1436 = vmatpush.msra.mxu0 0.0
        %1437 = vmatpush.msra.mxu0 0.0
        %1438 = vmatpush.msra.mxu0 0.0
        %1439 = vmatpush.msra.mxu0 0.0
        %1440 = vmatpush.msra.mxu0 %v1420
        %1441 = vmatpush.msra.mxu0 %v1419
        %1442 = vmatpush.msra.mxu0 %v1418
        %1443 = vmatpush.msra.mxu0 %v1417
        %1444 = vmatmul.f32.gmra.mxu0 %v1426
        %v1445 = vpop.f32.mrf.mxu0
        %v1446 = vadd.f32 %v1423, %v1445
        %1447 = vdwg.mxu0
        %v1448 = vmul.f32 %v1446, 0.35355338
        %1450 = vrot.lane.b32.xlu0 %v1448, 120
        %v1451 = vpop.permute.xlu0 %1450
        %1453 = vrot.lane.b32.xlu0 %v1448, 112
        %v1454 = vpop.permute.xlu0 %1453
        %1456 = vrot.lane.b32.xlu0 %v1448, 104
        %v1457 = vpop.permute.xlu0 %1456
        %v1459 = vrot.slane %v1454, 4
        %vm1460 = vcmask 1047556
        %v1461 = vsel %vm1460, %v1459, %v1448
        %v1462 = vrot.slane %v1448, 4
        %v1463 = vsel %vm1460, %v1454, %v1462
        %v1465 = vunpack.c.l.s4 1983009808
        %v1466 = vunpack.c.0.s8 %v1465
        %v1467 = vperm.slane %v1461, %v1466
        %v1469 = vunpack.c.l.s4 1983009808
        %v1470 = vunpack.c.0.s8 %v1469
        %v1471 = vperm.slane %v1463, %v1470
        %v1472 = vrot.slane %v1457, 4
        %v1473 = vsel %vm1460, %v1472, %v1451
        %v1474 = vrot.slane %v1451, 4
        %v1475 = vsel %vm1460, %v1457, %v1474
        %v1477 = vunpack.c.l.s4 1983009808
        %v1478 = vunpack.c.0.s8 %v1477
        %v1479 = vperm.slane %v1473, %v1478
        %v1481 = vunpack.c.l.s4 1983009808
        %v1482 = vunpack.c.0.s8 %v1481
        %v1483 = vperm.slane %v1475, %v1482
        %v1484 = vrot.slane %v1479, 4
        %v1485 = vsel %vm1460, %v1484, %v1467
        %v1486 = vrot.slane %v1467, 4
        %v1487 = vsel %vm1460, %v1479, %v1486
        %v1489 = vunpack.c.l.s4 1934713408
        %v1490 = vunpack.c.0.s8 %v1489
        %v1491 = vperm.slane %v1485, %v1490
        %v1493 = vunpack.c.l.s4 1934713408
        %v1494 = vunpack.c.0.s8 %v1493
        %v1495 = vperm.slane %v1487, %v1494
        %v1496 = vrot.slane %v1483, 4
        %v1497 = vsel %vm1460, %v1496, %v1471
        %v1498 = vrot.slane %v1471, 4
        %v1499 = vsel %vm1460, %v1483, %v1498
        %v1501 = vunpack.c.l.s4 1934713408
        %v1502 = vunpack.c.0.s8 %v1501
        %v1503 = vperm.slane %v1497, %v1502
        %v1505 = vunpack.c.l.s4 1934713408
        %v1506 = vunpack.c.0.s8 %v1505
        %v1507 = vperm.slane %v1499, %v1506
        %v1508 = vrot.slane %v1491, 4
        %v1509 = vsel %vm1460, 0.0, %v1508
        %v1510 = vrot.slane %v1495, 4
        %v1511 = vsel %vm1460, 0.0, %v1510
        %v1512 = vrot.slane %v1503, 4
        %v1513 = vsel %vm1460, 0.0, %v1512
        %v1514 = vrot.slane %v1507, 4
        %v1515 = vsel %vm1460, 0.0, %v1514
        %v1516 = vsel %vm1460, %v1510, %v1491
        %v1518 = vunpack.c.l.s4 1983009808
        %v1519 = vunpack.c.0.s8 %v1518
        %v1520 = vperm.slane %v1516, %v1519
        %v1521 = vrot.slane %v1511, 4
        %v1522 = vsel %vm1460, %v1521, %v1509
        %v1524 = vunpack.c.l.s4 1983009808
        %v1525 = vunpack.c.0.s8 %v1524
        %v1526 = vperm.slane %v1522, %v1525
        %v1527 = vsel %vm1460, %v1514, %v1503
        %v1529 = vunpack.c.l.s4 1983009808
        %v1530 = vunpack.c.0.s8 %v1529
        %v1531 = vperm.slane %v1527, %v1530
        %v1532 = vrot.slane %v1515, 4
        %v1533 = vsel %vm1460, %v1532, %v1513
        %v1535 = vunpack.c.l.s4 1983009808
        %v1536 = vunpack.c.0.s8 %v1535
        %v1537 = vperm.slane %v1533, %v1536
        %v1538 = vrot.slane %v1526, 4
        %v1539 = vsel %vm1460, %v1538, %v1520
        %v1540 = vrot.slane %v1520, 4
        %v1541 = vsel %vm1460, %v1526, %v1540
        %v1543 = vunpack.c.l.s4 1934713408
        %v1544 = vunpack.c.0.s8 %v1543
        %v1545 = vperm.slane %v1539, %v1544
        %v1547 = vunpack.c.l.s4 1934713408
        %v1548 = vunpack.c.0.s8 %v1547
        %v1549 = vperm.slane %v1541, %v1548
        %v1550 = vrot.slane %v1537, 4
        %v1551 = vsel %vm1460, %v1550, %v1531
        %v1552 = vrot.slane %v1531, 4
        %v1553 = vsel %vm1460, %v1537, %v1552
        %v1555 = vunpack.c.l.s4 1934713408
        %v1556 = vunpack.c.0.s8 %v1555
        %v1557 = vperm.slane %v1551, %v1556
        %v1559 = vunpack.c.l.s4 1934713408
        %v1560 = vunpack.c.0.s8 %v1559
        %v1561 = vperm.slane %v1553, %v1560
        %v1562 = vrot.slane %v1557, 4
        %v1563 = vsel %vm1460, %v1562, %v1545
        %v1564 = vrot.slane %v1545, 4
        %v1565 = vsel %vm1460, %v1557, %v1564
        %v1566 = vrot.slane %v1561, 4
        %v1567 = vsel %vm1460, %v1566, %v1549
        %v1568 = vrot.slane %v1549, 4
        %v1569 = vsel %vm1460, %v1561, %v1568
        %v1570 = vld [vmem:[#allocation2] sm:$0xff]
        %v1571 = vld [vmem:[#allocation2 + $0x8] sm:$0xff]
        %v1572 = vld [vmem:[#allocation2 + $0x10] sm:$0xff]
        %v1573 = vld [vmem:[#allocation2 + $0x18] sm:$0xff]
        %v1574 = vld [vmem:[#allocation2 + $0x20] sm:$0xff]
        %v1575 = vld [vmem:[#allocation2 + $0x28] sm:$0xff]
        %v1576 = vld [vmem:[#allocation2 + $0x30] sm:$0xff]
        %v1577 = vld [vmem:[#allocation2 + $0x38] sm:$0xff]
        %v1579 = vperm.slane %v675, 0
        %vm1581 = vcmask 64512
        %v1583 = vsel %vm1581, %v1563, 0
        %v1586 = vsel %vm1581, %v1570, 0
        %v1589 = vsel %vm1581, %v1571, 0
        %1591 = vmatpush.xpose.msra.mxu0 0.0
        %1592 = vmatpush.xpose.msra.mxu0 0.0
        %1593 = vmatpush.xpose.msra.mxu0 0.0
        %1594 = vmatpush.xpose.msra.mxu0 0.0
        %1595 = vmatpush.xpose.msra.mxu0 0.0
        %1596 = vmatpush.xpose.msra.mxu0 0.0
        %1597 = vmatpush.xpose.msra.mxu0 0.0
        %1598 = vmatpush.xpose.msra.mxu0 0.0
        %1599 = vmatpush.xpose.msra.mxu0 0.0
        %1600 = vmatpush.xpose.msra.mxu0 0.0
        %1601 = vmatpush.xpose.msra.mxu0 0.0
        %1602 = vmatpush.xpose.msra.mxu0 0.0
        %1603 = vmatpush.xpose.msra.mxu0 0.0
        %1604 = vmatpush.xpose.msra.mxu0 0.0
        %1605 = vmatpush.xpose.msra.mxu0 %v1589
        %1606 = vmatpush.xpose.msra.mxu0 %v1586
        %1607 = vmatmul.f32.gmra.mxu0 %v1583
        %v1608 = vpop.f32.mrf.mxu0
        %v1609 = vadd.f32 %v1579, %v1608
        %1610 = vdwg.mxu0
        %v1612 = vsel %vm1581, %v1565, 0
        %v1615 = vsel %vm1581, %v1572, 0
        %v1618 = vsel %vm1581, %v1573, 0
        %1620 = vmatpush.xpose.msra.mxu0 0.0
        %1621 = vmatpush.xpose.msra.mxu0 0.0
        %1622 = vmatpush.xpose.msra.mxu0 0.0
        %1623 = vmatpush.xpose.msra.mxu0 0.0
        %1624 = vmatpush.xpose.msra.mxu0 0.0
        %1625 = vmatpush.xpose.msra.mxu0 0.0
        %1626 = vmatpush.xpose.msra.mxu0 0.0
        %1627 = vmatpush.xpose.msra.mxu0 0.0
        %1628 = vmatpush.xpose.msra.mxu0 0.0
        %1629 = vmatpush.xpose.msra.mxu0 0.0
        %1630 = vmatpush.xpose.msra.mxu0 0.0
        %1631 = vmatpush.xpose.msra.mxu0 0.0
        %1632 = vmatpush.xpose.msra.mxu0 0.0
        %1633 = vmatpush.xpose.msra.mxu0 0.0
        %1634 = vmatpush.xpose.msra.mxu0 %v1618
        %1635 = vmatpush.xpose.msra.mxu0 %v1615
        %1636 = vmatmul.f32.gmra.mxu0 %v1612
        %v1637 = vpop.f32.mrf.mxu0
        %v1638 = vadd.f32 %v1579, %v1637
        %1639 = vdwg.mxu0
        %v1641 = vsel %vm1581, %v1567, 0
        %v1644 = vsel %vm1581, %v1574, 0
        %v1647 = vsel %vm1581, %v1575, 0
        %1649 = vmatpush.xpose.msra.mxu0 0.0
        %1650 = vmatpush.xpose.msra.mxu0 0.0
        %1651 = vmatpush.xpose.msra.mxu0 0.0
        %1652 = vmatpush.xpose.msra.mxu0 0.0
        %1653 = vmatpush.xpose.msra.mxu0 0.0
        %1654 = vmatpush.xpose.msra.mxu0 0.0
        %1655 = vmatpush.xpose.msra.mxu0 0.0
        %1656 = vmatpush.xpose.msra.mxu0 0.0
        %1657 = vmatpush.xpose.msra.mxu0 0.0
        %1658 = vmatpush.xpose.msra.mxu0 0.0
        %1659 = vmatpush.xpose.msra.mxu0 0.0
        %1660 = vmatpush.xpose.msra.mxu0 0.0
        %1661 = vmatpush.xpose.msra.mxu0 0.0
        %1662 = vmatpush.xpose.msra.mxu0 0.0
        %1663 = vmatpush.xpose.msra.mxu0 %v1647
        %1664 = vmatpush.xpose.msra.mxu0 %v1644
        %1665 = vmatmul.f32.gmra.mxu0 %v1641
        %v1666 = vpop.f32.mrf.mxu0
        %v1667 = vadd.f32 %v1579, %v1666
        %1668 = vdwg.mxu0
        %v1670 = vsel %vm1581, %v1569, 0
        %v1673 = vsel %vm1581, %v1576, 0
        %v1676 = vsel %vm1581, %v1577, 0
        %1678 = vmatpush.xpose.msra.mxu0 0.0
        %1679 = vmatpush.xpose.msra.mxu0 0.0
        %1680 = vmatpush.xpose.msra.mxu0 0.0
        %1681 = vmatpush.xpose.msra.mxu0 0.0
        %1682 = vmatpush.xpose.msra.mxu0 0.0
        %1683 = vmatpush.xpose.msra.mxu0 0.0
        %1684 = vmatpush.xpose.msra.mxu0 0.0
        %1685 = vmatpush.xpose.msra.mxu0 0.0
        %1686 = vmatpush.xpose.msra.mxu0 0.0
        %1687 = vmatpush.xpose.msra.mxu0 0.0
        %1688 = vmatpush.xpose.msra.mxu0 0.0
        %1689 = vmatpush.xpose.msra.mxu0 0.0
        %1690 = vmatpush.xpose.msra.mxu0 0.0
        %1691 = vmatpush.xpose.msra.mxu0 0.0
        %1692 = vmatpush.xpose.msra.mxu0 %v1676
        %1693 = vmatpush.xpose.msra.mxu0 %v1673
        %1694 = vmatmul.f32.gmra.mxu0 %v1670
        %v1695 = vpop.f32.mrf.mxu0
        %v1696 = vadd.f32 %v1579, %v1695
        %1697 = vdwg.mxu0
        %vm1698 = vcmask 130048
        %v1699 = vsel %vm1698, %v1609, -inf
        %1700 = vmax.xlane.f32.xlu0 %v1699
        %v1701 = vpop.xlane.xlu0 %1700
        %v1702 = vsel %vm1698, %v1638, -inf
        %1703 = vmax.xlane.f32.xlu0 %v1702
        %v1704 = vpop.xlane.xlu0 %1703
        %v1705 = vsel %vm1698, %v1667, -inf
        %1706 = vmax.xlane.f32.xlu0 %v1705
        %v1707 = vpop.xlane.xlu0 %1706
        %v1708 = vsel %vm1698, %v1696, -inf
        %1709 = vmax.xlane.f32.xlu0 %v1708
        %v1710 = vpop.xlane.xlu0 %1709
        %v1711 = vsub.f32 %v1609, %v1701
        %v1712 = vsub.f32 %v1638, %v1704
        %v1713 = vsub.f32 %v1667, %v1707
        %v1714 = vsub.f32 %v1696, %v1710
        %v1715 = vmul.f32 %v1711, 1.442695
        %v1716 = vpow.pop %v1715
        %v1717 = vmul.f32 %v1712, 1.442695
        %v1718 = vpow.pop %v1717
        %v1719 = vmul.f32 %v1713, 1.442695
        %v1720 = vpow.pop %v1719
        %v1721 = vmul.f32 %v1714, 1.442695
        %v1722 = vpow.pop %v1721
        %v1723 = vsel %vm1698, %v1716, 0.0
        %1724 = vadd.xlane.f32.xlu0 %v1723
        %v1725 = vpop.xlane.xlu0 %1724
        %v1726 = vsel %vm1698, %v1718, 0.0
        %1727 = vadd.xlane.f32.xlu0 %v1726
        %v1728 = vpop.xlane.xlu0 %1727
        %v1729 = vsel %vm1698, %v1720, 0.0
        %1730 = vadd.xlane.f32.xlu0 %v1729
        %v1731 = vpop.xlane.xlu0 %1730
        %v1732 = vsel %vm1698, %v1722, 0.0
        %1733 = vadd.xlane.f32.xlu0 %v1732
        %v1734 = vpop.xlane.xlu0 %1733
        %v1735 = vrcp.pop %v1725
        %v1736 = vmul.f32 %v1725, %v1735
        %v1737 = vsub.f32 1.0, %v1736
        %v1738 = vmul.f32 %v1735, %v1737
        %v1739 = vadd.f32 %v1735, %v1738
        %vm1740 = vweird.f32 %v1725
        %vm1741 = vweird.f32 %v1735
        %vm1742 = vmor %vm1740, %vm1741
        %v1743 = vsel %vm1742, %v1735, %v1739
        %v1744 = vand.u32 2147483647, %v1725
        %vm1745 = vcmp.eq.f32.partialorder %v1744, 8.507059e+37
        %v1746 = vand.u32 %v1725, 2147483648
        %v1747 = vor.u32 1.1754944e-38, %v1746
        %v1748 = vsel %vm1745, %v1747, %v1743
        %v1749 = vrcp.pop %v1728
        %v1750 = vmul.f32 %v1728, %v1749
        %v1751 = vsub.f32 1.0, %v1750
        %v1752 = vmul.f32 %v1749, %v1751
        %v1753 = vadd.f32 %v1749, %v1752
        %vm1754 = vweird.f32 %v1728
        %vm1755 = vweird.f32 %v1749
        %vm1756 = vmor %vm1754, %vm1755
        %v1757 = vsel %vm1756, %v1749, %v1753
        %v1758 = vand.u32 2147483647, %v1728
        %vm1759 = vcmp.eq.f32.partialorder %v1758, 8.507059e+37
        %v1760 = vand.u32 %v1728, 2147483648
        %v1761 = vor.u32 1.1754944e-38, %v1760
        %v1762 = vsel %vm1759, %v1761, %v1757
        %v1763 = vrcp.pop %v1731
        %v1764 = vmul.f32 %v1731, %v1763
        %v1765 = vsub.f32 1.0, %v1764
        %v1766 = vmul.f32 %v1763, %v1765
        %v1767 = vadd.f32 %v1763, %v1766
        %vm1768 = vweird.f32 %v1731
        %vm1769 = vweird.f32 %v1763
        %vm1770 = vmor %vm1768, %vm1769
        %v1771 = vsel %vm1770, %v1763, %v1767
        %v1772 = vand.u32 2147483647, %v1731
        %vm1773 = vcmp.eq.f32.partialorder %v1772, 8.507059e+37
        %v1774 = vand.u32 %v1731, 2147483648
        %v1775 = vor.u32 1.1754944e-38, %v1774
        %v1776 = vsel %vm1773, %v1775, %v1771
        %v1777 = vrcp.pop %v1734
        %v1778 = vmul.f32 %v1734, %v1777
        %v1779 = vsub.f32 1.0, %v1778
        %v1780 = vmul.f32 %v1777, %v1779
        %v1781 = vadd.f32 %v1777, %v1780
        %vm1782 = vweird.f32 %v1734
        %vm1783 = vweird.f32 %v1777
        %vm1784 = vmor %vm1782, %vm1783
        %v1785 = vsel %vm1784, %v1777, %v1781
        %v1786 = vand.u32 2147483647, %v1734
        %vm1787 = vcmp.eq.f32.partialorder %v1786, 8.507059e+37
        %v1788 = vand.u32 %v1734, 2147483648
        %v1789 = vor.u32 1.1754944e-38, %v1788
        %v1790 = vsel %vm1787, %v1789, %v1785
        %v1791 = vmul.f32 %v1716, %v1748
        %v1792 = vmul.f32 %v1718, %v1762
        %v1793 = vmul.f32 %v1720, %v1776
        %v1794 = vmul.f32 %v1722, %v1790
        %v1795 = vld [vmem:[#allocation3] sm:$0xff]
        %v1796 = vld [vmem:[#allocation3 + $0x8] sm:$0xff]
        %v1797 = vld [vmem:[#allocation3 + $0x10] sm:$0xff]
        %v1798 = vld [vmem:[#allocation3 + $0x18] sm:$0xff]
        %v1799 = vld [vmem:[#allocation3 + $0x20] sm:$0xff]
        %v1800 = vld [vmem:[#allocation3 + $0x28] sm:$0xff]
        %v1801 = vld [vmem:[#allocation3 + $0x30] sm:$0xff]
        %v1802 = vld [vmem:[#allocation3 + $0x38] sm:$0xff]
        %v1804 = vsel %vm1698, %v1791, 0
        %1806 = vmatpush.msra.mxu0 0.0
        %1807 = vmatpush.msra.mxu0 0.0
        %1808 = vmatpush.msra.mxu0 0.0
        %1809 = vmatpush.msra.mxu0 0.0
        %1810 = vmatpush.msra.mxu0 0.0
        %1811 = vmatpush.msra.mxu0 0.0
        %1812 = vmatpush.msra.mxu0 0.0
        %1813 = vmatpush.msra.mxu0 0.0
        %1814 = vmatpush.msra.mxu0 0.0
        %1815 = vmatpush.msra.mxu0 0.0
        %1816 = vmatpush.msra.mxu0 0.0
        %1817 = vmatpush.msra.mxu0 0.0
        %1818 = vmatpush.msra.mxu0 0.0
        %1819 = vmatpush.msra.mxu0 0.0
        %1820 = vmatpush.msra.mxu0 %v1796
        %1821 = vmatpush.msra.mxu0 %v1795
        %1822 = vmatmul.f32.gmra.mxu0 %v1804
        %v1823 = vpop.f32.mrf.mxu0
        %v1824 = vadd.f32 0.0, %v1823
        %1825 = vdwg.mxu0
        %v1827 = vsel %vm1698, %v1792, 0
        %1829 = vmatpush.msra.mxu0 0.0
        %1830 = vmatpush.msra.mxu0 0.0
        %1831 = vmatpush.msra.mxu0 0.0
        %1832 = vmatpush.msra.mxu0 0.0
        %1833 = vmatpush.msra.mxu0 0.0
        %1834 = vmatpush.msra.mxu0 0.0
        %1835 = vmatpush.msra.mxu0 0.0
        %1836 = vmatpush.msra.mxu0 0.0
        %1837 = vmatpush.msra.mxu0 0.0
        %1838 = vmatpush.msra.mxu0 0.0
        %1839 = vmatpush.msra.mxu0 0.0
        %1840 = vmatpush.msra.mxu0 0.0
        %1841 = vmatpush.msra.mxu0 0.0
        %1842 = vmatpush.msra.mxu0 0.0
        %1843 = vmatpush.msra.mxu0 %v1798
        %1844 = vmatpush.msra.mxu0 %v1797
        %1845 = vmatmul.f32.gmra.mxu0 %v1827
        %v1846 = vpop.f32.mrf.mxu0
        %v1847 = vadd.f32 0.0, %v1846
        %1848 = vdwg.mxu0
        %v1850 = vsel %vm1698, %v1793, 0
        %1852 = vmatpush.msra.mxu0 0.0
        %1853 = vmatpush.msra.mxu0 0.0
        %1854 = vmatpush.msra.mxu0 0.0
        %1855 = vmatpush.msra.mxu0 0.0
        %1856 = vmatpush.msra.mxu0 0.0
        %1857 = vmatpush.msra.mxu0 0.0
        %1858 = vmatpush.msra.mxu0 0.0
        %1859 = vmatpush.msra.mxu0 0.0
        %1860 = vmatpush.msra.mxu0 0.0
        %1861 = vmatpush.msra.mxu0 0.0
        %1862 = vmatpush.msra.mxu0 0.0
        %1863 = vmatpush.msra.mxu0 0.0
        %1864 = vmatpush.msra.mxu0 0.0
        %1865 = vmatpush.msra.mxu0 0.0
        %1866 = vmatpush.msra.mxu0 %v1800
        %1867 = vmatpush.msra.mxu0 %v1799
        %1868 = vmatmul.f32.gmra.mxu0 %v1850
        %v1869 = vpop.f32.mrf.mxu0
        %v1870 = vadd.f32 0.0, %v1869
        %1871 = vdwg.mxu0
        %v1873 = vsel %vm1698, %v1794, 0
        %1875 = vmatpush.msra.mxu0 0.0
        %1876 = vmatpush.msra.mxu0 0.0
        %1877 = vmatpush.msra.mxu0 0.0
        %1878 = vmatpush.msra.mxu0 0.0
        %1879 = vmatpush.msra.mxu0 0.0
        %1880 = vmatpush.msra.mxu0 0.0
        %1881 = vmatpush.msra.mxu0 0.0
        %1882 = vmatpush.msra.mxu0 0.0
        %1883 = vmatpush.msra.mxu0 0.0
        %1884 = vmatpush.msra.mxu0 0.0
        %1885 = vmatpush.msra.mxu0 0.0
        %1886 = vmatpush.msra.mxu0 0.0
        %1887 = vmatpush.msra.mxu0 0.0
        %1888 = vmatpush.msra.mxu0 0.0
        %1889 = vmatpush.msra.mxu0 %v1802
        %1890 = vmatpush.msra.mxu0 %v1801
        %1891 = vmatmul.f32.gmra.mxu0 %v1873
        %v1892 = vpop.f32.mrf.mxu0
        %v1893 = vadd.f32 0.0, %v1892
        %1894 = vdwg.mxu0
        %v1895 = vrot.slane %v1870, 4
        %v1896 = vsel %vm1460, %v1895, %v1824
        %v1897 = vrot.slane %v1824, 4
        %v1898 = vsel %vm1460, %v1870, %v1897
        %v1900 = vunpack.c.l.s4 1983009808
        %v1901 = vunpack.c.0.s8 %v1900
        %v1902 = vperm.slane %v1896, %v1901
        %v1904 = vunpack.c.l.s4 1983009808
        %v1905 = vunpack.c.0.s8 %v1904
        %v1906 = vperm.slane %v1898, %v1905
        %v1907 = vrot.slane %v1893, 4
        %v1908 = vsel %vm1460, %v1907, %v1847
        %v1909 = vrot.slane %v1847, 4
        %v1910 = vsel %vm1460, %v1893, %v1909
        %v1912 = vunpack.c.l.s4 1983009808
        %v1913 = vunpack.c.0.s8 %v1912
        %v1914 = vperm.slane %v1908, %v1913
        %v1916 = vunpack.c.l.s4 1983009808
        %v1917 = vunpack.c.0.s8 %v1916
        %v1918 = vperm.slane %v1910, %v1917
        %v1919 = vrot.slane %v1914, 4
        %v1920 = vsel %vm1460, %v1919, %v1902
        %v1921 = vrot.slane %v1902, 4
        %v1922 = vsel %vm1460, %v1914, %v1921
        %v1924 = vunpack.c.l.s4 1934713408
        %v1925 = vunpack.c.0.s8 %v1924
        %v1926 = vperm.slane %v1920, %v1925
        %v1928 = vunpack.c.l.s4 1934713408
        %v1929 = vunpack.c.0.s8 %v1928
        %v1930 = vperm.slane %v1922, %v1929
        %v1931 = vrot.slane %v1918, 4
        %v1932 = vsel %vm1460, %v1931, %v1906
        %v1933 = vrot.slane %v1906, 4
        %v1934 = vsel %vm1460, %v1918, %v1933
        %v1936 = vunpack.c.l.s4 1934713408
        %v1937 = vunpack.c.0.s8 %v1936
        %v1938 = vperm.slane %v1932, %v1937
        %v1940 = vunpack.c.l.s4 1934713408
        %v1941 = vunpack.c.0.s8 %v1940
        %v1942 = vperm.slane %v1934, %v1941
        %v1943 = vrot.slane %v1926, 4
        %v1944 = vsel %vm1460, 0.0, %v1943
        %v1945 = vrot.slane %v1930, 4
        %v1946 = vsel %vm1460, 0.0, %v1945
        %v1947 = vrot.slane %v1938, 4
        %v1948 = vsel %vm1460, 0.0, %v1947
        %v1949 = vrot.slane %v1942, 4
        %v1950 = vsel %vm1460, 0.0, %v1949
        %v1951 = vsel %vm1460, %v1945, %v1926
        %v1953 = vunpack.c.l.s4 1983009808
        %v1954 = vunpack.c.0.s8 %v1953
        %v1955 = vperm.slane %v1951, %v1954
        %v1956 = vrot.slane %v1946, 4
        %v1957 = vsel %vm1460, %v1956, %v1944
        %v1959 = vunpack.c.l.s4 1983009808
        %v1960 = vunpack.c.0.s8 %v1959
        %v1961 = vperm.slane %v1957, %v1960
        %v1962 = vsel %vm1460, %v1949, %v1938
        %v1964 = vunpack.c.l.s4 1983009808
        %v1965 = vunpack.c.0.s8 %v1964
        %v1966 = vperm.slane %v1962, %v1965
        %v1967 = vrot.slane %v1950, 4
        %v1968 = vsel %vm1460, %v1967, %v1948
        %v1970 = vunpack.c.l.s4 1983009808
        %v1971 = vunpack.c.0.s8 %v1970
        %v1972 = vperm.slane %v1968, %v1971
        %v1973 = vrot.slane %v1961, 4
        %v1974 = vsel %vm1460, %v1973, %v1955
        %v1975 = vrot.slane %v1955, 4
        %v1976 = vsel %vm1460, %v1961, %v1975
        %v1978 = vunpack.c.l.s4 1934713408
        %v1979 = vunpack.c.0.s8 %v1978
        %v1980 = vperm.slane %v1974, %v1979
        %v1982 = vunpack.c.l.s4 1934713408
        %v1983 = vunpack.c.0.s8 %v1982
        %v1984 = vperm.slane %v1976, %v1983
        %v1985 = vrot.slane %v1972, 4
        %v1986 = vsel %vm1460, %v1985, %v1966
        %v1987 = vrot.slane %v1966, 4
        %v1988 = vsel %vm1460, %v1972, %v1987
        %v1990 = vunpack.c.l.s4 1934713408
        %v1991 = vunpack.c.0.s8 %v1990
        %v1992 = vperm.slane %v1986, %v1991
        %v1994 = vunpack.c.l.s4 1934713408
        %v1995 = vunpack.c.0.s8 %v1994
        %v1996 = vperm.slane %v1988, %v1995
        %v1997 = vrot.slane %v1992, 4
        %v1998 = vsel %vm1460, %v1997, %v1980
        %v1999 = vrot.slane %v1980, 4
        %v2000 = vsel %vm1460, %v1992, %v1999
        %v2001 = vrot.slane %v1996, 4
        %v2002 = vsel %vm1460, %v2001, %v1984
        %v2003 = vrot.slane %v1984, 4
        %v2004 = vsel %vm1460, %v1996, %v2003
        %2006 = vrot.lane.b32.xlu0 %v2000, 8
        %v2007 = vpop.permute.xlu0 %2006
        %2010 = vrot.lane.b32.xlu0 %v2002, 16
        %v2011 = vpop.permute.xlu0 %2010
        %2014 = vrot.lane.b32.xlu0 %v2004, 24
        %v2015 = vpop.permute.xlu0 %2014
        %v2017 = vsel %vm1581, %v1998, %v2007
        %v2018 = vsel %vm1698, %v2017, %v2011
        %vm2019 = vcmask 195584
        %v2020 = vsel %vm2019, %v2018, %v2015
        %v2021 = vld [vmem:[#allocation9] sm:$0xff]
        %v2022 = vld [vmem:[#allocation9 + $0x8] sm:$0xff]
        %v2023 = vld [vmem:[#allocation9 + $0x10] sm:$0xff]
        %v2024 = vld [vmem:[#allocation9 + $0x18] sm:$0xff]
        %v2025 = vld [vmem:[%s9] sm:$0x1]
        %v2027 = vperm.slane %v2025, 0
        %v2030 = vsel %vm1356, %v2020, 0
        %2032 = vmatpush.msra.mxu0 0.0
        %2033 = vmatpush.msra.mxu0 0.0
        %2034 = vmatpush.msra.mxu0 0.0
        %2035 = vmatpush.msra.mxu0 0.0
        %2036 = vmatpush.msra.mxu0 0.0
        %2037 = vmatpush.msra.mxu0 0.0
        %2038 = vmatpush.msra.mxu0 0.0
        %2039 = vmatpush.msra.mxu0 0.0
        %2040 = vmatpush.msra.mxu0 0.0
        %2041 = vmatpush.msra.mxu0 0.0
        %2042 = vmatpush.msra.mxu0 0.0
        %2043 = vmatpush.msra.mxu0 0.0
        %2044 = vmatpush.msra.mxu0 %v2024
        %2045 = vmatpush.msra.mxu0 %v2023
        %2046 = vmatpush.msra.mxu0 %v2022
        %2047 = vmatpush.msra.mxu0 %v2021
        %2048 = vmatmul.f32.gmra.mxu0 %v2030
        %v2049 = vpop.f32.mrf.mxu0
        %v2050 = vadd.f32 %v2027, %v2049
        %2051 = vdwg.mxu0
        %v2052 = vadd.f32 %v1353, %v2050
        %v2053 = vld [vmem:[%s16] sm:$0x1]
        %v2054 = vld [vmem:[%s17] sm:$0x1]
        %v2055 = vsel %vm1356, %v2052, 0.0
        %2056 = vadd.xlane.f32.xlu0 %v2055
        %v2057 = vpop.xlane.xlu0 %2056
        %v2058 = vmul.f32 %v2057, %v1366
        %v2059 = vsub.f32 %v2052, %v2058
        %v2060 = vmul.f32 %v2059, %v2059
        %v2061 = vsel %vm1356, %v2060, 0.0
        %2062 = vadd.xlane.f32.xlu0 %v2061
        %v2063 = vpop.xlane.xlu0 %2062
        %v2064 = vmul.f32 %v2063, %v1379
        %v2065 = vrsqrt.pop %v2064
        %v2066 = vmul.f32 %v2065, %v2064
        %v2067 = vmul.f32 %v2066, %v2065
        %v2068 = vmul.f32 0.5, %v2067
        %v2069 = vsub.f32 1.5, %v2068
        %v2070 = vmul.f32 %v2065, %v2069
        %v2071 = vmul.f32 %v2064, %v2070
        %vm2072 = vcmp.eq.f32.partialorder %v2064, inf
        %v2073 = vsel %vm2072, %v2064, %v2071
        %vm2074 = vcmp.eq.f32.partialorder %v2064, 0.0
        %v2075 = vand.u32 %v2064, 2147483648
        %v2076 = vsel %vm2074, %v2075, %v2073
        %v2078 = vperm.slane %v2053, 0
        %v2080 = vmul.f32 %v2078, %v2059
        %v2081 = vadd.f32 %v2076, 1e-06
        %v2082 = vrcp.pop %v2081
        %v2083 = vmul.f32 %v2081, %v2082
        %v2084 = vsub.f32 1.0, %v2083
        %v2085 = vmul.f32 %v2082, %v2084
        %v2086 = vadd.f32 %v2082, %v2085
        %vm2087 = vweird.f32 %v2081
        %vm2088 = vweird.f32 %v2082
        %vm2089 = vmor %vm2087, %vm2088
        %v2090 = vsel %vm2089, %v2082, %v2086
        %v2091 = vand.u32 2147483647, %v2081
        %vm2092 = vcmp.eq.f32.partialorder %v2091, 8.507059e+37
        %v2093 = vand.u32 %v2081, 2147483648
        %v2094 = vor.u32 1.1754944e-38, %v2093
        %v2095 = vsel %vm2092, %v2094, %v2090
        %v2096 = vmul.f32 %v2080, %v2095
        %v2098 = vperm.slane %v2054, 0
        %v2100 = vadd.f32 %v2096, %v2098
        %v2101 = vld [vmem:[%s13] sm:$0x1]
        %v2103 = vperm.slane %v2101, 0
        %v2105 = vadd.f32 %v2052, %v2103
        %v2106 = vld [vmem:[#allocation10] sm:$0xff]
        %v2107 = vld [vmem:[#allocation10 + $0x8] sm:$0xff]
        %v2108 = vld [vmem:[#allocation10 + $0x10] sm:$0xff]
        %v2109 = vld [vmem:[#allocation10 + $0x18] sm:$0xff]
        %v2110 = vld [vmem:[%s11] sm:$0x1]
        %v2112 = vperm.slane %v2110, 0
        %v2115 = vsel %vm1356, %v2100, 0
        %2117 = vmatpush.msra.mxu0 0.0
        %2118 = vmatpush.msra.mxu0 0.0
        %2119 = vmatpush.msra.mxu0 0.0
        %2120 = vmatpush.msra.mxu0 0.0
        %2121 = vmatpush.msra.mxu0 0.0
        %2122 = vmatpush.msra.mxu0 0.0
        %2123 = vmatpush.msra.mxu0 0.0
        %2124 = vmatpush.msra.mxu0 0.0
        %2125 = vmatpush.msra.mxu0 0.0
        %2126 = vmatpush.msra.mxu0 0.0
        %2127 = vmatpush.msra.mxu0 0.0
        %2128 = vmatpush.msra.mxu0 0.0
        %2129 = vmatpush.msra.mxu0 %v2109
        %2130 = vmatpush.msra.mxu0 %v2108
        %2131 = vmatpush.msra.mxu0 %v2107
        %2132 = vmatpush.msra.mxu0 %v2106
        %2133 = vmatmul.f32.gmra.mxu0 %v2115
        %v2134 = vpop.f32.mrf.mxu0
        %v2135 = vadd.f32 %v2112, %v2134
        %2136 = vdwg.mxu0
        %v2137 = vmax.f32 %v2135, 0.0
        %v2138 = vld [vmem:[%s12] sm:$0xff]
        %v2139 = vld [vmem:[%s12 + $0x8] sm:$0xff]
        %v2140 = vld [vmem:[%s12 + $0x10] sm:$0xff]
        %v2141 = vld [vmem:[%s12 + $0x18] sm:$0xff]
        %v2142 = vld [vmem:[%s12 + $0x20] sm:$0xff]
        %v2143 = vld [vmem:[%s12 + $0x28] sm:$0xff]
        %v2144 = vld [vmem:[%s12 + $0x30] sm:$0xff]
        %v2145 = vld [vmem:[%s12 + $0x38] sm:$0xff]
        %vm2146 = vcmask 523264
        %v2148 = vsel %vm2146, %v2137, 0
        %2150 = vmatpush.msra.mxu0 0.0
        %2151 = vmatpush.msra.mxu0 0.0
        %2152 = vmatpush.msra.mxu0 0.0
        %2153 = vmatpush.msra.mxu0 0.0
        %2154 = vmatpush.msra.mxu0 0.0
        %2155 = vmatpush.msra.mxu0 0.0
        %2156 = vmatpush.msra.mxu0 0.0
        %2157 = vmatpush.msra.mxu0 0.0
        %2158 = vmatpush.msra.mxu0 %v2145
        %2159 = vmatpush.msra.mxu0 %v2144
        %2160 = vmatpush.msra.mxu0 %v2143
        %2161 = vmatpush.msra.mxu0 %v2142
        %2162 = vmatpush.msra.mxu0 %v2141
        %2163 = vmatpush.msra.mxu0 %v2140
        %2164 = vmatpush.msra.mxu0 %v2139
        %2165 = vmatpush.msra.mxu0 %v2138
        %2166 = vmatmul.f32.gmra.mxu0 %v2148
        %v2167 = vpop.f32.mrf.mxu0
        %v2168 = vadd.f32 0.0, %v2167
        %2169 = vdwg.mxu0
        %v2170 = vadd.f32 %v2105, %v2168
        %2171 = vst.msk [vmem:[%s667] sm:$0xff] %vm1356, %v2170
        %s2172 = sand.u32 %s447, 1
        %s2173 = scalar_lea.sflag [#allocation6], %s2172
        %s2174 = sand.u32 %s447, 1
        %s2175 = smul.addr %s2174, 8
        %s2176 = scalar_lea.vmem [#allocation12], %s2175
        // Predicated region
        $region113: #{tpu_custom_call.1} parent=91 // pred_check
          %p2177 = pneg %p457
        $region114: #{tpu_custom_call.1} parent=91 // pred_check_branch
          %2179 = sbr.rel (%p2177) target = $region116
        $region115: #{tpu_custom_call.1} parent=91 // pred_region
          %2181 = vsyncadd %s2173, 0
          %s2182 = smul.addr %s41, 2
          %s2183 = sadd.s32 %s42, %s2182
          %s2184 = smul.addr %s2183, 8
          %s2185 = scalar_lea.hbm %s18, %s2184
          %s2187 = sshll.u32 %s2176, 4
          %s2188 = int_to_ptr.vmem [resolvable:$true] %s2187
          %s2189 = sshll.u32 %s2185, 4
          %s2190 = int_to_ptr.hbm [resolvable:$true] %s2189
          %2192 = dma.vmem_to_hbm [thread:$0]  %s2188, 128, %s2190, %s2173
        $region116: #{tpu_custom_call.1} parent=91 // pred_fallthru
          _
      $region92: #{tpu_custom_call.1} parent=5 // pred_fallthru
        _
      %p2193 = scmp.le.s32.totalorder 2, %s32
      // Predicated region
      $region117: #{tpu_custom_call.1} parent=5 // pred_check
        %p2194 = pneg %p2193
      $region118: #{tpu_custom_call.1} parent=5 // pred_check_branch
        %2196 = sbr.rel (%p2194) target = $region120
      $region119: #{tpu_custom_call.1} parent=5 // pred_region
        %s2197 = ssub.s32 %s32, 2
        // Predicated region
        $region121: #{tpu_custom_call.1} parent=119 // pred_check
          %p2198 = pneg %p463
        $region122: #{tpu_custom_call.1} parent=119 // pred_check_branch
          %2200 = sbr.rel (%p2198) target = $region124
        $region123: #{tpu_custom_call.1} parent=119 // pred_region
          %s2201 = sand.u32 %s448, 1
          %s2202 = scalar_lea.sflag [#allocation6], %s2201
          %s2203 = sand.u32 %s448, 1
          %s2204 = smul.addr %s2203, 8
          %s2205 = scalar_lea.vmem [#allocation12], %s2204
          %2207 = dma.done %s2202, 128
        $region124: #{tpu_custom_call.1} parent=119 // pred_fallthru
          _
      $region120: #{tpu_custom_call.1} parent=5 // pred_fallthru
        _
    $region6: #{tpu_custom_call.1} parent=1 // loop_footer
      %s36 = sadd.s32 1, %s32
    $region7: #{tpu_custom_call.1} parent=1 // loop_footer_branch
      %31 = sbr.rel target = $region3
    $region8: #{tpu_custom_call.1} parent=1 // loop_exit
      _
    %2208 = vsyncpa [#allocation5], 1
    %s2209 = scalar_lea.sflag [#allocation5], 1
    %2210 = vsyncpa %s2209, 1
    %2211 = vsyncpa [#allocation8], 1
    %2212 = vsyncpa [#allocation11], 1
    %2213 = vsyncpa [#allocation6], 1
    %s2214 = scalar_lea.sflag [#allocation6], 1
    %2215 = vsyncpa %s2214, 1

</llo_original>
